<compile_context>
chip_gen: v6e
topology: v6e:2x2x1
jax: 0.10.0
libtpu: 0.0.40
codegen_flags: <defaults>
</compile_context>

<pallas_src>
import jax
import jax.numpy as jnp
from jax import lax
from jax.experimental import pallas as pl
from jax.experimental.pallas import tpu as pltpu

LRELU_SLOPE = 0.01     # nn.LeakyReLU default negative_slope
BN_EPS = 1e-5          # nn.BatchNorm1d default eps
INPUT = 32             # GRU input size / conv channels
HIDDEN = 64            # GRU hidden size
COUT = 32              # conv output channels
K = 5                  # conv kernel size
MBD_OUT = 3            # MinibatchDiscrimination1d out_features
MBD_INTER = 16         # MinibatchDiscrimination1d intermediate_features
GROUP0 = 8             # positions per group at the network input (= product of strides)


# ----------------------------------------------------------------------------
# pallas_call plumbing: whole arrays as single VMEM blocks, trivial grid.
# ----------------------------------------------------------------------------
def _full_spec(shape):
    nd = len(shape)
    return pl.BlockSpec(shape, lambda i, _nd=nd: (0,) * _nd)


def _leaky_relu(x):
    return jnp.where(x >= 0.0, x, LRELU_SLOPE * x)


# ----------------------------------------------------------------------------
# Single fused kernel for the whole forward pass.
# ----------------------------------------------------------------------------
def fused_forward_kernel(
    xg_ref,
    w1g_ref, t1_ref, w2g_ref, t2_ref, w3g_ref, t3_ref, w4g_ref, t4_ref,
    wir_ref, wiz_ref, win_ref, whr_ref, whz_ref, whn_ref,
    br_ref, bz_ref, bni_ref, bhn_ref,
    tmat_ref, w1h_ref, w1m_ref, b1_ref, w2f_ref, b2f_ref,
    gsel_ref, pq_ref, ssum_ref,
    o_ref,
):
    B, G, _ = xg_ref.shape            # G = L // 8 = GRU sequence length
    T = G
    H = whr_ref.shape[0]

    # ---- conv stack: each layer = ONE grouped-im2col matmul + folded BN + LeakyReLU.
    # The grouped weight maps 3 consecutive input groups directly to one output
    # group, so stride-2 layers produce only the kept positions (no subsample).
    def conv_layer(a, wg_ref, shift_ref):
        # a: (B, G, Win) grouped activation (Win = positions_per_group * channels)
        zero = jnp.zeros_like(a[:, :1, :])
        left = jnp.concatenate([zero, a[:, :-1, :]], axis=1)     # group j-1 (zero pad)
        right = jnp.concatenate([a[:, 1:, :], zero], axis=1)     # group j+1 (zero pad)
        col = jnp.concatenate([left, a, right], axis=-1)         # (B, G, 3*Win)
        col = col.reshape(B * G, -1).astype(jnp.bfloat16)
        y = jnp.dot(col, wg_ref[...], preferred_element_type=jnp.float32)
        y = _leaky_relu(y + shift_ref[...])                      # BN scale folded into wg
        return y.reshape(B, G, -1)

    a = xg_ref[...]
    a = conv_layer(a, w1g_ref, t1_ref)     # (B, G, 256)  stride 1
    a = conv_layer(a, w2g_ref, t2_ref)     # (B, G, 128)  stride 2
    a = conv_layer(a, w3g_ref, t3_ref)     # (B, G,  64)  stride 2
    a = conv_layer(a, w4g_ref, t4_ref)     # (B, G,  32)  stride 2, 1 position/group

    # ---- GRU: input projections hoisted out of the recurrence (one matmul per gate
    # over all T steps), then a statically unrolled recurrence with per-gate,
    # lane-aligned (64-wide) hidden matmuls.
    xb = a.reshape(B * T, -1).astype(jnp.bfloat16)               # (B*T, 32), row = b*T + t
    gi_r = (jnp.dot(xb, wir_ref[...], preferred_element_type=jnp.float32)
            + br_ref[...]).reshape(B, T, H)
    gi_z = (jnp.dot(xb, wiz_ref[...], preferred_element_type=jnp.float32)
            + bz_ref[...]).reshape(B, T, H)
    gi_n = (jnp.dot(xb, win_ref[...], preferred_element_type=jnp.float32)
            + bni_ref[...]).reshape(B, T, H)

    whr = whr_ref[...]
    whz = whz_ref[...]
    whn = whn_ref[...]
    bhn = bhn_ref[...]

    h = jnp.zeros((B, H), jnp.float32)
    for t in range(T):                      # static unroll (T is small and static)
        hb = h.astype(jnp.bfloat16)
        gr = jnp.dot(hb, whr, preferred_element_type=jnp.float32)
        gz = jnp.dot(hb, whz, preferred_element_type=jnp.float32)
        gn = jnp.dot(hb, whn, preferred_element_type=jnp.float32) + bhn
        r = jax.nn.sigmoid(gi_r[:, t, :] + gr)
        z = jax.nn.sigmoid(gi_z[:, t, :] + gz)
        n = jnp.tanh(gi_n[:, t, :] + r * gn)
        h = (1.0 - z) * n + z * h

    # ---- minibatch discrimination, vectorized with selector matmuls:
    #   R[i*B+j] = M[i] - M[j];  dist = |R| summed per 16-wide block;  feats = sum_j e^-d - 1
    hb = h.astype(jnp.bfloat16)
    M = jnp.dot(hb, tmat_ref[...], preferred_element_type=jnp.float32)            # (B, O*C)
    R = jnp.abs(jnp.dot(pq_ref[...], M, preferred_element_type=jnp.float32))      # (B*B, O*C)
    dist = jnp.dot(R, gsel_ref[...], preferred_element_type=jnp.float32)          # (B*B, O)
    feats = jnp.dot(ssum_ref[...], jnp.exp(-dist),
                    preferred_element_type=jnp.float32) - 1.0                     # (B, O)

    # ---- head: Linear(H+3,32) -> LeakyReLU -> BatchNorm (folded into last linear)
    #            -> Linear(32,1) -> sigmoid.  concat([h, feats]) @ W1 is split as
    #            h @ W1[:H] + feats-fold to avoid an in-kernel concatenation.
    y1 = jnp.dot(hb, w1h_ref[...], preferred_element_type=jnp.float32) + b1_ref[...]
    w1m = w1m_ref[...]
    for o in range(w1m.shape[0]):
        y1 = y1 + feats[:, o:o + 1] * w1m[o:o + 1, :]
    y1 = _leaky_relu(y1)                              # LeakyReLU BEFORE BN (matches Sequential)
    y2 = jnp.sum(y1 * w2f_ref[...], axis=1, keepdims=True) + b2f_ref[...]
    o_ref[...] = jax.nn.sigmoid(y2)


# ----------------------------------------------------------------------------
# One-time parameter preparation (load-time layout conversion).
# ----------------------------------------------------------------------------
def _grouped_conv_weight(w, gout, stride):
    """w: (K, Cin, Cout) conv taps.  Returns the grouped im2col weight of shape
    (3*gin*Cin, gout*Cout) mapping 3 consecutive input groups (gin = gout*stride
    positions each) to one output group of gout positions, realizing the stride
    and 'same' padding exactly (only kept outputs are ever computed)."""
    k_taps, cin, cout = w.shape
    gin = gout * stride
    zero_blk = jnp.zeros((cin, cout), w.dtype)
    rows = []
    for q in range(3 * gin):                 # position offset inside the 3-group window
        cols = []
        for d in range(gout):                # output position inside the output group
            k = q - gin - stride * d + 2     # conv tap index ('same' padding = 2)
            cols.append(w[k] if 0 <= k < k_taps else zero_blk)
        rows.append(jnp.concatenate(cols, axis=1))
    return jnp.concatenate(rows, axis=0)


def prepare_params(params):
    args = []

    # conv layers: fold BN scale into the grouped weight, keep shift separate (tiled).
    for layer, gout, stride in zip(params["conv"], (8, 4, 2, 1), (1, 2, 2, 2)):
        scale = layer["g"] * lax.rsqrt(layer["var"] + BN_EPS)
        shift = (layer["b"] - layer["mu"]) * scale + layer["be"]
        wg = _grouped_conv_weight(layer["w"], gout, stride)
        wg = wg * jnp.tile(scale, gout)[None, :]
        args.append(wg.astype(jnp.bfloat16))
        args.append(jnp.tile(shift, gout)[None, :].astype(jnp.float32))

    # GRU: per-gate matrices (gate order r, z, n), biases pre-combined where possible.
    gp = params["gru"]
    H = HIDDEN
    wih, whh, bih, bhh = gp["wih"], gp["whh"], gp["bih"], gp["bhh"]
    args += [wih[:, g * H:(g + 1) * H].astype(jnp.bfloat16) for g in range(3)]
    args += [whh[:, g * H:(g + 1) * H].astype(jnp.bfloat16) for g in range(3)]
    args += [
        (bih[:H] + bhh[:H])[None, :],               # b_ir + b_hr
        (bih[H:2 * H] + bhh[H:2 * H])[None, :],     # b_iz + b_hz
        bih[2 * H:][None, :],                       # b_in
        bhh[2 * H:][None, :],                       # b_hn (stays inside r * (...))
    ]

    # head: fold its BatchNorm into the final Linear(32,1).
    hp = params["head"]
    s_h = hp["g"] * lax.rsqrt(hp["var"] + BN_EPS)
    t_h = hp["be"] - hp["mu"] * s_h
    args += [
        hp["T"].astype(jnp.bfloat16),               # (H, O*C)
        hp["w1h"].astype(jnp.bfloat16),             # (H, 32)   Linear(67,32) rows for h
        hp["w1m"].astype(jnp.float32),              # (3, 32)   Linear(67,32) rows for mbd
        hp["b1"][None, :].astype(jnp.float32),
        (hp["w2"][:, 0] * s_h)[None, :].astype(jnp.float32),                    # (1, 32)
        (t_h[None, :] @ hp["w2"] + hp["b2"][None, :]).astype(jnp.float32),      # (1, 1)
    ]
    return tuple(args)


# ----------------------------------------------------------------------------
# Forward wrapper: one fused pallas_call, grid=(1,).
# ----------------------------------------------------------------------------
def rnn_discriminator_forward(x, prep):
    # x: (B, L) float32  (torch: x.unsqueeze(1) -> Conv1d over L)
    B, L = x.shape
    assert L % GROUP0 == 0 and L // GROUP0 >= 2, "L must be a multiple of 8 (>= 16)"
    G = L // GROUP0
    xg = x.astype(jnp.float32).reshape(B, G, GROUP0)

    # tiny constant selector matrices for vectorized minibatch discrimination
    ii = jnp.arange(B * B) // B
    jj = jnp.arange(B * B) % B
    pq = (jax.nn.one_hot(ii, B, dtype=jnp.float32)
          - jax.nn.one_hot(jj, B, dtype=jnp.float32))                 # (B*B, B): M_i - M_j
    ssum = jnp.transpose(jax.nn.one_hot(ii, B, dtype=jnp.float32))    # (B, B*B): sum over j
    gsel = (jnp.arange(MBD_OUT * MBD_INTER)[:, None] // MBD_INTER
            == jnp.arange(MBD_OUT)[None, :]).astype(jnp.float32)      # (O*C, O): L1 block sum

    args = (xg,) + tuple(prep) + (gsel, pq, ssum)
    return pl.pallas_call(
        fused_forward_kernel,
        grid=(1,),
        in_specs=[_full_spec(a.shape) for a in args],
        out_specs=_full_spec((B, 1)),
        out_shape=jax.ShapeDtypeStruct((B, 1), jnp.float32),
        compiler_params=pltpu.CompilerParams(dimension_semantics=("arbitrary",)),
    )(*args)


# ----------------------------------------------------------------------------
# Deterministic synthetic parameters (shapes follow the torch module).
# ----------------------------------------------------------------------------
def init_params(key):
    keys = iter(jax.random.split(key, 64))

    def nrm(shape, scale=0.1):
        return scale * jax.random.normal(next(keys), shape, jnp.float32)

    conv = []
    cin = 1
    for _ in range(4):
        conv.append(dict(
            w=nrm((K, cin, COUT), 0.2),             # (K, Cin, Cout)
            b=nrm((COUT,), 0.1),
            g=1.0 + nrm((COUT,), 0.1),
            be=nrm((COUT,), 0.1),
            mu=nrm((COUT,), 0.1),
            var=1.0 + 0.1 * jnp.abs(jax.random.normal(next(keys), (COUT,), jnp.float32)),
        ))
        cin = COUT

    gru = dict(
        wih=nrm((INPUT, 3 * HIDDEN), 0.2),          # gate order r, z, n; stored (in, out)
        whh=nrm((HIDDEN, 3 * HIDDEN), 0.2),
        bih=nrm((3 * HIDDEN,), 0.1),
        bhh=nrm((3 * HIDDEN,), 0.1),
    )

    head = dict(
        T=nrm((HIDDEN, MBD_OUT * MBD_INTER), 0.2),
        w1h=nrm((HIDDEN, 32), 0.2),                 # first 64 rows of Linear(67,32).weight.T
        w1m=nrm((MBD_OUT, 32), 0.2),                # last 3 rows (mbd features)
        b1=nrm((32,), 0.1),
        g=1.0 + nrm((32,), 0.1),
        be=nrm((32,), 0.1),
        mu=nrm((32,), 0.1),
        var=1.0 + 0.1 * jnp.abs(jax.random.normal(next(keys), (32,), jnp.float32)),
        w2=nrm((32, 1), 0.2),
        b2=nrm((1,), 0.1),
    )
    return dict(conv=conv, gru=gru, head=head)


if __name__ == "__main__":
    key = jax.random.PRNGKey(0)
    pkey, xkey = jax.random.split(key)
    params = init_params(pkey)
    prep = prepare_params(params)            # one-time weight-layout conversion

    B, L = 4, 64                             # L=64 -> GRU sequence length 8
    x = jax.random.normal(xkey, (B, L), jnp.float32)

    fwd = jax.jit(rnn_discriminator_forward)
    out = jax.block_until_ready(fwd(x, prep))

    assert out.shape == (B, 1), out.shape
    assert bool(jnp.all(jnp.isfinite(out)))
    assert bool(jnp.all((out >= 0.0) & (out <= 1.0)))
    print("KERNEL_OK")
</pallas_src>

<mosaic_0001>
module attributes {stable_mosaic.version = 11 : i64} {
  func.func @fused_forward_kernel(%arg0: i32, %arg1: memref<4x8x8xf32, #tpu.memory_space<vmem>>, %arg2: memref<24x256xbf16, #tpu.memory_space<vmem>>, %arg3: memref<1x256xf32, #tpu.memory_space<vmem>>, %arg4: memref<768x128xbf16, #tpu.memory_space<vmem>>, %arg5: memref<1x128xf32, #tpu.memory_space<vmem>>, %arg6: memref<384x64xbf16, #tpu.memory_space<vmem>>, %arg7: memref<1x64xf32, #tpu.memory_space<vmem>>, %arg8: memref<192x32xbf16, #tpu.memory_space<vmem>>, %arg9: memref<1x32xf32, #tpu.memory_space<vmem>>, %arg10: memref<32x64xbf16, #tpu.memory_space<vmem>>, %arg11: memref<32x64xbf16, #tpu.memory_space<vmem>>, %arg12: memref<32x64xbf16, #tpu.memory_space<vmem>>, %arg13: memref<64x64xbf16, #tpu.memory_space<vmem>>, %arg14: memref<64x64xbf16, #tpu.memory_space<vmem>>, %arg15: memref<64x64xbf16, #tpu.memory_space<vmem>>, %arg16: memref<1x64xf32, #tpu.memory_space<vmem>>, %arg17: memref<1x64xf32, #tpu.memory_space<vmem>>, %arg18: memref<1x64xf32, #tpu.memory_space<vmem>>, %arg19: memref<1x64xf32, #tpu.memory_space<vmem>>, %arg20: memref<64x48xbf16, #tpu.memory_space<vmem>>, %arg21: memref<64x32xbf16, #tpu.memory_space<vmem>>, %arg22: memref<3x32xf32, #tpu.memory_space<vmem>>, %arg23: memref<1x32xf32, #tpu.memory_space<vmem>>, %arg24: memref<1x32xf32, #tpu.memory_space<vmem>>, %arg25: memref<1x1xf32, #tpu.memory_space<vmem>>, %arg26: memref<48x3xf32, #tpu.memory_space<vmem>>, %arg27: memref<16x4xf32, #tpu.memory_space<vmem>>, %arg28: memref<4x16xf32, #tpu.memory_space<vmem>>, %arg29: memref<4x1xf32, #tpu.memory_space<vmem>>) attributes {dimension_semantics = [#tpu.dimension_semantics<arbitrary>], iteration_bounds = array<i64: 1>, scalar_prefetch = 0 : i64, scratch_operands = 0 : i64, tpu.core_type = #tpu.core_type<tc>, window_params = [{pipeline_mode = #tpu.pipeline_mode<synchronous>, transform_indices = @transform_0, window_bounds = array<i64: 4, 8, 8>}, {pipeline_mode = #tpu.pipeline_mode<synchronous>, transform_indices = @transform_1, window_bounds = array<i64: 24, 256>}, {pipeline_mode = #tpu.pipeline_mode<synchronous>, transform_indices = @transform_2, window_bounds = array<i64: 1, 256>}, {pipeline_mode = #tpu.pipeline_mode<synchronous>, transform_indices = @transform_3, window_bounds = array<i64: 768, 128>}, {pipeline_mode = #tpu.pipeline_mode<synchronous>, transform_indices = @transform_4, window_bounds = array<i64: 1, 128>}, {pipeline_mode = #tpu.pipeline_mode<synchronous>, transform_indices = @transform_5, window_bounds = array<i64: 384, 64>}, {pipeline_mode = #tpu.pipeline_mode<synchronous>, transform_indices = @transform_6, window_bounds = array<i64: 1, 64>}, {pipeline_mode = #tpu.pipeline_mode<synchronous>, transform_indices = @transform_7, window_bounds = array<i64: 192, 32>}, {pipeline_mode = #tpu.pipeline_mode<synchronous>, transform_indices = @transform_8, window_bounds = array<i64: 1, 32>}, {pipeline_mode = #tpu.pipeline_mode<synchronous>, transform_indices = @transform_9, window_bounds = array<i64: 32, 64>}, {pipeline_mode = #tpu.pipeline_mode<synchronous>, transform_indices = @transform_10, window_bounds = array<i64: 32, 64>}, {pipeline_mode = #tpu.pipeline_mode<synchronous>, transform_indices = @transform_11, window_bounds = array<i64: 32, 64>}, {pipeline_mode = #tpu.pipeline_mode<synchronous>, transform_indices = @transform_12, window_bounds = array<i64: 64, 64>}, {pipeline_mode = #tpu.pipeline_mode<synchronous>, transform_indices = @transform_13, window_bounds = array<i64: 64, 64>}, {pipeline_mode = #tpu.pipeline_mode<synchronous>, transform_indices = @transform_14, window_bounds = array<i64: 64, 64>}, {pipeline_mode = #tpu.pipeline_mode<synchronous>, transform_indices = @transform_15, window_bounds = array<i64: 1, 64>}, {pipeline_mode = #tpu.pipeline_mode<synchronous>, transform_indices = @transform_16, window_bounds = array<i64: 1, 64>}, {pipeline_mode = #tpu.pipeline_mode<synchronous>, transform_indices = @transform_17, window_bounds = array<i64: 1, 64>}, {pipeline_mode = #tpu.pipeline_mode<synchronous>, transform_indices = @transform_18, window_bounds = array<i64: 1, 64>}, {pipeline_mode = #tpu.pipeline_mode<synchronous>, transform_indices = @transform_19, window_bounds = array<i64: 64, 48>}, {pipeline_mode = #tpu.pipeline_mode<synchronous>, transform_indices = @transform_20, window_bounds = array<i64: 64, 32>}, {pipeline_mode = #tpu.pipeline_mode<synchronous>, transform_indices = @transform_21, window_bounds = array<i64: 3, 32>}, {pipeline_mode = #tpu.pipeline_mode<synchronous>, transform_indices = @transform_22, window_bounds = array<i64: 1, 32>}, {pipeline_mode = #tpu.pipeline_mode<synchronous>, transform_indices = @transform_23, window_bounds = array<i64: 1, 32>}, {pipeline_mode = #tpu.pipeline_mode<synchronous>, transform_indices = @transform_24, window_bounds = array<i64: 1, 1>}, {pipeline_mode = #tpu.pipeline_mode<synchronous>, transform_indices = @transform_25, window_bounds = array<i64: 48, 3>}, {pipeline_mode = #tpu.pipeline_mode<synchronous>, transform_indices = @transform_26, window_bounds = array<i64: 16, 4>}, {pipeline_mode = #tpu.pipeline_mode<synchronous>, transform_indices = @transform_27, window_bounds = array<i64: 4, 16>}, {pipeline_mode = #tpu.pipeline_mode<synchronous>, transform_indices = @transform_28, window_bounds = array<i64: 4, 1>}]} {
    %c0 = arith.constant 0 : index
    %c0_0 = arith.constant 0 : index
    %c0_1 = arith.constant 0 : index
    %0 = vector.load %arg1[%c0, %c0_0, %c0_1] : memref<4x8x8xf32, #tpu.memory_space<vmem>>, vector<4x8x8xf32>
    %cst = arith.constant 0.000000e+00 : f32
    %1 = vector.broadcast %cst : f32 to vector<4x1x8xf32>
    %2 = vector.extract_strided_slice %0 {offsets = [0, 0, 0], sizes = [4, 7, 8], strides = [1, 1, 1]} : vector<4x8x8xf32> to vector<4x7x8xf32>
    %3 = tpu.concatenate %1, %2 in 1 : vector<4x1x8xf32>, vector<4x7x8xf32> -> vector<4x8x8xf32>
    %4 = vector.extract_strided_slice %0 {offsets = [0, 1, 0], sizes = [4, 7, 8], strides = [1, 1, 1]} : vector<4x8x8xf32> to vector<4x7x8xf32>
    %5 = tpu.concatenate %4, %1 in 1 : vector<4x7x8xf32>, vector<4x1x8xf32> -> vector<4x8x8xf32>
    %6 = tpu.concatenate %3, %0, %5 in 2 : vector<4x8x8xf32>, vector<4x8x8xf32>, vector<4x8x8xf32> -> vector<4x8x24xf32>
    %7 = vector.shape_cast %6 : vector<4x8x24xf32> to vector<32x24xf32>
    %8 = arith.truncf %7 : vector<32x24xf32> to vector<32x24xbf16>
    %c0_2 = arith.constant 0 : index
    %c0_3 = arith.constant 0 : index
    %9 = vector.load %arg2[%c0_2, %c0_3] : memref<24x256xbf16, #tpu.memory_space<vmem>>, vector<24x256xbf16>
    %cst_4 = arith.constant dense<0.000000e+00> : vector<32x256xf32>
    %10 = tpu.matmul %8, %9, %cst_4 {dimension_numbers = #tpu.dot_dimension_numbers<[1], [0], [0], [1], [0, 0, 1, 1], [], []>} : vector<32x24xbf16>, vector<24x256xbf16>, vector<32x256xf32> -> vector<32x256xf32>
    %c0_5 = arith.constant 0 : index
    %c0_6 = arith.constant 0 : index
    %11 = vector.load %arg3[%c0_5, %c0_6] : memref<1x256xf32, #tpu.memory_space<vmem>>, vector<1x256xf32>
    %12 = vector.broadcast %11 : vector<1x256xf32> to vector<32x256xf32>
    %13 = arith.addf %10, %12 : vector<32x256xf32>
    %cst_7 = arith.constant 0.000000e+00 : f32
    %14 = vector.broadcast %cst_7 : f32 to vector<32x256xf32>
    %15 = arith.cmpf oge, %13, %14 : vector<32x256xf32>
    %cst_8 = arith.constant 0.00999999977 : f32
    %16 = vector.broadcast %cst_8 : f32 to vector<32x256xf32>
    %17 = arith.mulf %16, %13 : vector<32x256xf32>
    %18 = arith.select %15, %13, %17 : vector<32x256xi1>, vector<32x256xf32>
    %19 = vector.shape_cast %18 : vector<32x256xf32> to vector<4x8x256xf32>
    %cst_9 = arith.constant 0.000000e+00 : f32
    %20 = vector.broadcast %cst_9 : f32 to vector<4x1x256xf32>
    %21 = vector.extract_strided_slice %19 {offsets = [0, 0, 0], sizes = [4, 7, 256], strides = [1, 1, 1]} : vector<4x8x256xf32> to vector<4x7x256xf32>
    %22 = tpu.concatenate %20, %21 in 1 : vector<4x1x256xf32>, vector<4x7x256xf32> -> vector<4x8x256xf32>
    %23 = vector.extract_strided_slice %19 {offsets = [0, 1, 0], sizes = [4, 7, 256], strides = [1, 1, 1]} : vector<4x8x256xf32> to vector<4x7x256xf32>
    %24 = tpu.concatenate %23, %20 in 1 : vector<4x7x256xf32>, vector<4x1x256xf32> -> vector<4x8x256xf32>
    %25 = tpu.concatenate %22, %19, %24 in 2 : vector<4x8x256xf32>, vector<4x8x256xf32>, vector<4x8x256xf32> -> vector<4x8x768xf32>
    %26 = vector.shape_cast %25 : vector<4x8x768xf32> to vector<32x768xf32>
    %27 = arith.truncf %26 : vector<32x768xf32> to vector<32x768xbf16>
    %c0_10 = arith.constant 0 : index
    %c0_11 = arith.constant 0 : index
    %28 = vector.load %arg4[%c0_10, %c0_11] : memref<768x128xbf16, #tpu.memory_space<vmem>>, vector<768x128xbf16>
    %cst_12 = arith.constant dense<0.000000e+00> : vector<32x128xf32>
    %29 = tpu.matmul %27, %28, %cst_12 {dimension_numbers = #tpu.dot_dimension_numbers<[1], [0], [0], [1], [0, 0, 1, 1], [], []>} : vector<32x768xbf16>, vector<768x128xbf16>, vector<32x128xf32> -> vector<32x128xf32>
    %c0_13 = arith.constant 0 : index
    %c0_14 = arith.constant 0 : index
    %30 = vector.load %arg5[%c0_13, %c0_14] : memref<1x128xf32, #tpu.memory_space<vmem>>, vector<1x128xf32>
    %31 = vector.broadcast %30 : vector<1x128xf32> to vector<32x128xf32>
    %32 = arith.addf %29, %31 : vector<32x128xf32>
    %cst_15 = arith.constant 0.000000e+00 : f32
    %33 = vector.broadcast %cst_15 : f32 to vector<32x128xf32>
    %34 = arith.cmpf oge, %32, %33 : vector<32x128xf32>
    %cst_16 = arith.constant 0.00999999977 : f32
    %35 = vector.broadcast %cst_16 : f32 to vector<32x128xf32>
    %36 = arith.mulf %35, %32 : vector<32x128xf32>
    %37 = arith.select %34, %32, %36 : vector<32x128xi1>, vector<32x128xf32>
    %38 = vector.shape_cast %37 : vector<32x128xf32> to vector<4x8x128xf32>
    %cst_17 = arith.constant 0.000000e+00 : f32
    %39 = vector.broadcast %cst_17 : f32 to vector<4x1x128xf32>
    %40 = vector.extract_strided_slice %38 {offsets = [0, 0, 0], sizes = [4, 7, 128], strides = [1, 1, 1]} : vector<4x8x128xf32> to vector<4x7x128xf32>
    %41 = tpu.concatenate %39, %40 in 1 : vector<4x1x128xf32>, vector<4x7x128xf32> -> vector<4x8x128xf32>
    %42 = vector.extract_strided_slice %38 {offsets = [0, 1, 0], sizes = [4, 7, 128], strides = [1, 1, 1]} : vector<4x8x128xf32> to vector<4x7x128xf32>
    %43 = tpu.concatenate %42, %39 in 1 : vector<4x7x128xf32>, vector<4x1x128xf32> -> vector<4x8x128xf32>
    %44 = tpu.concatenate %41, %38, %43 in 2 : vector<4x8x128xf32>, vector<4x8x128xf32>, vector<4x8x128xf32> -> vector<4x8x384xf32>
    %45 = vector.shape_cast %44 : vector<4x8x384xf32> to vector<32x384xf32>
    %46 = arith.truncf %45 : vector<32x384xf32> to vector<32x384xbf16>
    %c0_18 = arith.constant 0 : index
    %c0_19 = arith.constant 0 : index
    %47 = vector.load %arg6[%c0_18, %c0_19] : memref<384x64xbf16, #tpu.memory_space<vmem>>, vector<384x64xbf16>
    %cst_20 = arith.constant dense<0.000000e+00> : vector<32x64xf32>
    %48 = tpu.matmul %46, %47, %cst_20 {dimension_numbers = #tpu.dot_dimension_numbers<[1], [0], [0], [1], [0, 0, 1, 1], [], []>} : vector<32x384xbf16>, vector<384x64xbf16>, vector<32x64xf32> -> vector<32x64xf32>
    %c0_21 = arith.constant 0 : index
    %c0_22 = arith.constant 0 : index
    %49 = vector.load %arg7[%c0_21, %c0_22] : memref<1x64xf32, #tpu.memory_space<vmem>>, vector<1x64xf32>
    %50 = vector.broadcast %49 : vector<1x64xf32> to vector<32x64xf32>
    %51 = arith.addf %48, %50 : vector<32x64xf32>
    %cst_23 = arith.constant 0.000000e+00 : f32
    %52 = vector.broadcast %cst_23 : f32 to vector<32x64xf32>
    %53 = arith.cmpf oge, %51, %52 : vector<32x64xf32>
    %cst_24 = arith.constant 0.00999999977 : f32
    %54 = vector.broadcast %cst_24 : f32 to vector<32x64xf32>
    %55 = arith.mulf %54, %51 : vector<32x64xf32>
    %56 = arith.select %53, %51, %55 : vector<32x64xi1>, vector<32x64xf32>
    %57 = vector.shape_cast %56 : vector<32x64xf32> to vector<4x8x64xf32>
    %cst_25 = arith.constant 0.000000e+00 : f32
    %58 = vector.broadcast %cst_25 : f32 to vector<4x1x64xf32>
    %59 = vector.extract_strided_slice %57 {offsets = [0, 0, 0], sizes = [4, 7, 64], strides = [1, 1, 1]} : vector<4x8x64xf32> to vector<4x7x64xf32>
    %60 = tpu.concatenate %58, %59 in 1 : vector<4x1x64xf32>, vector<4x7x64xf32> -> vector<4x8x64xf32>
    %61 = vector.extract_strided_slice %57 {offsets = [0, 1, 0], sizes = [4, 7, 64], strides = [1, 1, 1]} : vector<4x8x64xf32> to vector<4x7x64xf32>
    %62 = tpu.concatenate %61, %58 in 1 : vector<4x7x64xf32>, vector<4x1x64xf32> -> vector<4x8x64xf32>
    %63 = tpu.concatenate %60, %57, %62 in 2 : vector<4x8x64xf32>, vector<4x8x64xf32>, vector<4x8x64xf32> -> vector<4x8x192xf32>
    %64 = vector.shape_cast %63 : vector<4x8x192xf32> to vector<32x192xf32>
    %65 = arith.truncf %64 : vector<32x192xf32> to vector<32x192xbf16>
    %c0_26 = arith.constant 0 : index
    %c0_27 = arith.constant 0 : index
    %66 = vector.load %arg8[%c0_26, %c0_27] : memref<192x32xbf16, #tpu.memory_space<vmem>>, vector<192x32xbf16>
    %cst_28 = arith.constant dense<0.000000e+00> : vector<32x32xf32>
    %67 = tpu.matmul %65, %66, %cst_28 {dimension_numbers = #tpu.dot_dimension_numbers<[1], [0], [0], [1], [0, 0, 1, 1], [], []>} : vector<32x192xbf16>, vector<192x32xbf16>, vector<32x32xf32> -> vector<32x32xf32>
    %c0_29 = arith.constant 0 : index
    %c0_30 = arith.constant 0 : index
    %68 = vector.load %arg9[%c0_29, %c0_30] : memref<1x32xf32, #tpu.memory_space<vmem>>, vector<1x32xf32>
    %69 = vector.broadcast %68 : vector<1x32xf32> to vector<32x32xf32>
    %70 = arith.addf %67, %69 : vector<32x32xf32>
    %cst_31 = arith.constant 0.000000e+00 : f32
    %71 = vector.broadcast %cst_31 : f32 to vector<32x32xf32>
    %72 = arith.cmpf oge, %70, %71 : vector<32x32xf32>
    %cst_32 = arith.constant 0.00999999977 : f32
    %73 = vector.broadcast %cst_32 : f32 to vector<32x32xf32>
    %74 = arith.mulf %73, %70 : vector<32x32xf32>
    %75 = arith.select %72, %70, %74 : vector<32x32xi1>, vector<32x32xf32>
    %76 = vector.shape_cast %75 : vector<32x32xf32> to vector<4x8x32xf32>
    %77 = vector.shape_cast %76 : vector<4x8x32xf32> to vector<32x32xf32>
    %78 = arith.truncf %77 : vector<32x32xf32> to vector<32x32xbf16>
    %c0_33 = arith.constant 0 : index
    %c0_34 = arith.constant 0 : index
    %79 = vector.load %arg10[%c0_33, %c0_34] : memref<32x64xbf16, #tpu.memory_space<vmem>>, vector<32x64xbf16>
    %cst_35 = arith.constant dense<0.000000e+00> : vector<32x64xf32>
    %80 = tpu.matmul %78, %79, %cst_35 {dimension_numbers = #tpu.dot_dimension_numbers<[1], [0], [0], [1], [0, 0, 1, 1], [], []>} : vector<32x32xbf16>, vector<32x64xbf16>, vector<32x64xf32> -> vector<32x64xf32>
    %c0_36 = arith.constant 0 : index
    %c0_37 = arith.constant 0 : index
    %81 = vector.load %arg16[%c0_36, %c0_37] : memref<1x64xf32, #tpu.memory_space<vmem>>, vector<1x64xf32>
    %82 = vector.broadcast %81 : vector<1x64xf32> to vector<32x64xf32>
    %83 = arith.addf %80, %82 : vector<32x64xf32>
    %84 = vector.shape_cast %83 : vector<32x64xf32> to vector<4x8x64xf32>
    %c0_38 = arith.constant 0 : index
    %c0_39 = arith.constant 0 : index
    %85 = vector.load %arg11[%c0_38, %c0_39] : memref<32x64xbf16, #tpu.memory_space<vmem>>, vector<32x64xbf16>
    %cst_40 = arith.constant dense<0.000000e+00> : vector<32x64xf32>
    %86 = tpu.matmul %78, %85, %cst_40 {dimension_numbers = #tpu.dot_dimension_numbers<[1], [0], [0], [1], [0, 0, 1, 1], [], []>} : vector<32x32xbf16>, vector<32x64xbf16>, vector<32x64xf32> -> vector<32x64xf32>
    %c0_41 = arith.constant 0 : index
    %c0_42 = arith.constant 0 : index
    %87 = vector.load %arg17[%c0_41, %c0_42] : memref<1x64xf32, #tpu.memory_space<vmem>>, vector<1x64xf32>
    %88 = vector.broadcast %87 : vector<1x64xf32> to vector<32x64xf32>
    %89 = arith.addf %86, %88 : vector<32x64xf32>
    %90 = vector.shape_cast %89 : vector<32x64xf32> to vector<4x8x64xf32>
    %c0_43 = arith.constant 0 : index
    %c0_44 = arith.constant 0 : index
    %91 = vector.load %arg12[%c0_43, %c0_44] : memref<32x64xbf16, #tpu.memory_space<vmem>>, vector<32x64xbf16>
    %cst_45 = arith.constant dense<0.000000e+00> : vector<32x64xf32>
    %92 = tpu.matmul %78, %91, %cst_45 {dimension_numbers = #tpu.dot_dimension_numbers<[1], [0], [0], [1], [0, 0, 1, 1], [], []>} : vector<32x32xbf16>, vector<32x64xbf16>, vector<32x64xf32> -> vector<32x64xf32>
    %c0_46 = arith.constant 0 : index
    %c0_47 = arith.constant 0 : index
    %93 = vector.load %arg18[%c0_46, %c0_47] : memref<1x64xf32, #tpu.memory_space<vmem>>, vector<1x64xf32>
    %94 = vector.broadcast %93 : vector<1x64xf32> to vector<32x64xf32>
    %95 = arith.addf %92, %94 : vector<32x64xf32>
    %96 = vector.shape_cast %95 : vector<32x64xf32> to vector<4x8x64xf32>
    %c0_48 = arith.constant 0 : index
    %c0_49 = arith.constant 0 : index
    %97 = vector.load %arg13[%c0_48, %c0_49] : memref<64x64xbf16, #tpu.memory_space<vmem>>, vector<64x64xbf16>
    %c0_50 = arith.constant 0 : index
    %c0_51 = arith.constant 0 : index
    %98 = vector.load %arg14[%c0_50, %c0_51] : memref<64x64xbf16, #tpu.memory_space<vmem>>, vector<64x64xbf16>
    %c0_52 = arith.constant 0 : index
    %c0_53 = arith.constant 0 : index
    %99 = vector.load %arg15[%c0_52, %c0_53] : memref<64x64xbf16, #tpu.memory_space<vmem>>, vector<64x64xbf16>
    %c0_54 = arith.constant 0 : index
    %c0_55 = arith.constant 0 : index
    %100 = vector.load %arg19[%c0_54, %c0_55] : memref<1x64xf32, #tpu.memory_space<vmem>>, vector<1x64xf32>
    %cst_56 = arith.constant 0.000000e+00 : f32
    %101 = vector.broadcast %cst_56 : f32 to vector<4x64xf32>
    %102 = arith.truncf %101 : vector<4x64xf32> to vector<4x64xbf16>
    %cst_57 = arith.constant dense<0.000000e+00> : vector<4x64xf32>
    %103 = tpu.matmul %102, %97, %cst_57 {dimension_numbers = #tpu.dot_dimension_numbers<[1], [0], [0], [1], [0, 0, 1, 1], [], []>} : vector<4x64xbf16>, vector<64x64xbf16>, vector<4x64xf32> -> vector<4x64xf32>
    %cst_58 = arith.constant dense<0.000000e+00> : vector<4x64xf32>
    %104 = tpu.matmul %102, %98, %cst_58 {dimension_numbers = #tpu.dot_dimension_numbers<[1], [0], [0], [1], [0, 0, 1, 1], [], []>} : vector<4x64xbf16>, vector<64x64xbf16>, vector<4x64xf32> -> vector<4x64xf32>
    %cst_59 = arith.constant dense<0.000000e+00> : vector<4x64xf32>
    %105 = tpu.matmul %102, %99, %cst_59 {dimension_numbers = #tpu.dot_dimension_numbers<[1], [0], [0], [1], [0, 0, 1, 1], [], []>} : vector<4x64xbf16>, vector<64x64xbf16>, vector<4x64xf32> -> vector<4x64xf32>
    %106 = vector.broadcast %100 : vector<1x64xf32> to vector<4x64xf32>
    %107 = arith.addf %105, %106 : vector<4x64xf32>
    %108 = vector.extract_strided_slice %84 {offsets = [0, 0, 0], sizes = [4, 1, 64], strides = [1, 1, 1]} : vector<4x8x64xf32> to vector<4x1x64xf32>
    %109 = vector.shape_cast %108 : vector<4x1x64xf32> to vector<4x64xf32>
    %110 = arith.addf %109, %103 : vector<4x64xf32>
    %111 = arith.negf %110 : vector<4x64xf32>
    %112 = math.exp %111 : vector<4x64xf32>
    %cst_60 = arith.constant 1.000000e+00 : f32
    %113 = vector.broadcast %cst_60 : f32 to vector<4x64xf32>
    %114 = arith.addf %113, %112 : vector<4x64xf32>
    %115 = arith.divf %113, %114 : vector<4x64xf32>
    %116 = vector.extract_strided_slice %90 {offsets = [0, 0, 0], sizes = [4, 1, 64], strides = [1, 1, 1]} : vector<4x8x64xf32> to vector<4x1x64xf32>
    %117 = vector.shape_cast %116 : vector<4x1x64xf32> to vector<4x64xf32>
    %118 = arith.addf %117, %104 : vector<4x64xf32>
    %119 = arith.negf %118 : vector<4x64xf32>
    %120 = math.exp %119 : vector<4x64xf32>
    %cst_61 = arith.constant 1.000000e+00 : f32
    %121 = vector.broadcast %cst_61 : f32 to vector<4x64xf32>
    %122 = arith.addf %121, %120 : vector<4x64xf32>
    %123 = arith.divf %121, %122 : vector<4x64xf32>
    %124 = vector.extract_strided_slice %96 {offsets = [0, 0, 0], sizes = [4, 1, 64], strides = [1, 1, 1]} : vector<4x8x64xf32> to vector<4x1x64xf32>
    %125 = vector.shape_cast %124 : vector<4x1x64xf32> to vector<4x64xf32>
    %126 = arith.mulf %115, %107 : vector<4x64xf32>
    %127 = arith.addf %125, %126 : vector<4x64xf32>
    %128 = math.tanh %127 : vector<4x64xf32>
    %cst_62 = arith.constant 1.000000e+00 : f32
    %129 = vector.broadcast %cst_62 : f32 to vector<4x64xf32>
    %130 = arith.subf %129, %123 : vector<4x64xf32>
    %131 = arith.mulf %130, %128 : vector<4x64xf32>
    %132 = arith.mulf %123, %101 : vector<4x64xf32>
    %133 = arith.addf %131, %132 : vector<4x64xf32>
    %134 = arith.truncf %133 : vector<4x64xf32> to vector<4x64xbf16>
    %cst_63 = arith.constant dense<0.000000e+00> : vector<4x64xf32>
    %135 = tpu.matmul %134, %97, %cst_63 {dimension_numbers = #tpu.dot_dimension_numbers<[1], [0], [0], [1], [0, 0, 1, 1], [], []>} : vector<4x64xbf16>, vector<64x64xbf16>, vector<4x64xf32> -> vector<4x64xf32>
    %cst_64 = arith.constant dense<0.000000e+00> : vector<4x64xf32>
    %136 = tpu.matmul %134, %98, %cst_64 {dimension_numbers = #tpu.dot_dimension_numbers<[1], [0], [0], [1], [0, 0, 1, 1], [], []>} : vector<4x64xbf16>, vector<64x64xbf16>, vector<4x64xf32> -> vector<4x64xf32>
    %cst_65 = arith.constant dense<0.000000e+00> : vector<4x64xf32>
    %137 = tpu.matmul %134, %99, %cst_65 {dimension_numbers = #tpu.dot_dimension_numbers<[1], [0], [0], [1], [0, 0, 1, 1], [], []>} : vector<4x64xbf16>, vector<64x64xbf16>, vector<4x64xf32> -> vector<4x64xf32>
    %138 = vector.broadcast %100 : vector<1x64xf32> to vector<4x64xf32>
    %139 = arith.addf %137, %138 : vector<4x64xf32>
    %140 = vector.extract_strided_slice %84 {offsets = [0, 1, 0], sizes = [4, 1, 64], strides = [1, 1, 1]} : vector<4x8x64xf32> to vector<4x1x64xf32>
    %141 = vector.shape_cast %140 : vector<4x1x64xf32> to vector<4x64xf32>
    %142 = arith.addf %141, %135 : vector<4x64xf32>
    %143 = arith.negf %142 : vector<4x64xf32>
    %144 = math.exp %143 : vector<4x64xf32>
    %cst_66 = arith.constant 1.000000e+00 : f32
    %145 = vector.broadcast %cst_66 : f32 to vector<4x64xf32>
    %146 = arith.addf %145, %144 : vector<4x64xf32>
    %147 = arith.divf %145, %146 : vector<4x64xf32>
    %148 = vector.extract_strided_slice %90 {offsets = [0, 1, 0], sizes = [4, 1, 64], strides = [1, 1, 1]} : vector<4x8x64xf32> to vector<4x1x64xf32>
    %149 = vector.shape_cast %148 : vector<4x1x64xf32> to vector<4x64xf32>
    %150 = arith.addf %149, %136 : vector<4x64xf32>
    %151 = arith.negf %150 : vector<4x64xf32>
    %152 = math.exp %151 : vector<4x64xf32>
    %cst_67 = arith.constant 1.000000e+00 : f32
    %153 = vector.broadcast %cst_67 : f32 to vector<4x64xf32>
    %154 = arith.addf %153, %152 : vector<4x64xf32>
    %155 = arith.divf %153, %154 : vector<4x64xf32>
    %156 = vector.extract_strided_slice %96 {offsets = [0, 1, 0], sizes = [4, 1, 64], strides = [1, 1, 1]} : vector<4x8x64xf32> to vector<4x1x64xf32>
    %157 = vector.shape_cast %156 : vector<4x1x64xf32> to vector<4x64xf32>
    %158 = arith.mulf %147, %139 : vector<4x64xf32>
    %159 = arith.addf %157, %158 : vector<4x64xf32>
    %160 = math.tanh %159 : vector<4x64xf32>
    %cst_68 = arith.constant 1.000000e+00 : f32
    %161 = vector.broadcast %cst_68 : f32 to vector<4x64xf32>
    %162 = arith.subf %161, %155 : vector<4x64xf32>
    %163 = arith.mulf %162, %160 : vector<4x64xf32>
    %164 = arith.mulf %155, %133 : vector<4x64xf32>
    %165 = arith.addf %163, %164 : vector<4x64xf32>
    %166 = arith.truncf %165 : vector<4x64xf32> to vector<4x64xbf16>
    %cst_69 = arith.constant dense<0.000000e+00> : vector<4x64xf32>
    %167 = tpu.matmul %166, %97, %cst_69 {dimension_numbers = #tpu.dot_dimension_numbers<[1], [0], [0], [1], [0, 0, 1, 1], [], []>} : vector<4x64xbf16>, vector<64x64xbf16>, vector<4x64xf32> -> vector<4x64xf32>
    %cst_70 = arith.constant dense<0.000000e+00> : vector<4x64xf32>
    %168 = tpu.matmul %166, %98, %cst_70 {dimension_numbers = #tpu.dot_dimension_numbers<[1], [0], [0], [1], [0, 0, 1, 1], [], []>} : vector<4x64xbf16>, vector<64x64xbf16>, vector<4x64xf32> -> vector<4x64xf32>
    %cst_71 = arith.constant dense<0.000000e+00> : vector<4x64xf32>
    %169 = tpu.matmul %166, %99, %cst_71 {dimension_numbers = #tpu.dot_dimension_numbers<[1], [0], [0], [1], [0, 0, 1, 1], [], []>} : vector<4x64xbf16>, vector<64x64xbf16>, vector<4x64xf32> -> vector<4x64xf32>
    %170 = vector.broadcast %100 : vector<1x64xf32> to vector<4x64xf32>
    %171 = arith.addf %169, %170 : vector<4x64xf32>
    %172 = vector.extract_strided_slice %84 {offsets = [0, 2, 0], sizes = [4, 1, 64], strides = [1, 1, 1]} : vector<4x8x64xf32> to vector<4x1x64xf32>
    %173 = vector.shape_cast %172 : vector<4x1x64xf32> to vector<4x64xf32>
    %174 = arith.addf %173, %167 : vector<4x64xf32>
    %175 = arith.negf %174 : vector<4x64xf32>
    %176 = math.exp %175 : vector<4x64xf32>
    %cst_72 = arith.constant 1.000000e+00 : f32
    %177 = vector.broadcast %cst_72 : f32 to vector<4x64xf32>
    %178 = arith.addf %177, %176 : vector<4x64xf32>
    %179 = arith.divf %177, %178 : vector<4x64xf32>
    %180 = vector.extract_strided_slice %90 {offsets = [0, 2, 0], sizes = [4, 1, 64], strides = [1, 1, 1]} : vector<4x8x64xf32> to vector<4x1x64xf32>
    %181 = vector.shape_cast %180 : vector<4x1x64xf32> to vector<4x64xf32>
    %182 = arith.addf %181, %168 : vector<4x64xf32>
    %183 = arith.negf %182 : vector<4x64xf32>
    %184 = math.exp %183 : vector<4x64xf32>
    %cst_73 = arith.constant 1.000000e+00 : f32
    %185 = vector.broadcast %cst_73 : f32 to vector<4x64xf32>
    %186 = arith.addf %185, %184 : vector<4x64xf32>
    %187 = arith.divf %185, %186 : vector<4x64xf32>
    %188 = vector.extract_strided_slice %96 {offsets = [0, 2, 0], sizes = [4, 1, 64], strides = [1, 1, 1]} : vector<4x8x64xf32> to vector<4x1x64xf32>
    %189 = vector.shape_cast %188 : vector<4x1x64xf32> to vector<4x64xf32>
    %190 = arith.mulf %179, %171 : vector<4x64xf32>
    %191 = arith.addf %189, %190 : vector<4x64xf32>
    %192 = math.tanh %191 : vector<4x64xf32>
    %cst_74 = arith.constant 1.000000e+00 : f32
    %193 = vector.broadcast %cst_74 : f32 to vector<4x64xf32>
    %194 = arith.subf %193, %187 : vector<4x64xf32>
    %195 = arith.mulf %194, %192 : vector<4x64xf32>
    %196 = arith.mulf %187, %165 : vector<4x64xf32>
    %197 = arith.addf %195, %196 : vector<4x64xf32>
    %198 = arith.truncf %197 : vector<4x64xf32> to vector<4x64xbf16>
    %cst_75 = arith.constant dense<0.000000e+00> : vector<4x64xf32>
    %199 = tpu.matmul %198, %97, %cst_75 {dimension_numbers = #tpu.dot_dimension_numbers<[1], [0], [0], [1], [0, 0, 1, 1], [], []>} : vector<4x64xbf16>, vector<64x64xbf16>, vector<4x64xf32> -> vector<4x64xf32>
    %cst_76 = arith.constant dense<0.000000e+00> : vector<4x64xf32>
    %200 = tpu.matmul %198, %98, %cst_76 {dimension_numbers = #tpu.dot_dimension_numbers<[1], [0], [0], [1], [0, 0, 1, 1], [], []>} : vector<4x64xbf16>, vector<64x64xbf16>, vector<4x64xf32> -> vector<4x64xf32>
    %cst_77 = arith.constant dense<0.000000e+00> : vector<4x64xf32>
    %201 = tpu.matmul %198, %99, %cst_77 {dimension_numbers = #tpu.dot_dimension_numbers<[1], [0], [0], [1], [0, 0, 1, 1], [], []>} : vector<4x64xbf16>, vector<64x64xbf16>, vector<4x64xf32> -> vector<4x64xf32>
    %202 = vector.broadcast %100 : vector<1x64xf32> to vector<4x64xf32>
    %203 = arith.addf %201, %202 : vector<4x64xf32>
    %204 = vector.extract_strided_slice %84 {offsets = [0, 3, 0], sizes = [4, 1, 64], strides = [1, 1, 1]} : vector<4x8x64xf32> to vector<4x1x64xf32>
    %205 = vector.shape_cast %204 : vector<4x1x64xf32> to vector<4x64xf32>
    %206 = arith.addf %205, %199 : vector<4x64xf32>
    %207 = arith.negf %206 : vector<4x64xf32>
    %208 = math.exp %207 : vector<4x64xf32>
    %cst_78 = arith.constant 1.000000e+00 : f32
    %209 = vector.broadcast %cst_78 : f32 to vector<4x64xf32>
    %210 = arith.addf %209, %208 : vector<4x64xf32>
    %211 = arith.divf %209, %210 : vector<4x64xf32>
    %212 = vector.extract_strided_slice %90 {offsets = [0, 3, 0], sizes = [4, 1, 64], strides = [1, 1, 1]} : vector<4x8x64xf32> to vector<4x1x64xf32>
    %213 = vector.shape_cast %212 : vector<4x1x64xf32> to vector<4x64xf32>
    %214 = arith.addf %213, %200 : vector<4x64xf32>
    %215 = arith.negf %214 : vector<4x64xf32>
    %216 = math.exp %215 : vector<4x64xf32>
    %cst_79 = arith.constant 1.000000e+00 : f32
    %217 = vector.broadcast %cst_79 : f32 to vector<4x64xf32>
    %218 = arith.addf %217, %216 : vector<4x64xf32>
    %219 = arith.divf %217, %218 : vector<4x64xf32>
    %220 = vector.extract_strided_slice %96 {offsets = [0, 3, 0], sizes = [4, 1, 64], strides = [1, 1, 1]} : vector<4x8x64xf32> to vector<4x1x64xf32>
    %221 = vector.shape_cast %220 : vector<4x1x64xf32> to vector<4x64xf32>
    %222 = arith.mulf %211, %203 : vector<4x64xf32>
    %223 = arith.addf %221, %222 : vector<4x64xf32>
    %224 = math.tanh %223 : vector<4x64xf32>
    %cst_80 = arith.constant 1.000000e+00 : f32
    %225 = vector.broadcast %cst_80 : f32 to vector<4x64xf32>
    %226 = arith.subf %225, %219 : vector<4x64xf32>
    %227 = arith.mulf %226, %224 : vector<4x64xf32>
    %228 = arith.mulf %219, %197 : vector<4x64xf32>
    %229 = arith.addf %227, %228 : vector<4x64xf32>
    %230 = arith.truncf %229 : vector<4x64xf32> to vector<4x64xbf16>
    %cst_81 = arith.constant dense<0.000000e+00> : vector<4x64xf32>
    %231 = tpu.matmul %230, %97, %cst_81 {dimension_numbers = #tpu.dot_dimension_numbers<[1], [0], [0], [1], [0, 0, 1, 1], [], []>} : vector<4x64xbf16>, vector<64x64xbf16>, vector<4x64xf32> -> vector<4x64xf32>
    %cst_82 = arith.constant dense<0.000000e+00> : vector<4x64xf32>
    %232 = tpu.matmul %230, %98, %cst_82 {dimension_numbers = #tpu.dot_dimension_numbers<[1], [0], [0], [1], [0, 0, 1, 1], [], []>} : vector<4x64xbf16>, vector<64x64xbf16>, vector<4x64xf32> -> vector<4x64xf32>
    %cst_83 = arith.constant dense<0.000000e+00> : vector<4x64xf32>
    %233 = tpu.matmul %230, %99, %cst_83 {dimension_numbers = #tpu.dot_dimension_numbers<[1], [0], [0], [1], [0, 0, 1, 1], [], []>} : vector<4x64xbf16>, vector<64x64xbf16>, vector<4x64xf32> -> vector<4x64xf32>
    %234 = vector.broadcast %100 : vector<1x64xf32> to vector<4x64xf32>
    %235 = arith.addf %233, %234 : vector<4x64xf32>
    %236 = vector.extract_strided_slice %84 {offsets = [0, 4, 0], sizes = [4, 1, 64], strides = [1, 1, 1]} : vector<4x8x64xf32> to vector<4x1x64xf32>
    %237 = vector.shape_cast %236 : vector<4x1x64xf32> to vector<4x64xf32>
    %238 = arith.addf %237, %231 : vector<4x64xf32>
    %239 = arith.negf %238 : vector<4x64xf32>
    %240 = math.exp %239 : vector<4x64xf32>
    %cst_84 = arith.constant 1.000000e+00 : f32
    %241 = vector.broadcast %cst_84 : f32 to vector<4x64xf32>
    %242 = arith.addf %241, %240 : vector<4x64xf32>
    %243 = arith.divf %241, %242 : vector<4x64xf32>
    %244 = vector.extract_strided_slice %90 {offsets = [0, 4, 0], sizes = [4, 1, 64], strides = [1, 1, 1]} : vector<4x8x64xf32> to vector<4x1x64xf32>
    %245 = vector.shape_cast %244 : vector<4x1x64xf32> to vector<4x64xf32>
    %246 = arith.addf %245, %232 : vector<4x64xf32>
    %247 = arith.negf %246 : vector<4x64xf32>
    %248 = math.exp %247 : vector<4x64xf32>
    %cst_85 = arith.constant 1.000000e+00 : f32
    %249 = vector.broadcast %cst_85 : f32 to vector<4x64xf32>
    %250 = arith.addf %249, %248 : vector<4x64xf32>
    %251 = arith.divf %249, %250 : vector<4x64xf32>
    %252 = vector.extract_strided_slice %96 {offsets = [0, 4, 0], sizes = [4, 1, 64], strides = [1, 1, 1]} : vector<4x8x64xf32> to vector<4x1x64xf32>
    %253 = vector.shape_cast %252 : vector<4x1x64xf32> to vector<4x64xf32>
    %254 = arith.mulf %243, %235 : vector<4x64xf32>
    %255 = arith.addf %253, %254 : vector<4x64xf32>
    %256 = math.tanh %255 : vector<4x64xf32>
    %cst_86 = arith.constant 1.000000e+00 : f32
    %257 = vector.broadcast %cst_86 : f32 to vector<4x64xf32>
    %258 = arith.subf %257, %251 : vector<4x64xf32>
    %259 = arith.mulf %258, %256 : vector<4x64xf32>
    %260 = arith.mulf %251, %229 : vector<4x64xf32>
    %261 = arith.addf %259, %260 : vector<4x64xf32>
    %262 = arith.truncf %261 : vector<4x64xf32> to vector<4x64xbf16>
    %cst_87 = arith.constant dense<0.000000e+00> : vector<4x64xf32>
    %263 = tpu.matmul %262, %97, %cst_87 {dimension_numbers = #tpu.dot_dimension_numbers<[1], [0], [0], [1], [0, 0, 1, 1], [], []>} : vector<4x64xbf16>, vector<64x64xbf16>, vector<4x64xf32> -> vector<4x64xf32>
    %cst_88 = arith.constant dense<0.000000e+00> : vector<4x64xf32>
    %264 = tpu.matmul %262, %98, %cst_88 {dimension_numbers = #tpu.dot_dimension_numbers<[1], [0], [0], [1], [0, 0, 1, 1], [], []>} : vector<4x64xbf16>, vector<64x64xbf16>, vector<4x64xf32> -> vector<4x64xf32>
    %cst_89 = arith.constant dense<0.000000e+00> : vector<4x64xf32>
    %265 = tpu.matmul %262, %99, %cst_89 {dimension_numbers = #tpu.dot_dimension_numbers<[1], [0], [0], [1], [0, 0, 1, 1], [], []>} : vector<4x64xbf16>, vector<64x64xbf16>, vector<4x64xf32> -> vector<4x64xf32>
    %266 = vector.broadcast %100 : vector<1x64xf32> to vector<4x64xf32>
    %267 = arith.addf %265, %266 : vector<4x64xf32>
    %268 = vector.extract_strided_slice %84 {offsets = [0, 5, 0], sizes = [4, 1, 64], strides = [1, 1, 1]} : vector<4x8x64xf32> to vector<4x1x64xf32>
    %269 = vector.shape_cast %268 : vector<4x1x64xf32> to vector<4x64xf32>
    %270 = arith.addf %269, %263 : vector<4x64xf32>
    %271 = arith.negf %270 : vector<4x64xf32>
    %272 = math.exp %271 : vector<4x64xf32>
    %cst_90 = arith.constant 1.000000e+00 : f32
    %273 = vector.broadcast %cst_90 : f32 to vector<4x64xf32>
    %274 = arith.addf %273, %272 : vector<4x64xf32>
    %275 = arith.divf %273, %274 : vector<4x64xf32>
    %276 = vector.extract_strided_slice %90 {offsets = [0, 5, 0], sizes = [4, 1, 64], strides = [1, 1, 1]} : vector<4x8x64xf32> to vector<4x1x64xf32>
    %277 = vector.shape_cast %276 : vector<4x1x64xf32> to vector<4x64xf32>
    %278 = arith.addf %277, %264 : vector<4x64xf32>
    %279 = arith.negf %278 : vector<4x64xf32>
    %280 = math.exp %279 : vector<4x64xf32>
    %cst_91 = arith.constant 1.000000e+00 : f32
    %281 = vector.broadcast %cst_91 : f32 to vector<4x64xf32>
    %282 = arith.addf %281, %280 : vector<4x64xf32>
    %283 = arith.divf %281, %282 : vector<4x64xf32>
    %284 = vector.extract_strided_slice %96 {offsets = [0, 5, 0], sizes = [4, 1, 64], strides = [1, 1, 1]} : vector<4x8x64xf32> to vector<4x1x64xf32>
    %285 = vector.shape_cast %284 : vector<4x1x64xf32> to vector<4x64xf32>
    %286 = arith.mulf %275, %267 : vector<4x64xf32>
    %287 = arith.addf %285, %286 : vector<4x64xf32>
    %288 = math.tanh %287 : vector<4x64xf32>
    %cst_92 = arith.constant 1.000000e+00 : f32
    %289 = vector.broadcast %cst_92 : f32 to vector<4x64xf32>
    %290 = arith.subf %289, %283 : vector<4x64xf32>
    %291 = arith.mulf %290, %288 : vector<4x64xf32>
    %292 = arith.mulf %283, %261 : vector<4x64xf32>
    %293 = arith.addf %291, %292 : vector<4x64xf32>
    %294 = arith.truncf %293 : vector<4x64xf32> to vector<4x64xbf16>
    %cst_93 = arith.constant dense<0.000000e+00> : vector<4x64xf32>
    %295 = tpu.matmul %294, %97, %cst_93 {dimension_numbers = #tpu.dot_dimension_numbers<[1], [0], [0], [1], [0, 0, 1, 1], [], []>} : vector<4x64xbf16>, vector<64x64xbf16>, vector<4x64xf32> -> vector<4x64xf32>
    %cst_94 = arith.constant dense<0.000000e+00> : vector<4x64xf32>
    %296 = tpu.matmul %294, %98, %cst_94 {dimension_numbers = #tpu.dot_dimension_numbers<[1], [0], [0], [1], [0, 0, 1, 1], [], []>} : vector<4x64xbf16>, vector<64x64xbf16>, vector<4x64xf32> -> vector<4x64xf32>
    %cst_95 = arith.constant dense<0.000000e+00> : vector<4x64xf32>
    %297 = tpu.matmul %294, %99, %cst_95 {dimension_numbers = #tpu.dot_dimension_numbers<[1], [0], [0], [1], [0, 0, 1, 1], [], []>} : vector<4x64xbf16>, vector<64x64xbf16>, vector<4x64xf32> -> vector<4x64xf32>
    %298 = vector.broadcast %100 : vector<1x64xf32> to vector<4x64xf32>
    %299 = arith.addf %297, %298 : vector<4x64xf32>
    %300 = vector.extract_strided_slice %84 {offsets = [0, 6, 0], sizes = [4, 1, 64], strides = [1, 1, 1]} : vector<4x8x64xf32> to vector<4x1x64xf32>
    %301 = vector.shape_cast %300 : vector<4x1x64xf32> to vector<4x64xf32>
    %302 = arith.addf %301, %295 : vector<4x64xf32>
    %303 = arith.negf %302 : vector<4x64xf32>
    %304 = math.exp %303 : vector<4x64xf32>
    %cst_96 = arith.constant 1.000000e+00 : f32
    %305 = vector.broadcast %cst_96 : f32 to vector<4x64xf32>
    %306 = arith.addf %305, %304 : vector<4x64xf32>
    %307 = arith.divf %305, %306 : vector<4x64xf32>
    %308 = vector.extract_strided_slice %90 {offsets = [0, 6, 0], sizes = [4, 1, 64], strides = [1, 1, 1]} : vector<4x8x64xf32> to vector<4x1x64xf32>
    %309 = vector.shape_cast %308 : vector<4x1x64xf32> to vector<4x64xf32>
    %310 = arith.addf %309, %296 : vector<4x64xf32>
    %311 = arith.negf %310 : vector<4x64xf32>
    %312 = math.exp %311 : vector<4x64xf32>
    %cst_97 = arith.constant 1.000000e+00 : f32
    %313 = vector.broadcast %cst_97 : f32 to vector<4x64xf32>
    %314 = arith.addf %313, %312 : vector<4x64xf32>
    %315 = arith.divf %313, %314 : vector<4x64xf32>
    %316 = vector.extract_strided_slice %96 {offsets = [0, 6, 0], sizes = [4, 1, 64], strides = [1, 1, 1]} : vector<4x8x64xf32> to vector<4x1x64xf32>
    %317 = vector.shape_cast %316 : vector<4x1x64xf32> to vector<4x64xf32>
    %318 = arith.mulf %307, %299 : vector<4x64xf32>
    %319 = arith.addf %317, %318 : vector<4x64xf32>
    %320 = math.tanh %319 : vector<4x64xf32>
    %cst_98 = arith.constant 1.000000e+00 : f32
    %321 = vector.broadcast %cst_98 : f32 to vector<4x64xf32>
    %322 = arith.subf %321, %315 : vector<4x64xf32>
    %323 = arith.mulf %322, %320 : vector<4x64xf32>
    %324 = arith.mulf %315, %293 : vector<4x64xf32>
    %325 = arith.addf %323, %324 : vector<4x64xf32>
    %326 = arith.truncf %325 : vector<4x64xf32> to vector<4x64xbf16>
    %cst_99 = arith.constant dense<0.000000e+00> : vector<4x64xf32>
    %327 = tpu.matmul %326, %97, %cst_99 {dimension_numbers = #tpu.dot_dimension_numbers<[1], [0], [0], [1], [0, 0, 1, 1], [], []>} : vector<4x64xbf16>, vector<64x64xbf16>, vector<4x64xf32> -> vector<4x64xf32>
    %cst_100 = arith.constant dense<0.000000e+00> : vector<4x64xf32>
    %328 = tpu.matmul %326, %98, %cst_100 {dimension_numbers = #tpu.dot_dimension_numbers<[1], [0], [0], [1], [0, 0, 1, 1], [], []>} : vector<4x64xbf16>, vector<64x64xbf16>, vector<4x64xf32> -> vector<4x64xf32>
    %cst_101 = arith.constant dense<0.000000e+00> : vector<4x64xf32>
    %329 = tpu.matmul %326, %99, %cst_101 {dimension_numbers = #tpu.dot_dimension_numbers<[1], [0], [0], [1], [0, 0, 1, 1], [], []>} : vector<4x64xbf16>, vector<64x64xbf16>, vector<4x64xf32> -> vector<4x64xf32>
    %330 = vector.broadcast %100 : vector<1x64xf32> to vector<4x64xf32>
    %331 = arith.addf %329, %330 : vector<4x64xf32>
    %332 = vector.extract_strided_slice %84 {offsets = [0, 7, 0], sizes = [4, 1, 64], strides = [1, 1, 1]} : vector<4x8x64xf32> to vector<4x1x64xf32>
    %333 = vector.shape_cast %332 : vector<4x1x64xf32> to vector<4x64xf32>
    %334 = arith.addf %333, %327 : vector<4x64xf32>
    %335 = arith.negf %334 : vector<4x64xf32>
    %336 = math.exp %335 : vector<4x64xf32>
    %cst_102 = arith.constant 1.000000e+00 : f32
    %337 = vector.broadcast %cst_102 : f32 to vector<4x64xf32>
    %338 = arith.addf %337, %336 : vector<4x64xf32>
    %339 = arith.divf %337, %338 : vector<4x64xf32>
    %340 = vector.extract_strided_slice %90 {offsets = [0, 7, 0], sizes = [4, 1, 64], strides = [1, 1, 1]} : vector<4x8x64xf32> to vector<4x1x64xf32>
    %341 = vector.shape_cast %340 : vector<4x1x64xf32> to vector<4x64xf32>
    %342 = arith.addf %341, %328 : vector<4x64xf32>
    %343 = arith.negf %342 : vector<4x64xf32>
    %344 = math.exp %343 : vector<4x64xf32>
    %cst_103 = arith.constant 1.000000e+00 : f32
    %345 = vector.broadcast %cst_103 : f32 to vector<4x64xf32>
    %346 = arith.addf %345, %344 : vector<4x64xf32>
    %347 = arith.divf %345, %346 : vector<4x64xf32>
    %348 = vector.extract_strided_slice %96 {offsets = [0, 7, 0], sizes = [4, 1, 64], strides = [1, 1, 1]} : vector<4x8x64xf32> to vector<4x1x64xf32>
    %349 = vector.shape_cast %348 : vector<4x1x64xf32> to vector<4x64xf32>
    %350 = arith.mulf %339, %331 : vector<4x64xf32>
    %351 = arith.addf %349, %350 : vector<4x64xf32>
    %352 = math.tanh %351 : vector<4x64xf32>
    %cst_104 = arith.constant 1.000000e+00 : f32
    %353 = vector.broadcast %cst_104 : f32 to vector<4x64xf32>
    %354 = arith.subf %353, %347 : vector<4x64xf32>
    %355 = arith.mulf %354, %352 : vector<4x64xf32>
    %356 = arith.mulf %347, %325 : vector<4x64xf32>
    %357 = arith.addf %355, %356 : vector<4x64xf32>
    %358 = arith.truncf %357 : vector<4x64xf32> to vector<4x64xbf16>
    %c0_105 = arith.constant 0 : index
    %c0_106 = arith.constant 0 : index
    %359 = vector.load %arg20[%c0_105, %c0_106] : memref<64x48xbf16, #tpu.memory_space<vmem>>, vector<64x48xbf16>
    %cst_107 = arith.constant dense<0.000000e+00> : vector<4x48xf32>
    %360 = tpu.matmul %358, %359, %cst_107 {dimension_numbers = #tpu.dot_dimension_numbers<[1], [0], [0], [1], [0, 0, 1, 1], [], []>} : vector<4x64xbf16>, vector<64x48xbf16>, vector<4x48xf32> -> vector<4x48xf32>
    %c0_108 = arith.constant 0 : index
    %c0_109 = arith.constant 0 : index
    %361 = vector.load %arg27[%c0_108, %c0_109] : memref<16x4xf32, #tpu.memory_space<vmem>>, vector<16x4xf32>
    %cst_110 = arith.constant dense<0.000000e+00> : vector<16x48xf32>
    %362 = tpu.matmul %361, %360, %cst_110 {dimension_numbers = #tpu.dot_dimension_numbers<[1], [0], [0], [1], [0, 0, 1, 1], [], []>} : vector<16x4xf32>, vector<4x48xf32>, vector<16x48xf32> -> vector<16x48xf32>
    %363 = math.absf %362 : vector<16x48xf32>
    %c0_111 = arith.constant 0 : index
    %c0_112 = arith.constant 0 : index
    %364 = vector.load %arg26[%c0_111, %c0_112] : memref<48x3xf32, #tpu.memory_space<vmem>>, vector<48x3xf32>
    %cst_113 = arith.constant dense<0.000000e+00> : vector<16x3xf32>
    %365 = tpu.matmul %363, %364, %cst_113 {dimension_numbers = #tpu.dot_dimension_numbers<[1], [0], [0], [1], [0, 0, 1, 1], [], []>} : vector<16x48xf32>, vector<48x3xf32>, vector<16x3xf32> -> vector<16x3xf32>
    %c0_114 = arith.constant 0 : index
    %c0_115 = arith.constant 0 : index
    %366 = vector.load %arg28[%c0_114, %c0_115] : memref<4x16xf32, #tpu.memory_space<vmem>>, vector<4x16xf32>
    %cst_116 = arith.constant 0.000000e+00 : f32
    %367 = vector.broadcast %cst_116 : f32 to vector<16x3xf32>
    %368 = arith.subf %367, %365 : vector<16x3xf32>
    %369 = math.exp %368 : vector<16x3xf32>
    %cst_117 = arith.constant dense<0.000000e+00> : vector<4x3xf32>
    %370 = tpu.matmul %366, %369, %cst_117 {dimension_numbers = #tpu.dot_dimension_numbers<[1], [0], [0], [1], [0, 0, 1, 1], [], []>} : vector<4x16xf32>, vector<16x3xf32>, vector<4x3xf32> -> vector<4x3xf32>
    %cst_118 = arith.constant 1.000000e+00 : f32
    %371 = vector.broadcast %cst_118 : f32 to vector<4x3xf32>
    %372 = arith.subf %370, %371 : vector<4x3xf32>
    %c0_119 = arith.constant 0 : index
    %c0_120 = arith.constant 0 : index
    %373 = vector.load %arg21[%c0_119, %c0_120] : memref<64x32xbf16, #tpu.memory_space<vmem>>, vector<64x32xbf16>
    %cst_121 = arith.constant dense<0.000000e+00> : vector<4x32xf32>
    %374 = tpu.matmul %358, %373, %cst_121 {dimension_numbers = #tpu.dot_dimension_numbers<[1], [0], [0], [1], [0, 0, 1, 1], [], []>} : vector<4x64xbf16>, vector<64x32xbf16>, vector<4x32xf32> -> vector<4x32xf32>
    %c0_122 = arith.constant 0 : index
    %c0_123 = arith.constant 0 : index
    %375 = vector.load %arg23[%c0_122, %c0_123] : memref<1x32xf32, #tpu.memory_space<vmem>>, vector<1x32xf32>
    %376 = vector.broadcast %375 : vector<1x32xf32> to vector<4x32xf32>
    %377 = arith.addf %374, %376 : vector<4x32xf32>
    %c0_124 = arith.constant 0 : index
    %c0_125 = arith.constant 0 : index
    %378 = vector.load %arg22[%c0_124, %c0_125] : memref<3x32xf32, #tpu.memory_space<vmem>>, vector<3x32xf32>
    %379 = vector.extract_strided_slice %372 {offsets = [0, 0], sizes = [4, 1], strides = [1, 1]} : vector<4x3xf32> to vector<4x1xf32>
    %380 = vector.extract_strided_slice %378 {offsets = [0, 0], sizes = [1, 32], strides = [1, 1]} : vector<3x32xf32> to vector<1x32xf32>
    %381 = vector.broadcast %379 : vector<4x1xf32> to vector<4x32xf32>
    %382 = vector.broadcast %380 : vector<1x32xf32> to vector<4x32xf32>
    %383 = arith.mulf %381, %382 : vector<4x32xf32>
    %384 = arith.addf %377, %383 : vector<4x32xf32>
    %385 = vector.extract_strided_slice %372 {offsets = [0, 1], sizes = [4, 1], strides = [1, 1]} : vector<4x3xf32> to vector<4x1xf32>
    %386 = vector.extract_strided_slice %378 {offsets = [1, 0], sizes = [1, 32], strides = [1, 1]} : vector<3x32xf32> to vector<1x32xf32>
    %387 = vector.broadcast %385 : vector<4x1xf32> to vector<4x32xf32>
    %388 = vector.broadcast %386 : vector<1x32xf32> to vector<4x32xf32>
    %389 = arith.mulf %387, %388 : vector<4x32xf32>
    %390 = arith.addf %384, %389 : vector<4x32xf32>
    %391 = vector.extract_strided_slice %372 {offsets = [0, 2], sizes = [4, 1], strides = [1, 1]} : vector<4x3xf32> to vector<4x1xf32>
    %392 = vector.extract_strided_slice %378 {offsets = [2, 0], sizes = [1, 32], strides = [1, 1]} : vector<3x32xf32> to vector<1x32xf32>
    %393 = vector.broadcast %391 : vector<4x1xf32> to vector<4x32xf32>
    %394 = vector.broadcast %392 : vector<1x32xf32> to vector<4x32xf32>
    %395 = arith.mulf %393, %394 : vector<4x32xf32>
    %396 = arith.addf %390, %395 : vector<4x32xf32>
    %cst_126 = arith.constant 0.000000e+00 : f32
    %397 = vector.broadcast %cst_126 : f32 to vector<4x32xf32>
    %398 = arith.cmpf oge, %396, %397 : vector<4x32xf32>
    %cst_127 = arith.constant 0.00999999977 : f32
    %399 = vector.broadcast %cst_127 : f32 to vector<4x32xf32>
    %400 = arith.mulf %399, %396 : vector<4x32xf32>
    %401 = arith.select %398, %396, %400 : vector<4x32xi1>, vector<4x32xf32>
    %c0_128 = arith.constant 0 : index
    %c0_129 = arith.constant 0 : index
    %402 = vector.load %arg24[%c0_128, %c0_129] : memref<1x32xf32, #tpu.memory_space<vmem>>, vector<1x32xf32>
    %403 = vector.broadcast %402 : vector<1x32xf32> to vector<4x32xf32>
    %404 = arith.mulf %401, %403 : vector<4x32xf32>
    %cst_130 = arith.constant dense<0.000000e+00> : vector<4xf32>
    %405 = vector.multi_reduction <add>, %404, %cst_130 [1] : vector<4x32xf32> to vector<4xf32>
    %406 = vector.shape_cast %405 : vector<4xf32> to vector<4x1xf32>
    %c0_131 = arith.constant 0 : index
    %c0_132 = arith.constant 0 : index
    %407 = vector.load %arg25[%c0_131, %c0_132] : memref<1x1xf32, #tpu.memory_space<vmem>>, vector<1x1xf32>
    %408 = vector.broadcast %407 : vector<1x1xf32> to vector<4x1xf32>
    %409 = arith.addf %406, %408 : vector<4x1xf32>
    %410 = arith.negf %409 : vector<4x1xf32>
    %411 = math.exp %410 : vector<4x1xf32>
    %cst_133 = arith.constant 1.000000e+00 : f32
    %412 = vector.broadcast %cst_133 : f32 to vector<4x1xf32>
    %413 = arith.addf %412, %411 : vector<4x1xf32>
    %414 = arith.divf %412, %413 : vector<4x1xf32>
    %c0_134 = arith.constant 0 : index
    %c0_135 = arith.constant 0 : index
    %415 = vector.load %arg29[%c0_134, %c0_135] : memref<4x1xf32, #tpu.memory_space<vmem>>, vector<4x1xf32>
    tpu.vector_store %arg29[%c0_134, %c0_135], %414 {strides = array<i32>} : memref<4x1xf32, #tpu.memory_space<vmem>>, vector<4x1xf32>,
    return
  }
  func.func @transform_0(%arg0: i32) -> (i32, i32, i32) {
    %c0_i32 = arith.constant 0 : i32
    %c0_i32_0 = arith.constant 0 : i32
    %c0_i32_1 = arith.constant 0 : i32
    %c0_i32_2 = arith.constant 0 : i32
    return %c0_i32, %c0_i32_0, %c0_i32_1 : i32, i32, i32
  }
  func.func @transform_1(%arg0: i32) -> (i32, i32) {
    %c0_i32 = arith.constant 0 : i32
    %c0_i32_0 = arith.constant 0 : i32
    %c0_i32_1 = arith.constant 0 : i32
    return %c0_i32, %c0_i32_0 : i32, i32
  }
  func.func @transform_2(%arg0: i32) -> (i32, i32) {
    %c0_i32 = arith.constant 0 : i32
    %c0_i32_0 = arith.constant 0 : i32
    %c0_i32_1 = arith.constant 0 : i32
    return %c0_i32, %c0_i32_0 : i32, i32
  }
  func.func @transform_3(%arg0: i32) -> (i32, i32) {
    %c0_i32 = arith.constant 0 : i32
    %c0_i32_0 = arith.constant 0 : i32
    %c0_i32_1 = arith.constant 0 : i32
    return %c0_i32, %c0_i32_0 : i32, i32
  }
  func.func @transform_4(%arg0: i32) -> (i32, i32) {
    %c0_i32 = arith.constant 0 : i32
    %c0_i32_0 = arith.constant 0 : i32
    %c0_i32_1 = arith.constant 0 : i32
    return %c0_i32, %c0_i32_0 : i32, i32
  }
  func.func @transform_5(%arg0: i32) -> (i32, i32) {
    %c0_i32 = arith.constant 0 : i32
    %c0_i32_0 = arith.constant 0 : i32
    %c0_i32_1 = arith.constant 0 : i32
    return %c0_i32, %c0_i32_0 : i32, i32
  }
  func.func @transform_6(%arg0: i32) -> (i32, i32) {
    %c0_i32 = arith.constant 0 : i32
    %c0_i32_0 = arith.constant 0 : i32
    %c0_i32_1 = arith.constant 0 : i32
    return %c0_i32, %c0_i32_0 : i32, i32
  }
  func.func @transform_7(%arg0: i32) -> (i32, i32) {
    %c0_i32 = arith.constant 0 : i32
    %c0_i32_0 = arith.constant 0 : i32
    %c0_i32_1 = arith.constant 0 : i32
    return %c0_i32, %c0_i32_0 : i32, i32
  }
  func.func @transform_8(%arg0: i32) -> (i32, i32) {
    %c0_i32 = arith.constant 0 : i32
    %c0_i32_0 = arith.constant 0 : i32
    %c0_i32_1 = arith.constant 0 : i32
    return %c0_i32, %c0_i32_0 : i32, i32
  }
  func.func @transform_9(%arg0: i32) -> (i32, i32) {
    %c0_i32 = arith.constant 0 : i32
    %c0_i32_0 = arith.constant 0 : i32
    %c0_i32_1 = arith.constant 0 : i32
    return %c0_i32, %c0_i32_0 : i32, i32
  }
  func.func @transform_10(%arg0: i32) -> (i32, i32) {
    %c0_i32 = arith.constant 0 : i32
    %c0_i32_0 = arith.constant 0 : i32
    %c0_i32_1 = arith.constant 0 : i32
    return %c0_i32, %c0_i32_0 : i32, i32
  }
  func.func @transform_11(%arg0: i32) -> (i32, i32) {
    %c0_i32 = arith.constant 0 : i32
    %c0_i32_0 = arith.constant 0 : i32
    %c0_i32_1 = arith.constant 0 : i32
    return %c0_i32, %c0_i32_0 : i32, i32
  }
  func.func @transform_12(%arg0: i32) -> (i32, i32) {
    %c0_i32 = arith.constant 0 : i32
    %c0_i32_0 = arith.constant 0 : i32
    %c0_i32_1 = arith.constant 0 : i32
    return %c0_i32, %c0_i32_0 : i32, i32
  }
  func.func @transform_13(%arg0: i32) -> (i32, i32) {
    %c0_i32 = arith.constant 0 : i32
    %c0_i32_0 = arith.constant 0 : i32
    %c0_i32_1 = arith.constant 0 : i32
    return %c0_i32, %c0_i32_0 : i32, i32
  }
  func.func @transform_14(%arg0: i32) -> (i32, i32) {
    %c0_i32 = arith.constant 0 : i32
    %c0_i32_0 = arith.constant 0 : i32
    %c0_i32_1 = arith.constant 0 : i32
    return %c0_i32, %c0_i32_0 : i32, i32
  }
  func.func @transform_15(%arg0: i32) -> (i32, i32) {
    %c0_i32 = arith.constant 0 : i32
    %c0_i32_0 = arith.constant 0 : i32
    %c0_i32_1 = arith.constant 0 : i32
    return %c0_i32, %c0_i32_0 : i32, i32
  }
  func.func @transform_16(%arg0: i32) -> (i32, i32) {
    %c0_i32 = arith.constant 0 : i32
    %c0_i32_0 = arith.constant 0 : i32
    %c0_i32_1 = arith.constant 0 : i32
    return %c0_i32, %c0_i32_0 : i32, i32
  }
  func.func @transform_17(%arg0: i32) -> (i32, i32) {
    %c0_i32 = arith.constant 0 : i32
    %c0_i32_0 = arith.constant 0 : i32
    %c0_i32_1 = arith.constant 0 : i32
    return %c0_i32, %c0_i32_0 : i32, i32
  }
  func.func @transform_18(%arg0: i32) -> (i32, i32) {
    %c0_i32 = arith.constant 0 : i32
    %c0_i32_0 = arith.constant 0 : i32
    %c0_i32_1 = arith.constant 0 : i32
    return %c0_i32, %c0_i32_0 : i32, i32
  }
  func.func @transform_19(%arg0: i32) -> (i32, i32) {
    %c0_i32 = arith.constant 0 : i32
    %c0_i32_0 = arith.constant 0 : i32
    %c0_i32_1 = arith.constant 0 : i32
    return %c0_i32, %c0_i32_0 : i32, i32
  }
  func.func @transform_20(%arg0: i32) -> (i32, i32) {
    %c0_i32 = arith.constant 0 : i32
    %c0_i32_0 = arith.constant 0 : i32
    %c0_i32_1 = arith.constant 0 : i32
    return %c0_i32, %c0_i32_0 : i32, i32
  }
  func.func @transform_21(%arg0: i32) -> (i32, i32) {
    %c0_i32 = arith.constant 0 : i32
    %c0_i32_0 = arith.constant 0 : i32
    %c0_i32_1 = arith.constant 0 : i32
    return %c0_i32, %c0_i32_0 : i32, i32
  }
  func.func @transform_22(%arg0: i32) -> (i32, i32) {
    %c0_i32 = arith.constant 0 : i32
    %c0_i32_0 = arith.constant 0 : i32
    %c0_i32_1 = arith.constant 0 : i32
    return %c0_i32, %c0_i32_0 : i32, i32
  }
  func.func @transform_23(%arg0: i32) -> (i32, i32) {
    %c0_i32 = arith.constant 0 : i32
    %c0_i32_0 = arith.constant 0 : i32
    %c0_i32_1 = arith.constant 0 : i32
    return %c0_i32, %c0_i32_0 : i32, i32
  }
  func.func @transform_24(%arg0: i32) -> (i32, i32) {
    %c0_i32 = arith.constant 0 : i32
    %c0_i32_0 = arith.constant 0 : i32
    %c0_i32_1 = arith.constant 0 : i32
    return %c0_i32, %c0_i32_0 : i32, i32
  }
  func.func @transform_25(%arg0: i32) -> (i32, i32) {
    %c0_i32 = arith.constant 0 : i32
    %c0_i32_0 = arith.constant 0 : i32
    %c0_i32_1 = arith.constant 0 : i32
    return %c0_i32, %c0_i32_0 : i32, i32
  }
  func.func @transform_26(%arg0: i32) -> (i32, i32) {
    %c0_i32 = arith.constant 0 : i32
    %c0_i32_0 = arith.constant 0 : i32
    %c0_i32_1 = arith.constant 0 : i32
    return %c0_i32, %c0_i32_0 : i32, i32
  }
  func.func @transform_27(%arg0: i32) -> (i32, i32) {
    %c0_i32 = arith.constant 0 : i32
    %c0_i32_0 = arith.constant 0 : i32
    %c0_i32_1 = arith.constant 0 : i32
    return %c0_i32, %c0_i32_0 : i32, i32
  }
  func.func @transform_28(%arg0: i32) -> (i32, i32) {
    %c0_i32 = arith.constant 0 : i32
    %c0_i32_0 = arith.constant 0 : i32
    %c0_i32_1 = arith.constant 0 : i32
    return %c0_i32, %c0_i32_0 : i32, i32
  }
}

</mosaic_0001>

<llo_original>
// kernel: rnn_discriminator_forward.1
$region0: #{rnn_discriminator_forward.1}
  #allocation0 [shape = 'u32[]', space=smem, size = 0x4, offset = 0x4, fixed_abs, tag = 'smem constant byte address 0x4 - core index']
  #allocation1 [shape = 'u32[144,128]{1,0:T(1,128)}', space=vmem, size = 0x12000, scoped, tag = 'internal scratch']
  #allocation2 [shape = 'f32[1,1]{1,0:T(1,128)S(1)}', space=vmem, size = 0x200, scoped, tag = 'scoped memory for rnn_discriminator_forward.1']
  %s0 = inlined_call_operand.vmem [shape: f32[4,8,8], index: 0, kind: input, shape index: {}]
  %s1 = inlined_call_operand.vmem [shape: bf16[24,256], index: 1, kind: input, shape index: {}]
  %s2 = inlined_call_operand.hbm [shape: f32[1,256], index: 2, kind: input, shape index: {}]
  %s3 = inlined_call_operand.vmem [shape: bf16[768,128], index: 3, kind: input, shape index: {}]
  %s4 = inlined_call_operand.hbm [shape: f32[1,128], index: 4, kind: input, shape index: {}]
  %s5 = inlined_call_operand.vmem [shape: bf16[384,64], index: 5, kind: input, shape index: {}]
  %s6 = inlined_call_operand.hbm [shape: f32[1,64], index: 6, kind: input, shape index: {}]
  %s7 = inlined_call_operand.vmem [shape: bf16[192,32], index: 7, kind: input, shape index: {}]
  %s8 = inlined_call_operand.hbm [shape: f32[1,32], index: 8, kind: input, shape index: {}]
  %s9 = inlined_call_operand.hbm [shape: bf16[32,64], index: 9, kind: input, shape index: {}]
  %s10 = inlined_call_operand.hbm [shape: bf16[32,64], index: 10, kind: input, shape index: {}]
  %s11 = inlined_call_operand.hbm [shape: bf16[32,64], index: 11, kind: input, shape index: {}]
  %s12 = inlined_call_operand.vmem [shape: bf16[64,64], index: 12, kind: input, shape index: {}]
  %s13 = inlined_call_operand.vmem [shape: bf16[64,64], index: 13, kind: input, shape index: {}]
  %s14 = inlined_call_operand.vmem [shape: bf16[64,64], index: 14, kind: input, shape index: {}]
  %s15 = inlined_call_operand.hbm [shape: f32[1,64], index: 15, kind: input, shape index: {}]
  %s16 = inlined_call_operand.hbm [shape: f32[1,64], index: 16, kind: input, shape index: {}]
  %s17 = inlined_call_operand.hbm [shape: f32[1,64], index: 17, kind: input, shape index: {}]
  %s18 = inlined_call_operand.hbm [shape: f32[1,64], index: 18, kind: input, shape index: {}]
  %s19 = inlined_call_operand.vmem [shape: bf16[64,48], index: 19, kind: input, shape index: {}]
  %s20 = inlined_call_operand.vmem [shape: bf16[64,32], index: 20, kind: input, shape index: {}]
  %s21 = inlined_call_operand.hbm [shape: f32[3,32], index: 21, kind: input, shape index: {}]
  %s22 = inlined_call_operand.vmem [shape: f32[1,32], index: 22, kind: input, shape index: {}]
  %s23 = inlined_call_operand.vmem [shape: f32[1,32], index: 23, kind: input, shape index: {}]
  %s24 = inlined_call_operand.<no memory space> [shape: f32[1,1], index: 24, kind: input, shape index: {}]
  %s25 = inlined_call_operand.vmem [shape: f32[48,3], index: 25, kind: input, shape index: {}]
  %s26 = inlined_call_operand.vmem [shape: f32[16,4], index: 26, kind: input, shape index: {}]
  %s27 = inlined_call_operand.vmem [shape: f32[4,16], index: 27, kind: input, shape index: {}]
  %s28 = inlined_call_operand.vmem [shape: f32[4,1], index: 28, kind: output, shape index: {}]
  %s29 = sld [smem:[#allocation0]]
  $region170: #{rnn_discriminator_forward.1} parent=0
    _
  %s31 = ssub.s32 1, %s29
  %s32 = scalar_select 0, %s31, %s29
  %v33 = vstv %s24
  %34 = vst [vmem:[#allocation2] sm:$0x1] %v33
  $region1: #{rnn_discriminator_forward.1} parent=0
    #allocation3 [shape = 'u8[1024]{0}', space=vmem, size = 0x400, scoped, tag = 'input window, operand 2, single buffered']
    #allocation4 [shape = 's32[1]{0}', space=sflag, size = 0x4, scoped, tag = 'scoped memory for rnn_discriminator_forward.1']
    #allocation5 [shape = 'u8[512]{0}', space=vmem, size = 0x400, scoped, tag = 'input window, operand 4, single buffered']
    #allocation6 [shape = 's32[1]{0}', space=sflag, size = 0x4, scoped, tag = 'scoped memory for rnn_discriminator_forward.1']
    #allocation7 [shape = 'u8[512]{0}', space=vmem, size = 0x400, scoped, tag = 'input window, operand 6, single buffered']
    #allocation8 [shape = 'u8[512]{0}', space=vmem, size = 0x400, scoped, tag = 'input window, operand 8, single buffered']
    #allocation9 [shape = 's32[1]{0}', space=sflag, size = 0x4, scoped, tag = 'scoped memory for rnn_discriminator_forward.1']
    #allocation10 [shape = 'u8[8192]{0}', space=vmem, size = 0x2000, scoped, tag = 'input window, operand 9, single buffered']
    #allocation11 [shape = 'u8[8192]{0}', space=vmem, size = 0x2000, scoped, tag = 'input window, operand 10, single buffered']
    #allocation12 [shape = 's32[1]{0}', space=sflag, size = 0x4, scoped, tag = 'scoped memory for rnn_discriminator_forward.1']
    #allocation13 [shape = 'u8[8192]{0}', space=vmem, size = 0x2000, scoped, tag = 'input window, operand 11, single buffered']
    #allocation14 [shape = 'u8[512]{0}', space=vmem, size = 0x400, scoped, tag = 'input window, operand 15, single buffered']
    #allocation15 [shape = 's32[1]{0}', space=sflag, size = 0x4, scoped, tag = 'scoped memory for rnn_discriminator_forward.1']
    #allocation16 [shape = 'u8[512]{0}', space=vmem, size = 0x400, scoped, tag = 'input window, operand 16, single buffered']
    #allocation17 [shape = 'u8[512]{0}', space=vmem, size = 0x400, scoped, tag = 'input window, operand 17, single buffered']
    #allocation18 [shape = 's32[1]{0}', space=sflag, size = 0x4, scoped, tag = 'scoped memory for rnn_discriminator_forward.1']
    #allocation19 [shape = 'u8[512]{0}', space=vmem, size = 0x400, scoped, tag = 'input window, operand 18, single buffered']
    #allocation20 [shape = 'u8[2048]{0}', space=vmem, size = 0x800, scoped, tag = 'input window, operand 21, single buffered']
    #allocation21 [shape = 's32[1]{0}', space=sflag, size = 0x4, scoped, tag = 'scoped memory for rnn_discriminator_forward.1']
    %35 = vsyncpa [#allocation4], 0
    %36 = vsyncpa [#allocation6], 0
    %37 = vsyncpa [#allocation9], 0
    %38 = vsyncpa [#allocation12], 0
    %39 = vsyncpa [#allocation15], 0
    %40 = vsyncpa [#allocation18], 0
    %41 = vsyncpa [#allocation21], 0
    // Predicated region
    $region2: #{rnn_discriminator_forward.1} parent=1 // pred_check
      _
    $region3: #{rnn_discriminator_forward.1} parent=1 // pred_check_branch
      %43 = sbr.rel (0) target = $region5
    $region4: #{rnn_discriminator_forward.1} parent=1 // pred_region
      _
    $region5: #{rnn_discriminator_forward.1} parent=1 // pred_fallthru
      _
    // Predicated region
    $region6: #{rnn_discriminator_forward.1} parent=1 // pred_check
      _
    $region7: #{rnn_discriminator_forward.1} parent=1 // pred_check_branch
      %45 = sbr.rel (0) target = $region9
    $region8: #{rnn_discriminator_forward.1} parent=1 // pred_region
      _
    $region9: #{rnn_discriminator_forward.1} parent=1 // pred_fallthru
      _
    // Predicated region
    $region10: #{rnn_discriminator_forward.1} parent=1 // pred_check
      _
    $region11: #{rnn_discriminator_forward.1} parent=1 // pred_check_branch
      %47 = sbr.rel (0) target = $region13
    $region12: #{rnn_discriminator_forward.1} parent=1 // pred_region
      %s49 = ssub.s32 32, 32
      %50 = vsyncadd [#allocation4], %s49
      %s52 = sshll.u32 [#allocation3], 4
      %s53 = int_to_ptr.vmem [resolvable:$true] %s52
      %55 = dma.hbm_to_vmem [thread:$0]  %s2, 32, %s53, [#allocation4]
    $region13: #{rnn_discriminator_forward.1} parent=1 // pred_fallthru
      _
    // Predicated region
    $region14: #{rnn_discriminator_forward.1} parent=1 // pred_check
      _
    $region15: #{rnn_discriminator_forward.1} parent=1 // pred_check_branch
      %57 = sbr.rel (0) target = $region17
    $region16: #{rnn_discriminator_forward.1} parent=1 // pred_region
      _
    $region17: #{rnn_discriminator_forward.1} parent=1 // pred_fallthru
      _
    // Predicated region
    $region18: #{rnn_discriminator_forward.1} parent=1 // pred_check
      _
    $region19: #{rnn_discriminator_forward.1} parent=1 // pred_check_branch
      %59 = sbr.rel (0) target = $region21
    $region20: #{rnn_discriminator_forward.1} parent=1 // pred_region
      %s61 = ssub.s32 16, 16
      %62 = vsyncadd [#allocation6], %s61
      %s64 = sshll.u32 [#allocation5], 4
      %s65 = int_to_ptr.vmem [resolvable:$true] %s64
      %67 = dma.hbm_to_vmem [thread:$0]  %s4, 16, %s65, [#allocation6]
    $region21: #{rnn_discriminator_forward.1} parent=1 // pred_fallthru
      _
    // Predicated region
    $region22: #{rnn_discriminator_forward.1} parent=1 // pred_check
      _
    $region23: #{rnn_discriminator_forward.1} parent=1 // pred_check_branch
      %69 = sbr.rel (0) target = $region25
    $region24: #{rnn_discriminator_forward.1} parent=1 // pred_region
      _
    $region25: #{rnn_discriminator_forward.1} parent=1 // pred_fallthru
      _
    // Predicated region
    $region26: #{rnn_discriminator_forward.1} parent=1 // pred_check
      _
    $region27: #{rnn_discriminator_forward.1} parent=1 // pred_check_branch
      %71 = sbr.rel (0) target = $region29
    $region28: #{rnn_discriminator_forward.1} parent=1 // pred_region
      %s73 = ssub.s32 16, 16
      %74 = vsyncadd [#allocation6], %s73
      %s76 = sshll.u32 [#allocation7], 4
      %s77 = int_to_ptr.vmem [resolvable:$true] %s76
      %79 = dma.hbm_to_vmem [thread:$0]  %s6, 16, %s77, [#allocation6]
    $region29: #{rnn_discriminator_forward.1} parent=1 // pred_fallthru
      _
    // Predicated region
    $region30: #{rnn_discriminator_forward.1} parent=1 // pred_check
      _
    $region31: #{rnn_discriminator_forward.1} parent=1 // pred_check_branch
      %81 = sbr.rel (0) target = $region33
    $region32: #{rnn_discriminator_forward.1} parent=1 // pred_region
      _
    $region33: #{rnn_discriminator_forward.1} parent=1 // pred_fallthru
      _
    // Predicated region
    $region34: #{rnn_discriminator_forward.1} parent=1 // pred_check
      _
    $region35: #{rnn_discriminator_forward.1} parent=1 // pred_check_branch
      %83 = sbr.rel (0) target = $region37
    $region36: #{rnn_discriminator_forward.1} parent=1 // pred_region
      %s85 = ssub.s32 16, 16
      %86 = vsyncadd [#allocation9], %s85
      %s88 = sshll.u32 [#allocation8], 4
      %s89 = int_to_ptr.vmem [resolvable:$true] %s88
      %91 = dma.hbm_to_vmem [thread:$0]  %s8, 16, %s89, [#allocation9]
    $region37: #{rnn_discriminator_forward.1} parent=1 // pred_fallthru
      _
    // Predicated region
    $region38: #{rnn_discriminator_forward.1} parent=1 // pred_check
      _
    $region39: #{rnn_discriminator_forward.1} parent=1 // pred_check_branch
      %93 = sbr.rel (0) target = $region41
    $region40: #{rnn_discriminator_forward.1} parent=1 // pred_region
      %s95 = ssub.s32 256, 256
      %96 = vsyncadd [#allocation9], %s95
      %s97 = sshll.u32 [#allocation10], 4
      %s98 = int_to_ptr.vmem [resolvable:$true] %s97
      %103 = dma.hbm_to_vmem [thread:$0]  %s9, 256, %s98, [#allocation9], 64, 64, 4
    $region41: #{rnn_discriminator_forward.1} parent=1 // pred_fallthru
      _
    // Predicated region
    $region42: #{rnn_discriminator_forward.1} parent=1 // pred_check
      _
    $region43: #{rnn_discriminator_forward.1} parent=1 // pred_check_branch
      %105 = sbr.rel (0) target = $region45
    $region44: #{rnn_discriminator_forward.1} parent=1 // pred_region
      %s107 = ssub.s32 256, 256
      %108 = vsyncadd [#allocation12], %s107
      %s109 = sshll.u32 [#allocation11], 4
      %s110 = int_to_ptr.vmem [resolvable:$true] %s109
      %115 = dma.hbm_to_vmem [thread:$0]  %s10, 256, %s110, [#allocation12], 64, 64, 4
    $region45: #{rnn_discriminator_forward.1} parent=1 // pred_fallthru
      _
    // Predicated region
    $region46: #{rnn_discriminator_forward.1} parent=1 // pred_check
      _
    $region47: #{rnn_discriminator_forward.1} parent=1 // pred_check_branch
      %117 = sbr.rel (0) target = $region49
    $region48: #{rnn_discriminator_forward.1} parent=1 // pred_region
      %s119 = ssub.s32 256, 256
      %120 = vsyncadd [#allocation12], %s119
      %s121 = sshll.u32 [#allocation13], 4
      %s122 = int_to_ptr.vmem [resolvable:$true] %s121
      %127 = dma.hbm_to_vmem [thread:$0]  %s11, 256, %s122, [#allocation12], 64, 64, 4
    $region49: #{rnn_discriminator_forward.1} parent=1 // pred_fallthru
      _
    // Predicated region
    $region50: #{rnn_discriminator_forward.1} parent=1 // pred_check
      _
    $region51: #{rnn_discriminator_forward.1} parent=1 // pred_check_branch
      %129 = sbr.rel (0) target = $region53
    $region52: #{rnn_discriminator_forward.1} parent=1 // pred_region
      _
    $region53: #{rnn_discriminator_forward.1} parent=1 // pred_fallthru
      _
    // Predicated region
    $region54: #{rnn_discriminator_forward.1} parent=1 // pred_check
      _
    $region55: #{rnn_discriminator_forward.1} parent=1 // pred_check_branch
      %131 = sbr.rel (0) target = $region57
    $region56: #{rnn_discriminator_forward.1} parent=1 // pred_region
      _
    $region57: #{rnn_discriminator_forward.1} parent=1 // pred_fallthru
      _
    // Predicated region
    $region58: #{rnn_discriminator_forward.1} parent=1 // pred_check
      _
    $region59: #{rnn_discriminator_forward.1} parent=1 // pred_check_branch
      %133 = sbr.rel (0) target = $region61
    $region60: #{rnn_discriminator_forward.1} parent=1 // pred_region
      _
    $region61: #{rnn_discriminator_forward.1} parent=1 // pred_fallthru
      _
    // Predicated region
    $region62: #{rnn_discriminator_forward.1} parent=1 // pred_check
      _
    $region63: #{rnn_discriminator_forward.1} parent=1 // pred_check_branch
      %135 = sbr.rel (0) target = $region65
    $region64: #{rnn_discriminator_forward.1} parent=1 // pred_region
      %s137 = ssub.s32 16, 16
      %138 = vsyncadd [#allocation15], %s137
      %s140 = sshll.u32 [#allocation14], 4
      %s141 = int_to_ptr.vmem [resolvable:$true] %s140
      %143 = dma.hbm_to_vmem [thread:$0]  %s15, 16, %s141, [#allocation15]
    $region65: #{rnn_discriminator_forward.1} parent=1 // pred_fallthru
      _
    // Predicated region
    $region66: #{rnn_discriminator_forward.1} parent=1 // pred_check
      _
    $region67: #{rnn_discriminator_forward.1} parent=1 // pred_check_branch
      %145 = sbr.rel (0) target = $region69
    $region68: #{rnn_discriminator_forward.1} parent=1 // pred_region
      %s147 = ssub.s32 16, 16
      %148 = vsyncadd [#allocation15], %s147
      %s150 = sshll.u32 [#allocation16], 4
      %s151 = int_to_ptr.vmem [resolvable:$true] %s150
      %153 = dma.hbm_to_vmem [thread:$0]  %s16, 16, %s151, [#allocation15]
    $region69: #{rnn_discriminator_forward.1} parent=1 // pred_fallthru
      _
    // Predicated region
    $region70: #{rnn_discriminator_forward.1} parent=1 // pred_check
      _
    $region71: #{rnn_discriminator_forward.1} parent=1 // pred_check_branch
      %155 = sbr.rel (0) target = $region73
    $region72: #{rnn_discriminator_forward.1} parent=1 // pred_region
      %s157 = ssub.s32 16, 16
      %158 = vsyncadd [#allocation18], %s157
      %s160 = sshll.u32 [#allocation17], 4
      %s161 = int_to_ptr.vmem [resolvable:$true] %s160
      %163 = dma.hbm_to_vmem [thread:$0]  %s17, 16, %s161, [#allocation18]
    $region73: #{rnn_discriminator_forward.1} parent=1 // pred_fallthru
      _
    // Predicated region
    $region74: #{rnn_discriminator_forward.1} parent=1 // pred_check
      _
    $region75: #{rnn_discriminator_forward.1} parent=1 // pred_check_branch
      %165 = sbr.rel (0) target = $region77
    $region76: #{rnn_discriminator_forward.1} parent=1 // pred_region
      %s167 = ssub.s32 16, 16
      %168 = vsyncadd [#allocation18], %s167
      %s170 = sshll.u32 [#allocation19], 4
      %s171 = int_to_ptr.vmem [resolvable:$true] %s170
      %173 = dma.hbm_to_vmem [thread:$0]  %s18, 16, %s171, [#allocation18]
    $region77: #{rnn_discriminator_forward.1} parent=1 // pred_fallthru
      _
    // Predicated region
    $region78: #{rnn_discriminator_forward.1} parent=1 // pred_check
      _
    $region79: #{rnn_discriminator_forward.1} parent=1 // pred_check_branch
      %175 = sbr.rel (0) target = $region81
    $region80: #{rnn_discriminator_forward.1} parent=1 // pred_region
      _
    $region81: #{rnn_discriminator_forward.1} parent=1 // pred_fallthru
      _
    // Predicated region
    $region82: #{rnn_discriminator_forward.1} parent=1 // pred_check
      _
    $region83: #{rnn_discriminator_forward.1} parent=1 // pred_check_branch
      %177 = sbr.rel (0) target = $region85
    $region84: #{rnn_discriminator_forward.1} parent=1 // pred_region
      _
    $region85: #{rnn_discriminator_forward.1} parent=1 // pred_fallthru
      _
    // Predicated region
    $region86: #{rnn_discriminator_forward.1} parent=1 // pred_check
      _
    $region87: #{rnn_discriminator_forward.1} parent=1 // pred_check_branch
      %179 = sbr.rel (0) target = $region89
    $region88: #{rnn_discriminator_forward.1} parent=1 // pred_region
      %s181 = ssub.s32 64, 64
      %182 = vsyncadd [#allocation21], %s181
      %s184 = sshll.u32 [#allocation20], 4
      %s185 = int_to_ptr.vmem [resolvable:$true] %s184
      %187 = dma.hbm_to_vmem [thread:$0]  %s21, 64, %s185, [#allocation21]
    $region89: #{rnn_discriminator_forward.1} parent=1 // pred_fallthru
      _
    // Predicated region
    $region90: #{rnn_discriminator_forward.1} parent=1 // pred_check
      _
    $region91: #{rnn_discriminator_forward.1} parent=1 // pred_check_branch
      %189 = sbr.rel (0) target = $region93
    $region92: #{rnn_discriminator_forward.1} parent=1 // pred_region
      _
    $region93: #{rnn_discriminator_forward.1} parent=1 // pred_fallthru
      _
    // Predicated region
    $region94: #{rnn_discriminator_forward.1} parent=1 // pred_check
      _
    $region95: #{rnn_discriminator_forward.1} parent=1 // pred_check_branch
      %191 = sbr.rel (0) target = $region97
    $region96: #{rnn_discriminator_forward.1} parent=1 // pred_region
      _
    $region97: #{rnn_discriminator_forward.1} parent=1 // pred_fallthru
      _
    // Predicated region
    $region98: #{rnn_discriminator_forward.1} parent=1 // pred_check
      _
    $region99: #{rnn_discriminator_forward.1} parent=1 // pred_check_branch
      %193 = sbr.rel (0) target = $region101
    $region100: #{rnn_discriminator_forward.1} parent=1 // pred_region
      _
    $region101: #{rnn_discriminator_forward.1} parent=1 // pred_fallthru
      _
    // Predicated region
    $region102: #{rnn_discriminator_forward.1} parent=1 // pred_check
      _
    $region103: #{rnn_discriminator_forward.1} parent=1 // pred_check_branch
      %195 = sbr.rel (0) target = $region105
    $region104: #{rnn_discriminator_forward.1} parent=1 // pred_region
      _
    $region105: #{rnn_discriminator_forward.1} parent=1 // pred_fallthru
      _
    // Predicated region
    $region106: #{rnn_discriminator_forward.1} parent=1 // pred_check
      _
    $region107: #{rnn_discriminator_forward.1} parent=1 // pred_check_branch
      %197 = sbr.rel (0) target = $region109
    $region108: #{rnn_discriminator_forward.1} parent=1 // pred_region
      _
    $region109: #{rnn_discriminator_forward.1} parent=1 // pred_fallthru
      _
    // Predicated region
    $region110: #{rnn_discriminator_forward.1} parent=1 // pred_check
      _
    $region111: #{rnn_discriminator_forward.1} parent=1 // pred_check_branch
      %199 = sbr.rel (0) target = $region113
    $region112: #{rnn_discriminator_forward.1} parent=1 // pred_region
      _
    $region113: #{rnn_discriminator_forward.1} parent=1 // pred_fallthru
      _
    // Predicated region
    $region114: #{rnn_discriminator_forward.1} parent=1 // pred_check
      _
    $region115: #{rnn_discriminator_forward.1} parent=1 // pred_check_branch
      %201 = sbr.rel (0) target = $region117
    $region116: #{rnn_discriminator_forward.1} parent=1 // pred_region
      %202 = dma.done [#allocation4], 32
    $region117: #{rnn_discriminator_forward.1} parent=1 // pred_fallthru
      _
    // Predicated region
    $region118: #{rnn_discriminator_forward.1} parent=1 // pred_check
      _
    $region119: #{rnn_discriminator_forward.1} parent=1 // pred_check_branch
      %204 = sbr.rel (0) target = $region121
    $region120: #{rnn_discriminator_forward.1} parent=1 // pred_region
      %205 = dma.done [#allocation6], 16
    $region121: #{rnn_discriminator_forward.1} parent=1 // pred_fallthru
      _
    // Predicated region
    $region122: #{rnn_discriminator_forward.1} parent=1 // pred_check
      _
    $region123: #{rnn_discriminator_forward.1} parent=1 // pred_check_branch
      %207 = sbr.rel (0) target = $region125
    $region124: #{rnn_discriminator_forward.1} parent=1 // pred_region
      %208 = dma.done [#allocation6], 16
    $region125: #{rnn_discriminator_forward.1} parent=1 // pred_fallthru
      _
    // Predicated region
    $region126: #{rnn_discriminator_forward.1} parent=1 // pred_check
      _
    $region127: #{rnn_discriminator_forward.1} parent=1 // pred_check_branch
      %210 = sbr.rel (0) target = $region129
    $region128: #{rnn_discriminator_forward.1} parent=1 // pred_region
      %211 = dma.done [#allocation9], 16
    $region129: #{rnn_discriminator_forward.1} parent=1 // pred_fallthru
      _
    // Predicated region
    $region130: #{rnn_discriminator_forward.1} parent=1 // pred_check
      _
    $region131: #{rnn_discriminator_forward.1} parent=1 // pred_check_branch
      %213 = sbr.rel (0) target = $region133
    $region132: #{rnn_discriminator_forward.1} parent=1 // pred_region
      %214 = dma.done [#allocation9], 256
    $region133: #{rnn_discriminator_forward.1} parent=1 // pred_fallthru
      _
    // Predicated region
    $region134: #{rnn_discriminator_forward.1} parent=1 // pred_check
      _
    $region135: #{rnn_discriminator_forward.1} parent=1 // pred_check_branch
      %216 = sbr.rel (0) target = $region137
    $region136: #{rnn_discriminator_forward.1} parent=1 // pred_region
      %217 = dma.done [#allocation12], 256
    $region137: #{rnn_discriminator_forward.1} parent=1 // pred_fallthru
      _
    // Predicated region
    $region138: #{rnn_discriminator_forward.1} parent=1 // pred_check
      _
    $region139: #{rnn_discriminator_forward.1} parent=1 // pred_check_branch
      %219 = sbr.rel (0) target = $region141
    $region140: #{rnn_discriminator_forward.1} parent=1 // pred_region
      %220 = dma.done [#allocation12], 256
    $region141: #{rnn_discriminator_forward.1} parent=1 // pred_fallthru
      _
    // Predicated region
    $region142: #{rnn_discriminator_forward.1} parent=1 // pred_check
      _
    $region143: #{rnn_discriminator_forward.1} parent=1 // pred_check_branch
      %222 = sbr.rel (0) target = $region145
    $region144: #{rnn_discriminator_forward.1} parent=1 // pred_region
      %223 = dma.done [#allocation15], 16
    $region145: #{rnn_discriminator_forward.1} parent=1 // pred_fallthru
      _
    // Predicated region
    $region146: #{rnn_discriminator_forward.1} parent=1 // pred_check
      _
    $region147: #{rnn_discriminator_forward.1} parent=1 // pred_check_branch
      %225 = sbr.rel (0) target = $region149
    $region148: #{rnn_discriminator_forward.1} parent=1 // pred_region
      %226 = dma.done [#allocation15], 16
    $region149: #{rnn_discriminator_forward.1} parent=1 // pred_fallthru
      _
    // Predicated region
    $region150: #{rnn_discriminator_forward.1} parent=1 // pred_check
      _
    $region151: #{rnn_discriminator_forward.1} parent=1 // pred_check_branch
      %228 = sbr.rel (0) target = $region153
    $region152: #{rnn_discriminator_forward.1} parent=1 // pred_region
      %229 = dma.done [#allocation18], 16
    $region153: #{rnn_discriminator_forward.1} parent=1 // pred_fallthru
      _
    // Predicated region
    $region154: #{rnn_discriminator_forward.1} parent=1 // pred_check
      _
    $region155: #{rnn_discriminator_forward.1} parent=1 // pred_check_branch
      %231 = sbr.rel (0) target = $region157
    $region156: #{rnn_discriminator_forward.1} parent=1 // pred_region
      %232 = dma.done [#allocation18], 16
    $region157: #{rnn_discriminator_forward.1} parent=1 // pred_fallthru
      _
    // Predicated region
    $region158: #{rnn_discriminator_forward.1} parent=1 // pred_check
      _
    $region159: #{rnn_discriminator_forward.1} parent=1 // pred_check_branch
      %234 = sbr.rel (0) target = $region161
    $region160: #{rnn_discriminator_forward.1} parent=1 // pred_region
      %235 = dma.done [#allocation21], 64
    $region161: #{rnn_discriminator_forward.1} parent=1 // pred_fallthru
      _
    %v237 = vld [vmem:[%s0] sm:$0xff]
    %v238 = vld [vmem:[%s0 + $0x8] sm:$0xff]
    %v239 = vld [vmem:[%s0 + $0x10] sm:$0xff]
    %v240 = vld [vmem:[%s0 + $0x18] sm:$0xff]
    %v245 = vrot.slane %v237, 7
    %v246 = vrot.slane %v238, 7
    %v247 = vrot.slane %v239, 7
    %v248 = vrot.slane %v240, 7
    %vm253 = vcmask 1040384
    %v254 = vsel %vm253, 0.0, %v245
    %v255 = vsel %vm253, 0.0, %v246
    %v256 = vsel %vm253, 0.0, %v247
    %v257 = vsel %vm253, 0.0, %v248
    %v258 = vrot.slane %v237, 1
    %v259 = vrot.slane %v238, 1
    %v260 = vrot.slane %v239, 1
    %v261 = vrot.slane %v240, 1
    %vm266 = vcmask 1046528
    %v267 = vsel %vm266, %v258, 0.0
    %v268 = vsel %vm266, %v259, 0.0
    %v269 = vsel %vm266, %v260, 0.0
    %v270 = vsel %vm266, %v261, 0.0
    %271 = vrot.lane.b32.xlu0 %v237, 8
    %v272 = vpop.permute.xlu0 %271
    %273 = vrot.lane.b32.xlu0 %v238, 8
    %v274 = vpop.permute.xlu0 %273
    %275 = vrot.lane.b32.xlu0 %v239, 8
    %v276 = vpop.permute.xlu0 %275
    %277 = vrot.lane.b32.xlu0 %v240, 8
    %v278 = vpop.permute.xlu0 %277
    %287 = vrot.lane.b32.xlu0 %v267, 16
    %v288 = vpop.permute.xlu0 %287
    %289 = vrot.lane.b32.xlu0 %v268, 16
    %v290 = vpop.permute.xlu0 %289
    %291 = vrot.lane.b32.xlu0 %v269, 16
    %v292 = vpop.permute.xlu0 %291
    %293 = vrot.lane.b32.xlu0 %v270, 16
    %v294 = vpop.permute.xlu0 %293
    %vm299 = vcmask 64512
    %v300 = vsel %vm299, %v254, %v272
    %v301 = vsel %vm299, %v255, %v274
    %v302 = vsel %vm299, %v256, %v276
    %v303 = vsel %vm299, %v257, %v278
    %vm304 = vcmask 130048
    %v305 = vsel %vm304, %v300, %v288
    %v306 = vsel %vm304, %v301, %v290
    %v307 = vsel %vm304, %v302, %v292
    %v308 = vsel %vm304, %v303, %v294
    %v309 = vpack.c.bf16 %v306, %v305
    %v310 = vpack.c.bf16 %v308, %v307
    %v311 = vld [vmem:[%s1] sm:$0xff]
    %v312 = vld [vmem:[%s1 + $0x8] sm:$0xff]
    %v313 = vld [vmem:[%s1 + $0x10] sm:$0xff]
    %v314 = vld [vmem:[#allocation3] sm:$0x3]
    %v316 = vlaneseq
    %v317 = vshrl.u32 %v316, 7
    %v318 = vsub.s32 0, %v317
    %v319 = vrot.slane %v314, %v318
    %v320 = vlaneseq
    %v321 = vshrl.u32 %v320, 7
    %v322 = vsub.s32 1, %v321
    %v323 = vrot.slane %v314, %v322
    %v329 = vunpack.c.l.b16 %v311
    %v330 = vunpack.c.h.b16 %v311
    %v331 = vunpack.c.l.b16 %v312
    %v332 = vunpack.c.h.b16 %v312
    %v333 = vunpack.c.l.b16 %v313
    %v334 = vunpack.c.h.b16 %v313
    %v335 = vpack.c.b16 %v331, %v329
    %v336 = vpack.c.b16 %v332, %v330
    %v337 = vpack.c.b16 %v333, %v333
    %v338 = vpack.c.b16 %v334, %v334
    %vm341 = vcmask 195584
    %v343 = vsel %vm341, %v309, 0
    %v346 = vsel %vm341, %v310, 0
    %vm348 = vcmask 1043456
    %v350 = vsel %vm348, %v337, 0
    %v353 = vsel %vm348, %v338, 0
    %355 = vmatprep.subr.bf16.mxu0 0
    %356 = vmatpush1.bf16.msra.mxu0 0
    %357 = vmatprep.subr.bf16.mxu0 0
    %358 = vmatpush1.bf16.msra.mxu0 0
    %359 = vmatprep.subr.bf16.mxu0 0
    %360 = vmatpush1.bf16.msra.mxu0 0
    %361 = vmatprep.subr.bf16.mxu0 0
    %362 = vmatpush1.bf16.msra.mxu0 0
    %363 = vmatprep.subr.bf16.mxu0 0
    %364 = vmatpush1.bf16.msra.mxu0 0
    %365 = vmatprep.subr.bf16.mxu0 0
    %366 = vmatpush1.bf16.msra.mxu0 0
    %367 = vmatprep.subr.bf16.mxu0 %v353
    %368 = vmatpush1.bf16.msra.mxu0 %v350
    %369 = vmatprep.subr.bf16.mxu0 %v336
    %370 = vmatpush1.bf16.msra.mxu0 %v335
    %371 = vmatprep.subr.bf16.mxu0 0
    %372 = vmatpush2.bf16.msra.mxu0 0
    %373 = vmatprep.subr.bf16.mxu0 0
    %374 = vmatpush2.bf16.msra.mxu0 0
    %375 = vmatprep.subr.bf16.mxu0 0
    %376 = vmatpush2.bf16.msra.mxu0 0
    %377 = vmatprep.subr.bf16.mxu0 0
    %378 = vmatpush2.bf16.msra.mxu0 0
    %379 = vmatprep.subr.bf16.mxu0 0
    %380 = vmatpush2.bf16.msra.mxu0 0
    %381 = vmatprep.subr.bf16.mxu0 0
    %382 = vmatpush2.bf16.msra.mxu0 0
    %383 = vmatprep.subr.bf16.mxu0 0
    %384 = vmatpush2.bf16.msra.mxu0 0
    %385 = vmatprep.subr.bf16.mxu0 0
    %386 = vmatpush2.bf16.msra.mxu0 0
    %387 = vmatprep.mubr.bf16.mxu0 0
    %388 = vmatmul.mubr.bf16.gmra.mxu0 %v343
    %v389 = vpop.f32.mrf.mxu0
    %v390 = vadd.f32 %v319, %v389
    %v391 = vpop.f32.mrf.mxu0
    %v392 = vadd.f32 %v323, %v391
    %v393 = vpop.f32.mrf.mxu0
    %v394 = vadd.f32 %v319, %v393
    %v395 = vpop.f32.mrf.mxu0
    %v396 = vadd.f32 %v323, %v395
    %397 = vmatprep.mubr.bf16.mxu0 0
    %398 = vmatmul.mubr.bf16.gmra.mxu0 %v346
    %v399 = vpop.f32.mrf.mxu0
    %v400 = vadd.f32 %v319, %v399
    %v401 = vpop.f32.mrf.mxu0
    %v402 = vadd.f32 %v323, %v401
    %v403 = vpop.f32.mrf.mxu0
    %v404 = vadd.f32 %v319, %v403
    %v405 = vpop.f32.mrf.mxu0
    %v406 = vadd.f32 %v323, %v405
    %407 = vdwg.mxu0
    %vm408 = vcmp.ge.f32.partialorder %v390, 0.0
    %vm409 = vcmp.ge.f32.partialorder %v392, 0.0
    %vm410 = vcmp.ge.f32.partialorder %v394, 0.0
    %vm411 = vcmp.ge.f32.partialorder %v396, 0.0
    %vm412 = vcmp.ge.f32.partialorder %v400, 0.0
    %vm413 = vcmp.ge.f32.partialorder %v402, 0.0
    %vm414 = vcmp.ge.f32.partialorder %v404, 0.0
    %vm415 = vcmp.ge.f32.partialorder %v406, 0.0
    %v416 = vmul.f32 %v390, 0.01
    %v417 = vmul.f32 %v392, 0.01
    %v418 = vmul.f32 %v394, 0.01
    %v419 = vmul.f32 %v396, 0.01
    %v420 = vmul.f32 %v400, 0.01
    %v421 = vmul.f32 %v402, 0.01
    %v422 = vmul.f32 %v404, 0.01
    %v423 = vmul.f32 %v406, 0.01
    %v424 = vsel %vm408, %v390, %v416
    %v425 = vsel %vm409, %v392, %v417
    %v426 = vsel %vm410, %v394, %v418
    %v427 = vsel %vm411, %v396, %v419
    %v428 = vsel %vm412, %v400, %v420
    %v429 = vsel %vm413, %v402, %v421
    %v430 = vsel %vm414, %v404, %v422
    %v431 = vsel %vm415, %v406, %v423
    %v440 = vrot.slane %v424, 7
    %v441 = vrot.slane %v425, 7
    %v442 = vrot.slane %v426, 7
    %v443 = vrot.slane %v427, 7
    %v444 = vrot.slane %v428, 7
    %v445 = vrot.slane %v429, 7
    %v446 = vrot.slane %v430, 7
    %v447 = vrot.slane %v431, 7
    %v456 = vsel %vm253, 0.0, %v440
    %v457 = vsel %vm253, 0.0, %v441
    %v458 = vsel %vm253, 0.0, %v442
    %v459 = vsel %vm253, 0.0, %v443
    %v460 = vsel %vm253, 0.0, %v444
    %v461 = vsel %vm253, 0.0, %v445
    %v462 = vsel %vm253, 0.0, %v446
    %v463 = vsel %vm253, 0.0, %v447
    %v464 = vrot.slane %v424, 1
    %v465 = vrot.slane %v425, 1
    %v466 = vrot.slane %v426, 1
    %v467 = vrot.slane %v427, 1
    %v468 = vrot.slane %v428, 1
    %v469 = vrot.slane %v429, 1
    %v470 = vrot.slane %v430, 1
    %v471 = vrot.slane %v431, 1
    %v480 = vsel %vm266, %v464, 0.0
    %v481 = vsel %vm266, %v465, 0.0
    %v482 = vsel %vm266, %v466, 0.0
    %v483 = vsel %vm266, %v467, 0.0
    %v484 = vsel %vm266, %v468, 0.0
    %v485 = vsel %vm266, %v469, 0.0
    %v486 = vsel %vm266, %v470, 0.0
    %v487 = vsel %vm266, %v471, 0.0
    %v488 = vpack.c.bf16 %v458, %v456
    %v489 = vpack.c.bf16 %v459, %v457
    %v490 = vpack.c.bf16 %v426, %v424
    %v491 = vpack.c.bf16 %v427, %v425
    %v492 = vpack.c.bf16 %v482, %v480
    %v493 = vpack.c.bf16 %v483, %v481
    %v494 = vpack.c.bf16 %v462, %v460
    %v495 = vpack.c.bf16 %v463, %v461
    %v496 = vpack.c.bf16 %v430, %v428
    %v497 = vpack.c.bf16 %v431, %v429
    %v498 = vpack.c.bf16 %v486, %v484
    %v499 = vpack.c.bf16 %v487, %v485
    %v500 = vld [vmem:[%s3] sm:$0xf]
    %v501 = vld [vmem:[%s3 + $0x4] sm:$0xf]
    %v502 = vld [vmem:[%s3 + $0x8] sm:$0xf]
    %v503 = vld [vmem:[%s3 + $0xc] sm:$0xf]
    %v504 = vld [vmem:[%s3 + $0x10] sm:$0xf]
    %v505 = vld [vmem:[%s3 + $0x14] sm:$0xf]
    %v506 = vld [vmem:[%s3 + $0x18] sm:$0xf]
    %v507 = vld [vmem:[%s3 + $0x1c] sm:$0xf]
    %v508 = vld [vmem:[%s3 + $0x20] sm:$0xf]
    %v509 = vld [vmem:[%s3 + $0x24] sm:$0xf]
    %v510 = vld [vmem:[%s3 + $0x28] sm:$0xf]
    %v511 = vld [vmem:[%s3 + $0x2c] sm:$0xf]
    %v512 = vld [vmem:[%s3 + $0x30] sm:$0xf]
    %v513 = vld [vmem:[%s3 + $0x34] sm:$0xf]
    %v514 = vld [vmem:[%s3 + $0x38] sm:$0xf]
    %v515 = vld [vmem:[%s3 + $0x3c] sm:$0xf]
    %v516 = vld [vmem:[%s3 + $0x40] sm:$0xf]
    %v517 = vld [vmem:[%s3 + $0x44] sm:$0xf]
    %v518 = vld [vmem:[%s3 + $0x48] sm:$0xf]
    %v519 = vld [vmem:[%s3 + $0x4c] sm:$0xf]
    %v520 = vld [vmem:[%s3 + $0x50] sm:$0xf]
    %v521 = vld [vmem:[%s3 + $0x54] sm:$0xf]
    %v522 = vld [vmem:[%s3 + $0x58] sm:$0xf]
    %v523 = vld [vmem:[%s3 + $0x5c] sm:$0xf]
    %v524 = vld [vmem:[%s3 + $0x60] sm:$0xf]
    %v525 = vld [vmem:[%s3 + $0x64] sm:$0xf]
    %v526 = vld [vmem:[%s3 + $0x68] sm:$0xf]
    %v527 = vld [vmem:[%s3 + $0x6c] sm:$0xf]
    %v528 = vld [vmem:[%s3 + $0x70] sm:$0xf]
    %v529 = vld [vmem:[%s3 + $0x74] sm:$0xf]
    %v530 = vld [vmem:[%s3 + $0x78] sm:$0xf]
    %v531 = vld [vmem:[%s3 + $0x7c] sm:$0xf]
    %v532 = vld [vmem:[%s3 + $0x80] sm:$0xf]
    %v533 = vld [vmem:[%s3 + $0x84] sm:$0xf]
    %v534 = vld [vmem:[%s3 + $0x88] sm:$0xf]
    %v535 = vld [vmem:[%s3 + $0x8c] sm:$0xf]
    %v536 = vld [vmem:[%s3 + $0x90] sm:$0xf]
    %v537 = vld [vmem:[%s3 + $0x94] sm:$0xf]
    %v538 = vld [vmem:[%s3 + $0x98] sm:$0xf]
    %v539 = vld [vmem:[%s3 + $0x9c] sm:$0xf]
    %v540 = vld [vmem:[%s3 + $0xa0] sm:$0xf]
    %v541 = vld [vmem:[%s3 + $0xa4] sm:$0xf]
    %v542 = vld [vmem:[%s3 + $0xa8] sm:$0xf]
    %v543 = vld [vmem:[%s3 + $0xac] sm:$0xf]
    %v544 = vld [vmem:[%s3 + $0xb0] sm:$0xf]
    %v545 = vld [vmem:[%s3 + $0xb4] sm:$0xf]
    %v546 = vld [vmem:[%s3 + $0xb8] sm:$0xf]
    %v547 = vld [vmem:[%s3 + $0xbc] sm:$0xf]
    %v548 = vld [vmem:[%s3 + $0xc0] sm:$0xf]
    %v549 = vld [vmem:[%s3 + $0xc4] sm:$0xf]
    %v550 = vld [vmem:[%s3 + $0xc8] sm:$0xf]
    %v551 = vld [vmem:[%s3 + $0xcc] sm:$0xf]
    %v552 = vld [vmem:[%s3 + $0xd0] sm:$0xf]
    %v553 = vld [vmem:[%s3 + $0xd4] sm:$0xf]
    %v554 = vld [vmem:[%s3 + $0xd8] sm:$0xf]
    %v555 = vld [vmem:[%s3 + $0xdc] sm:$0xf]
    %v556 = vld [vmem:[%s3 + $0xe0] sm:$0xf]
    %v557 = vld [vmem:[%s3 + $0xe4] sm:$0xf]
    %v558 = vld [vmem:[%s3 + $0xe8] sm:$0xf]
    %v559 = vld [vmem:[%s3 + $0xec] sm:$0xf]
    %v560 = vld [vmem:[%s3 + $0xf0] sm:$0xf]
    %v561 = vld [vmem:[%s3 + $0xf4] sm:$0xf]
    %v562 = vld [vmem:[%s3 + $0xf8] sm:$0xf]
    %v563 = vld [vmem:[%s3 + $0xfc] sm:$0xf]
    %v564 = vld [vmem:[%s3 + $0x100] sm:$0xf]
    %v565 = vld [vmem:[%s3 + $0x104] sm:$0xf]
    %v566 = vld [vmem:[%s3 + $0x108] sm:$0xf]
    %v567 = vld [vmem:[%s3 + $0x10c] sm:$0xf]
    %v568 = vld [vmem:[%s3 + $0x110] sm:$0xf]
    %v569 = vld [vmem:[%s3 + $0x114] sm:$0xf]
    %v570 = vld [vmem:[%s3 + $0x118] sm:$0xf]
    %v571 = vld [vmem:[%s3 + $0x11c] sm:$0xf]
    %v572 = vld [vmem:[%s3 + $0x120] sm:$0xf]
    %v573 = vld [vmem:[%s3 + $0x124] sm:$0xf]
    %v574 = vld [vmem:[%s3 + $0x128] sm:$0xf]
    %v575 = vld [vmem:[%s3 + $0x12c] sm:$0xf]
    %v576 = vld [vmem:[%s3 + $0x130] sm:$0xf]
    %v577 = vld [vmem:[%s3 + $0x134] sm:$0xf]
    %v578 = vld [vmem:[%s3 + $0x138] sm:$0xf]
    %v579 = vld [vmem:[%s3 + $0x13c] sm:$0xf]
    %v580 = vld [vmem:[%s3 + $0x140] sm:$0xf]
    %v581 = vld [vmem:[%s3 + $0x144] sm:$0xf]
    %v582 = vld [vmem:[%s3 + $0x148] sm:$0xf]
    %v583 = vld [vmem:[%s3 + $0x14c] sm:$0xf]
    %v584 = vld [vmem:[%s3 + $0x150] sm:$0xf]
    %v585 = vld [vmem:[%s3 + $0x154] sm:$0xf]
    %v586 = vld [vmem:[%s3 + $0x158] sm:$0xf]
    %v587 = vld [vmem:[%s3 + $0x15c] sm:$0xf]
    %v588 = vld [vmem:[%s3 + $0x160] sm:$0xf]
    %v589 = vld [vmem:[%s3 + $0x164] sm:$0xf]
    %v590 = vld [vmem:[%s3 + $0x168] sm:$0xf]
    %v591 = vld [vmem:[%s3 + $0x16c] sm:$0xf]
    %v592 = vld [vmem:[%s3 + $0x170] sm:$0xf]
    %v593 = vld [vmem:[%s3 + $0x174] sm:$0xf]
    %v594 = vld [vmem:[%s3 + $0x178] sm:$0xf]
    %v595 = vld [vmem:[%s3 + $0x17c] sm:$0xf]
    %v596 = vld [vmem:[#allocation5] sm:$0x1]
    %v598 = vlaneseq
    %v599 = vshrl.u32 %v598, 7
    %v600 = vsub.s32 0, %v599
    %v601 = vrot.slane %v596, %v600
    %v699 = vunpack.c.l.b16 %v500
    %v700 = vunpack.c.l.b16 %v501
    %v701 = vunpack.c.l.b16 %v502
    %v702 = vunpack.c.l.b16 %v503
    %v703 = vunpack.c.l.b16 %v504
    %v704 = vunpack.c.l.b16 %v505
    %v705 = vunpack.c.l.b16 %v506
    %v706 = vunpack.c.l.b16 %v507
    %v707 = vunpack.c.l.b16 %v508
    %v708 = vunpack.c.l.b16 %v509
    %v709 = vunpack.c.l.b16 %v510
    %v710 = vunpack.c.l.b16 %v511
    %v711 = vunpack.c.l.b16 %v512
    %v712 = vunpack.c.l.b16 %v513
    %v713 = vunpack.c.l.b16 %v514
    %v714 = vunpack.c.l.b16 %v515
    %v715 = vunpack.c.l.b16 %v516
    %v716 = vunpack.c.l.b16 %v517
    %v717 = vunpack.c.l.b16 %v518
    %v718 = vunpack.c.l.b16 %v519
    %v719 = vunpack.c.l.b16 %v520
    %v720 = vunpack.c.l.b16 %v521
    %v721 = vunpack.c.l.b16 %v522
    %v722 = vunpack.c.l.b16 %v523
    %v723 = vunpack.c.l.b16 %v524
    %v724 = vunpack.c.l.b16 %v525
    %v725 = vunpack.c.l.b16 %v526
    %v726 = vunpack.c.l.b16 %v527
    %v727 = vunpack.c.l.b16 %v528
    %v728 = vunpack.c.l.b16 %v529
    %v729 = vunpack.c.l.b16 %v530
    %v730 = vunpack.c.l.b16 %v531
    %v731 = vunpack.c.l.b16 %v532
    %v732 = vunpack.c.l.b16 %v533
    %v733 = vunpack.c.l.b16 %v534
    %v734 = vunpack.c.l.b16 %v535
    %v735 = vunpack.c.l.b16 %v536
    %v736 = vunpack.c.l.b16 %v537
    %v737 = vunpack.c.l.b16 %v538
    %v738 = vunpack.c.l.b16 %v539
    %v739 = vunpack.c.l.b16 %v540
    %v740 = vunpack.c.l.b16 %v541
    %v741 = vunpack.c.l.b16 %v542
    %v742 = vunpack.c.l.b16 %v543
    %v743 = vunpack.c.l.b16 %v544
    %v744 = vunpack.c.l.b16 %v545
    %v745 = vunpack.c.l.b16 %v546
    %v746 = vunpack.c.l.b16 %v547
    %v747 = vunpack.c.l.b16 %v548
    %v748 = vunpack.c.l.b16 %v549
    %v749 = vunpack.c.l.b16 %v550
    %v750 = vunpack.c.l.b16 %v551
    %v751 = vunpack.c.l.b16 %v552
    %v752 = vunpack.c.l.b16 %v553
    %v753 = vunpack.c.l.b16 %v554
    %v754 = vunpack.c.l.b16 %v555
    %v755 = vunpack.c.l.b16 %v556
    %v756 = vunpack.c.l.b16 %v557
    %v757 = vunpack.c.l.b16 %v558
    %v758 = vunpack.c.l.b16 %v559
    %v759 = vunpack.c.l.b16 %v560
    %v760 = vunpack.c.l.b16 %v561
    %v761 = vunpack.c.l.b16 %v562
    %v762 = vunpack.c.l.b16 %v563
    %v763 = vunpack.c.l.b16 %v564
    %v764 = vunpack.c.l.b16 %v565
    %v765 = vunpack.c.l.b16 %v566
    %v766 = vunpack.c.l.b16 %v567
    %v767 = vunpack.c.l.b16 %v568
    %v768 = vunpack.c.l.b16 %v569
    %v769 = vunpack.c.l.b16 %v570
    %v770 = vunpack.c.l.b16 %v571
    %v771 = vunpack.c.l.b16 %v572
    %v772 = vunpack.c.l.b16 %v573
    %v773 = vunpack.c.l.b16 %v574
    %v774 = vunpack.c.l.b16 %v575
    %v775 = vunpack.c.l.b16 %v576
    %v776 = vunpack.c.l.b16 %v577
    %v777 = vunpack.c.l.b16 %v578
    %v778 = vunpack.c.l.b16 %v579
    %v779 = vunpack.c.l.b16 %v580
    %v780 = vunpack.c.l.b16 %v581
    %v781 = vunpack.c.l.b16 %v582
    %v782 = vunpack.c.l.b16 %v583
    %v783 = vunpack.c.l.b16 %v584
    %v784 = vunpack.c.l.b16 %v585
    %v785 = vunpack.c.l.b16 %v586
    %v786 = vunpack.c.l.b16 %v587
    %v787 = vunpack.c.l.b16 %v588
    %v788 = vunpack.c.l.b16 %v589
    %v789 = vunpack.c.l.b16 %v590
    %v790 = vunpack.c.l.b16 %v591
    %v791 = vunpack.c.l.b16 %v592
    %v792 = vunpack.c.l.b16 %v593
    %v793 = vunpack.c.l.b16 %v594
    %v794 = vunpack.c.l.b16 %v595
    %v795 = vpack.c.b16 %v700, %v699
    %v796 = vpack.c.b16 %v702, %v701
    %v797 = vpack.c.b16 %v704, %v703
    %v798 = vpack.c.b16 %v706, %v705
    %v799 = vpack.c.b16 %v708, %v707
    %v800 = vpack.c.b16 %v710, %v709
    %v801 = vpack.c.b16 %v712, %v711
    %v802 = vpack.c.b16 %v714, %v713
    %v803 = vpack.c.b16 %v716, %v715
    %v804 = vpack.c.b16 %v718, %v717
    %v805 = vpack.c.b16 %v720, %v719
    %v806 = vpack.c.b16 %v722, %v721
    %v807 = vpack.c.b16 %v724, %v723
    %v808 = vpack.c.b16 %v726, %v725
    %v809 = vpack.c.b16 %v728, %v727
    %v810 = vpack.c.b16 %v730, %v729
    %v811 = vpack.c.b16 %v732, %v731
    %v812 = vpack.c.b16 %v734, %v733
    %v813 = vpack.c.b16 %v736, %v735
    %v814 = vpack.c.b16 %v738, %v737
    %v815 = vpack.c.b16 %v740, %v739
    %v816 = vpack.c.b16 %v742, %v741
    %v817 = vpack.c.b16 %v744, %v743
    %v818 = vpack.c.b16 %v746, %v745
    %v819 = vpack.c.b16 %v748, %v747
    %v820 = vpack.c.b16 %v750, %v749
    %v821 = vpack.c.b16 %v752, %v751
    %v822 = vpack.c.b16 %v754, %v753
    %v823 = vpack.c.b16 %v756, %v755
    %v824 = vpack.c.b16 %v758, %v757
    %v825 = vpack.c.b16 %v760, %v759
    %v826 = vpack.c.b16 %v762, %v761
    %v827 = vpack.c.b16 %v764, %v763
    %v828 = vpack.c.b16 %v766, %v765
    %v829 = vpack.c.b16 %v768, %v767
    %v830 = vpack.c.b16 %v770, %v769
    %v831 = vpack.c.b16 %v772, %v771
    %v832 = vpack.c.b16 %v774, %v773
    %v833 = vpack.c.b16 %v776, %v775
    %v834 = vpack.c.b16 %v778, %v777
    %v835 = vpack.c.b16 %v780, %v779
    %v836 = vpack.c.b16 %v782, %v781
    %v837 = vpack.c.b16 %v784, %v783
    %v838 = vpack.c.b16 %v786, %v785
    %v839 = vpack.c.b16 %v788, %v787
    %v840 = vpack.c.b16 %v790, %v789
    %v841 = vpack.c.b16 %v792, %v791
    %v842 = vpack.c.b16 %v794, %v793
    %891 = vmatprep.subr.bf16.mxu0 0
    %892 = vmatpush1.bf16.msra.mxu0 %v802
    %893 = vmatprep.subr.bf16.mxu0 0
    %894 = vmatpush1.bf16.msra.mxu0 %v801
    %895 = vmatprep.subr.bf16.mxu0 0
    %896 = vmatpush1.bf16.msra.mxu0 %v800
    %897 = vmatprep.subr.bf16.mxu0 0
    %898 = vmatpush1.bf16.msra.mxu0 %v799
    %899 = vmatprep.subr.bf16.mxu0 0
    %900 = vmatpush1.bf16.msra.mxu0 %v798
    %901 = vmatprep.subr.bf16.mxu0 0
    %902 = vmatpush1.bf16.msra.mxu0 %v797
    %903 = vmatprep.subr.bf16.mxu0 0
    %904 = vmatpush1.bf16.msra.mxu0 %v796
    %905 = vmatprep.subr.bf16.mxu0 0
    %906 = vmatpush1.bf16.msra.mxu0 %v795
    %907 = vmatprep.subr.bf16.mxu0 0
    %908 = vmatpush2.bf16.msra.mxu0 %v810
    %909 = vmatprep.subr.bf16.mxu0 0
    %910 = vmatpush2.bf16.msra.mxu0 %v809
    %911 = vmatprep.subr.bf16.mxu0 0
    %912 = vmatpush2.bf16.msra.mxu0 %v808
    %913 = vmatprep.subr.bf16.mxu0 0
    %914 = vmatpush2.bf16.msra.mxu0 %v807
    %915 = vmatprep.subr.bf16.mxu0 0
    %916 = vmatpush2.bf16.msra.mxu0 %v806
    %917 = vmatprep.subr.bf16.mxu0 0
    %918 = vmatpush2.bf16.msra.mxu0 %v805
    %919 = vmatprep.subr.bf16.mxu0 0
    %920 = vmatpush2.bf16.msra.mxu0 %v804
    %921 = vmatprep.subr.bf16.mxu0 0
    %922 = vmatpush2.bf16.msra.mxu0 %v803
    %923 = vmatprep.mubr.bf16.mxu0 %v489
    %924 = vmatmul.mubr.bf16.gmra.mxu0 %v488
    %v925 = vpop.f32.mrf.mxu0
    %v926 = vadd.f32 %v601, %v925
    %v927 = vpop.f32.mrf.mxu0
    %v928 = vpop.f32.mrf.mxu0
    %v929 = vadd.f32 %v601, %v928
    %v930 = vpop.f32.mrf.mxu0
    %931 = vmatprep.mubr.bf16.mxu0 %v495
    %932 = vmatmul.mubr.bf16.gmra.mxu0 %v494
    %v933 = vpop.f32.mrf.mxu0
    %v934 = vadd.f32 %v601, %v933
    %v935 = vpop.f32.mrf.mxu0
    %v936 = vpop.f32.mrf.mxu0
    %v937 = vadd.f32 %v601, %v936
    %v938 = vpop.f32.mrf.mxu0
    %939 = vdwg.mxu0
    %940 = vmatprep.subr.bf16.mxu0 0
    %941 = vmatpush1.bf16.msra.mxu0 %v818
    %942 = vmatprep.subr.bf16.mxu0 0
    %943 = vmatpush1.bf16.msra.mxu0 %v817
    %944 = vmatprep.subr.bf16.mxu0 0
    %945 = vmatpush1.bf16.msra.mxu0 %v816
    %946 = vmatprep.subr.bf16.mxu0 0
    %947 = vmatpush1.bf16.msra.mxu0 %v815
    %948 = vmatprep.subr.bf16.mxu0 0
    %949 = vmatpush1.bf16.msra.mxu0 %v814
    %950 = vmatprep.subr.bf16.mxu0 0
    %951 = vmatpush1.bf16.msra.mxu0 %v813
    %952 = vmatprep.subr.bf16.mxu0 0
    %953 = vmatpush1.bf16.msra.mxu0 %v812
    %954 = vmatprep.subr.bf16.mxu0 0
    %955 = vmatpush1.bf16.msra.mxu0 %v811
    %956 = vmatprep.subr.bf16.mxu0 0
    %957 = vmatpush2.bf16.msra.mxu0 %v826
    %958 = vmatprep.subr.bf16.mxu0 0
    %959 = vmatpush2.bf16.msra.mxu0 %v825
    %960 = vmatprep.subr.bf16.mxu0 0
    %961 = vmatpush2.bf16.msra.mxu0 %v824
    %962 = vmatprep.subr.bf16.mxu0 0
    %963 = vmatpush2.bf16.msra.mxu0 %v823
    %964 = vmatprep.subr.bf16.mxu0 0
    %965 = vmatpush2.bf16.msra.mxu0 %v822
    %966 = vmatprep.subr.bf16.mxu0 0
    %967 = vmatpush2.bf16.msra.mxu0 %v821
    %968 = vmatprep.subr.bf16.mxu0 0
    %969 = vmatpush2.bf16.msra.mxu0 %v820
    %970 = vmatprep.subr.bf16.mxu0 0
    %971 = vmatpush2.bf16.msra.mxu0 %v819
    %972 = vmatprep.mubr.bf16.mxu0 %v491
    %973 = vmatmul.mubr.bf16.gmra.mxu0 %v490
    %v974 = vpop.f32.mrf.mxu0
    %v975 = vadd.f32 %v926, %v974
    %v976 = vpop.f32.mrf.mxu0
    %v977 = vpop.f32.mrf.mxu0
    %v978 = vadd.f32 %v929, %v977
    %v979 = vpop.f32.mrf.mxu0
    %980 = vmatprep.mubr.bf16.mxu0 %v497
    %981 = vmatmul.mubr.bf16.gmra.mxu0 %v496
    %v982 = vpop.f32.mrf.mxu0
    %v983 = vadd.f32 %v934, %v982
    %v984 = vpop.f32.mrf.mxu0
    %v985 = vpop.f32.mrf.mxu0
    %v986 = vadd.f32 %v937, %v985
    %v987 = vpop.f32.mrf.mxu0
    %988 = vdwg.mxu0
    %989 = vmatprep.subr.bf16.mxu0 0
    %990 = vmatpush1.bf16.msra.mxu0 %v834
    %991 = vmatprep.subr.bf16.mxu0 0
    %992 = vmatpush1.bf16.msra.mxu0 %v833
    %993 = vmatprep.subr.bf16.mxu0 0
    %994 = vmatpush1.bf16.msra.mxu0 %v832
    %995 = vmatprep.subr.bf16.mxu0 0
    %996 = vmatpush1.bf16.msra.mxu0 %v831
    %997 = vmatprep.subr.bf16.mxu0 0
    %998 = vmatpush1.bf16.msra.mxu0 %v830
    %999 = vmatprep.subr.bf16.mxu0 0
    %1000 = vmatpush1.bf16.msra.mxu0 %v829
    %1001 = vmatprep.subr.bf16.mxu0 0
    %1002 = vmatpush1.bf16.msra.mxu0 %v828
    %1003 = vmatprep.subr.bf16.mxu0 0
    %1004 = vmatpush1.bf16.msra.mxu0 %v827
    %1005 = vmatprep.subr.bf16.mxu0 0
    %1006 = vmatpush2.bf16.msra.mxu0 %v842
    %1007 = vmatprep.subr.bf16.mxu0 0
    %1008 = vmatpush2.bf16.msra.mxu0 %v841
    %1009 = vmatprep.subr.bf16.mxu0 0
    %1010 = vmatpush2.bf16.msra.mxu0 %v840
    %1011 = vmatprep.subr.bf16.mxu0 0
    %1012 = vmatpush2.bf16.msra.mxu0 %v839
    %1013 = vmatprep.subr.bf16.mxu0 0
    %1014 = vmatpush2.bf16.msra.mxu0 %v838
    %1015 = vmatprep.subr.bf16.mxu0 0
    %1016 = vmatpush2.bf16.msra.mxu0 %v837
    %1017 = vmatprep.subr.bf16.mxu0 0
    %1018 = vmatpush2.bf16.msra.mxu0 %v836
    %1019 = vmatprep.subr.bf16.mxu0 0
    %1020 = vmatpush2.bf16.msra.mxu0 %v835
    %1021 = vmatprep.mubr.bf16.mxu0 %v493
    %1022 = vmatmul.mubr.bf16.gmra.mxu0 %v492
    %v1023 = vpop.f32.mrf.mxu0
    %v1024 = vadd.f32 %v975, %v1023
    %v1025 = vpop.f32.mrf.mxu0
    %v1026 = vpop.f32.mrf.mxu0
    %v1027 = vadd.f32 %v978, %v1026
    %v1028 = vpop.f32.mrf.mxu0
    %1029 = vmatprep.mubr.bf16.mxu0 %v499
    %1030 = vmatmul.mubr.bf16.gmra.mxu0 %v498
    %v1031 = vpop.f32.mrf.mxu0
    %v1032 = vadd.f32 %v983, %v1031
    %v1033 = vpop.f32.mrf.mxu0
    %v1034 = vpop.f32.mrf.mxu0
    %v1035 = vadd.f32 %v986, %v1034
    %v1036 = vpop.f32.mrf.mxu0
    %1037 = vdwg.mxu0
    %vm1038 = vcmp.ge.f32.partialorder %v1024, 0.0
    %vm1039 = vcmp.ge.f32.partialorder %v1027, 0.0
    %vm1040 = vcmp.ge.f32.partialorder %v1032, 0.0
    %vm1041 = vcmp.ge.f32.partialorder %v1035, 0.0
    %v1042 = vmul.f32 %v1024, 0.01
    %v1043 = vmul.f32 %v1027, 0.01
    %v1044 = vmul.f32 %v1032, 0.01
    %v1045 = vmul.f32 %v1035, 0.01
    %v1046 = vsel %vm1038, %v1024, %v1042
    %v1047 = vsel %vm1039, %v1027, %v1043
    %v1048 = vsel %vm1040, %v1032, %v1044
    %v1049 = vsel %vm1041, %v1035, %v1045
    %v1054 = vrot.slane %v1046, 7
    %v1055 = vrot.slane %v1047, 7
    %v1056 = vrot.slane %v1048, 7
    %v1057 = vrot.slane %v1049, 7
    %v1062 = vsel %vm253, 0.0, %v1054
    %v1063 = vsel %vm253, 0.0, %v1055
    %v1064 = vsel %vm253, 0.0, %v1056
    %v1065 = vsel %vm253, 0.0, %v1057
    %v1066 = vrot.slane %v1046, 1
    %v1067 = vrot.slane %v1047, 1
    %v1068 = vrot.slane %v1048, 1
    %v1069 = vrot.slane %v1049, 1
    %v1074 = vsel %vm266, %v1066, 0.0
    %v1075 = vsel %vm266, %v1067, 0.0
    %v1076 = vsel %vm266, %v1068, 0.0
    %v1077 = vsel %vm266, %v1069, 0.0
    %v1078 = vpack.c.bf16 %v1063, %v1062
    %v1079 = vpack.c.bf16 %v1047, %v1046
    %v1080 = vpack.c.bf16 %v1075, %v1074
    %v1081 = vpack.c.bf16 %v1065, %v1064
    %v1082 = vpack.c.bf16 %v1049, %v1048
    %v1083 = vpack.c.bf16 %v1077, %v1076
    %v1084 = vld [vmem:[%s5] sm:$0xf]
    %v1085 = vld [vmem:[%s5 + $0x4] sm:$0xf]
    %v1086 = vld [vmem:[%s5 + $0x8] sm:$0xf]
    %v1087 = vld [vmem:[%s5 + $0xc] sm:$0xf]
    %v1088 = vld [vmem:[%s5 + $0x10] sm:$0xf]
    %v1089 = vld [vmem:[%s5 + $0x14] sm:$0xf]
    %v1090 = vld [vmem:[%s5 + $0x18] sm:$0xf]
    %v1091 = vld [vmem:[%s5 + $0x1c] sm:$0xf]
    %v1092 = vld [vmem:[%s5 + $0x20] sm:$0xf]
    %v1093 = vld [vmem:[%s5 + $0x24] sm:$0xf]
    %v1094 = vld [vmem:[%s5 + $0x28] sm:$0xf]
    %v1095 = vld [vmem:[%s5 + $0x2c] sm:$0xf]
    %v1096 = vld [vmem:[%s5 + $0x30] sm:$0xf]
    %v1097 = vld [vmem:[%s5 + $0x34] sm:$0xf]
    %v1098 = vld [vmem:[%s5 + $0x38] sm:$0xf]
    %v1099 = vld [vmem:[%s5 + $0x3c] sm:$0xf]
    %v1100 = vld [vmem:[%s5 + $0x40] sm:$0xf]
    %v1101 = vld [vmem:[%s5 + $0x44] sm:$0xf]
    %v1102 = vld [vmem:[%s5 + $0x48] sm:$0xf]
    %v1103 = vld [vmem:[%s5 + $0x4c] sm:$0xf]
    %v1104 = vld [vmem:[%s5 + $0x50] sm:$0xf]
    %v1105 = vld [vmem:[%s5 + $0x54] sm:$0xf]
    %v1106 = vld [vmem:[%s5 + $0x58] sm:$0xf]
    %v1107 = vld [vmem:[%s5 + $0x5c] sm:$0xf]
    %v1108 = vld [vmem:[%s5 + $0x60] sm:$0xf]
    %v1109 = vld [vmem:[%s5 + $0x64] sm:$0xf]
    %v1110 = vld [vmem:[%s5 + $0x68] sm:$0xf]
    %v1111 = vld [vmem:[%s5 + $0x6c] sm:$0xf]
    %v1112 = vld [vmem:[%s5 + $0x70] sm:$0xf]
    %v1113 = vld [vmem:[%s5 + $0x74] sm:$0xf]
    %v1114 = vld [vmem:[%s5 + $0x78] sm:$0xf]
    %v1115 = vld [vmem:[%s5 + $0x7c] sm:$0xf]
    %v1116 = vld [vmem:[%s5 + $0x80] sm:$0xf]
    %v1117 = vld [vmem:[%s5 + $0x84] sm:$0xf]
    %v1118 = vld [vmem:[%s5 + $0x88] sm:$0xf]
    %v1119 = vld [vmem:[%s5 + $0x8c] sm:$0xf]
    %v1120 = vld [vmem:[%s5 + $0x90] sm:$0xf]
    %v1121 = vld [vmem:[%s5 + $0x94] sm:$0xf]
    %v1122 = vld [vmem:[%s5 + $0x98] sm:$0xf]
    %v1123 = vld [vmem:[%s5 + $0x9c] sm:$0xf]
    %v1124 = vld [vmem:[%s5 + $0xa0] sm:$0xf]
    %v1125 = vld [vmem:[%s5 + $0xa4] sm:$0xf]
    %v1126 = vld [vmem:[%s5 + $0xa8] sm:$0xf]
    %v1127 = vld [vmem:[%s5 + $0xac] sm:$0xf]
    %v1128 = vld [vmem:[%s5 + $0xb0] sm:$0xf]
    %v1129 = vld [vmem:[%s5 + $0xb4] sm:$0xf]
    %v1130 = vld [vmem:[%s5 + $0xb8] sm:$0xf]
    %v1131 = vld [vmem:[%s5 + $0xbc] sm:$0xf]
    %v1132 = vld [vmem:[#allocation7] sm:$0x1]
    %v1134 = vlaneseq
    %v1135 = vshrl.u32 %v1134, 7
    %v1136 = vsub.s32 0, %v1135
    %v1137 = vrot.slane %v1132, %v1136
    %v1187 = vunpack.c.l.b16 %v1084
    %v1188 = vunpack.c.l.b16 %v1085
    %v1189 = vunpack.c.l.b16 %v1086
    %v1190 = vunpack.c.l.b16 %v1087
    %v1191 = vunpack.c.l.b16 %v1088
    %v1192 = vunpack.c.l.b16 %v1089
    %v1193 = vunpack.c.l.b16 %v1090
    %v1194 = vunpack.c.l.b16 %v1091
    %v1195 = vunpack.c.l.b16 %v1092
    %v1196 = vunpack.c.l.b16 %v1093
    %v1197 = vunpack.c.l.b16 %v1094
    %v1198 = vunpack.c.l.b16 %v1095
    %v1199 = vunpack.c.l.b16 %v1096
    %v1200 = vunpack.c.l.b16 %v1097
    %v1201 = vunpack.c.l.b16 %v1098
    %v1202 = vunpack.c.l.b16 %v1099
    %v1203 = vunpack.c.l.b16 %v1100
    %v1204 = vunpack.c.l.b16 %v1101
    %v1205 = vunpack.c.l.b16 %v1102
    %v1206 = vunpack.c.l.b16 %v1103
    %v1207 = vunpack.c.l.b16 %v1104
    %v1208 = vunpack.c.l.b16 %v1105
    %v1209 = vunpack.c.l.b16 %v1106
    %v1210 = vunpack.c.l.b16 %v1107
    %v1211 = vunpack.c.l.b16 %v1108
    %v1212 = vunpack.c.l.b16 %v1109
    %v1213 = vunpack.c.l.b16 %v1110
    %v1214 = vunpack.c.l.b16 %v1111
    %v1215 = vunpack.c.l.b16 %v1112
    %v1216 = vunpack.c.l.b16 %v1113
    %v1217 = vunpack.c.l.b16 %v1114
    %v1218 = vunpack.c.l.b16 %v1115
    %v1219 = vunpack.c.l.b16 %v1116
    %v1220 = vunpack.c.l.b16 %v1117
    %v1221 = vunpack.c.l.b16 %v1118
    %v1222 = vunpack.c.l.b16 %v1119
    %v1223 = vunpack.c.l.b16 %v1120
    %v1224 = vunpack.c.l.b16 %v1121
    %v1225 = vunpack.c.l.b16 %v1122
    %v1226 = vunpack.c.l.b16 %v1123
    %v1227 = vunpack.c.l.b16 %v1124
    %v1228 = vunpack.c.l.b16 %v1125
    %v1229 = vunpack.c.l.b16 %v1126
    %v1230 = vunpack.c.l.b16 %v1127
    %v1231 = vunpack.c.l.b16 %v1128
    %v1232 = vunpack.c.l.b16 %v1129
    %v1233 = vunpack.c.l.b16 %v1130
    %v1234 = vunpack.c.l.b16 %v1131
    %v1235 = vpack.c.b16 %v1188, %v1187
    %v1236 = vpack.c.b16 %v1190, %v1189
    %v1237 = vpack.c.b16 %v1192, %v1191
    %v1238 = vpack.c.b16 %v1194, %v1193
    %v1239 = vpack.c.b16 %v1196, %v1195
    %v1240 = vpack.c.b16 %v1198, %v1197
    %v1241 = vpack.c.b16 %v1200, %v1199
    %v1242 = vpack.c.b16 %v1202, %v1201
    %v1243 = vpack.c.b16 %v1204, %v1203
    %v1244 = vpack.c.b16 %v1206, %v1205
    %v1245 = vpack.c.b16 %v1208, %v1207
    %v1246 = vpack.c.b16 %v1210, %v1209
    %v1247 = vpack.c.b16 %v1212, %v1211
    %v1248 = vpack.c.b16 %v1214, %v1213
    %v1249 = vpack.c.b16 %v1216, %v1215
    %v1250 = vpack.c.b16 %v1218, %v1217
    %v1251 = vpack.c.b16 %v1220, %v1219
    %v1252 = vpack.c.b16 %v1222, %v1221
    %v1253 = vpack.c.b16 %v1224, %v1223
    %v1254 = vpack.c.b16 %v1226, %v1225
    %v1255 = vpack.c.b16 %v1228, %v1227
    %v1256 = vpack.c.b16 %v1230, %v1229
    %v1257 = vpack.c.b16 %v1232, %v1231
    %v1258 = vpack.c.b16 %v1234, %v1233
    %1283 = vmatprep.subr.bf16.mxu0 0
    %1284 = vmatpush1.bf16.msra.mxu0 %v1242
    %1285 = vmatprep.subr.bf16.mxu0 0
    %1286 = vmatpush1.bf16.msra.mxu0 %v1241
    %1287 = vmatprep.subr.bf16.mxu0 0
    %1288 = vmatpush1.bf16.msra.mxu0 %v1240
    %1289 = vmatprep.subr.bf16.mxu0 0
    %1290 = vmatpush1.bf16.msra.mxu0 %v1239
    %1291 = vmatprep.subr.bf16.mxu0 0
    %1292 = vmatpush1.bf16.msra.mxu0 %v1238
    %1293 = vmatprep.subr.bf16.mxu0 0
    %1294 = vmatpush1.bf16.msra.mxu0 %v1237
    %1295 = vmatprep.subr.bf16.mxu0 0
    %1296 = vmatpush1.bf16.msra.mxu0 %v1236
    %1297 = vmatprep.subr.bf16.mxu0 0
    %1298 = vmatpush1.bf16.msra.mxu0 %v1235
    %1299 = vmatprep.subr.bf16.mxu0 0
    %1300 = vmatpush2.bf16.msra.mxu0 %v1250
    %1301 = vmatprep.subr.bf16.mxu0 0
    %1302 = vmatpush2.bf16.msra.mxu0 %v1249
    %1303 = vmatprep.subr.bf16.mxu0 0
    %1304 = vmatpush2.bf16.msra.mxu0 %v1248
    %1305 = vmatprep.subr.bf16.mxu0 0
    %1306 = vmatpush2.bf16.msra.mxu0 %v1247
    %1307 = vmatprep.subr.bf16.mxu0 0
    %1308 = vmatpush2.bf16.msra.mxu0 %v1246
    %1309 = vmatprep.subr.bf16.mxu0 0
    %1310 = vmatpush2.bf16.msra.mxu0 %v1245
    %1311 = vmatprep.subr.bf16.mxu0 0
    %1312 = vmatpush2.bf16.msra.mxu0 %v1244
    %1313 = vmatprep.subr.bf16.mxu0 0
    %1314 = vmatpush2.bf16.msra.mxu0 %v1243
    %1315 = vmatprep.mubr.bf16.mxu0 %v1079
    %1316 = vmatmul.mubr.bf16.gmra.mxu0 %v1078
    %v1317 = vpop.f32.mrf.mxu0
    %v1318 = vadd.f32 %v1137, %v1317
    %v1319 = vpop.f32.mrf.mxu0
    %v1320 = vpop.f32.mrf.mxu0
    %v1321 = vadd.f32 %v1137, %v1320
    %v1322 = vpop.f32.mrf.mxu0
    %1323 = vmatprep.mubr.bf16.mxu0 %v1082
    %1324 = vmatmul.mubr.bf16.gmra.mxu0 %v1081
    %v1325 = vpop.f32.mrf.mxu0
    %v1326 = vadd.f32 %v1137, %v1325
    %v1327 = vpop.f32.mrf.mxu0
    %v1328 = vpop.f32.mrf.mxu0
    %v1329 = vadd.f32 %v1137, %v1328
    %v1330 = vpop.f32.mrf.mxu0
    %1331 = vdwg.mxu0
    %1332 = vmatprep.subr.bf16.mxu0 0
    %1333 = vmatpush1.bf16.msra.mxu0 %v1258
    %1334 = vmatprep.subr.bf16.mxu0 0
    %1335 = vmatpush1.bf16.msra.mxu0 %v1257
    %1336 = vmatprep.subr.bf16.mxu0 0
    %1337 = vmatpush1.bf16.msra.mxu0 %v1256
    %1338 = vmatprep.subr.bf16.mxu0 0
    %1339 = vmatpush1.bf16.msra.mxu0 %v1255
    %1340 = vmatprep.subr.bf16.mxu0 0
    %1341 = vmatpush1.bf16.msra.mxu0 %v1254
    %1342 = vmatprep.subr.bf16.mxu0 0
    %1343 = vmatpush1.bf16.msra.mxu0 %v1253
    %1344 = vmatprep.subr.bf16.mxu0 0
    %1345 = vmatpush1.bf16.msra.mxu0 %v1252
    %1346 = vmatprep.subr.bf16.mxu0 0
    %1347 = vmatpush1.bf16.msra.mxu0 %v1251
    %1348 = vmatprep.subr.bf16.mxu0 0
    %1349 = vmatpush2.bf16.msra.mxu0 0
    %1350 = vmatprep.subr.bf16.mxu0 0
    %1351 = vmatpush2.bf16.msra.mxu0 0
    %1352 = vmatprep.subr.bf16.mxu0 0
    %1353 = vmatpush2.bf16.msra.mxu0 0
    %1354 = vmatprep.subr.bf16.mxu0 0
    %1355 = vmatpush2.bf16.msra.mxu0 0
    %1356 = vmatprep.subr.bf16.mxu0 0
    %1357 = vmatpush2.bf16.msra.mxu0 0
    %1358 = vmatprep.subr.bf16.mxu0 0
    %1359 = vmatpush2.bf16.msra.mxu0 0
    %1360 = vmatprep.subr.bf16.mxu0 0
    %1361 = vmatpush2.bf16.msra.mxu0 0
    %1362 = vmatprep.subr.bf16.mxu0 0
    %1363 = vmatpush2.bf16.msra.mxu0 0
    %1364 = vmatprep.mubr.bf16.mxu0 0
    %1365 = vmatmul.mubr.bf16.gmra.mxu0 %v1080
    %v1366 = vpop.f32.mrf.mxu0
    %v1367 = vadd.f32 %v1318, %v1366
    %v1368 = vpop.f32.mrf.mxu0
    %v1369 = vpop.f32.mrf.mxu0
    %v1370 = vadd.f32 %v1321, %v1369
    %v1371 = vpop.f32.mrf.mxu0
    %1372 = vmatprep.mubr.bf16.mxu0 0
    %1373 = vmatmul.mubr.bf16.gmra.mxu0 %v1083
    %v1374 = vpop.f32.mrf.mxu0
    %v1375 = vadd.f32 %v1326, %v1374
    %v1376 = vpop.f32.mrf.mxu0
    %v1377 = vpop.f32.mrf.mxu0
    %v1378 = vadd.f32 %v1329, %v1377
    %v1379 = vpop.f32.mrf.mxu0
    %1380 = vdwg.mxu0
    %vm1381 = vcmp.ge.f32.partialorder %v1367, 0.0
    %vm1382 = vcmp.ge.f32.partialorder %v1370, 0.0
    %vm1383 = vcmp.ge.f32.partialorder %v1375, 0.0
    %vm1384 = vcmp.ge.f32.partialorder %v1378, 0.0
    %v1385 = vmul.f32 %v1367, 0.01
    %v1386 = vmul.f32 %v1370, 0.01
    %v1387 = vmul.f32 %v1375, 0.01
    %v1388 = vmul.f32 %v1378, 0.01
    %v1389 = vsel %vm1381, %v1367, %v1385
    %v1390 = vsel %vm1382, %v1370, %v1386
    %v1391 = vsel %vm1383, %v1375, %v1387
    %v1392 = vsel %vm1384, %v1378, %v1388
    %v1397 = vrot.slane %v1389, 7
    %v1398 = vrot.slane %v1390, 7
    %v1399 = vrot.slane %v1391, 7
    %v1400 = vrot.slane %v1392, 7
    %v1405 = vsel %vm253, 0.0, %v1397
    %v1406 = vsel %vm253, 0.0, %v1398
    %v1407 = vsel %vm253, 0.0, %v1399
    %v1408 = vsel %vm253, 0.0, %v1400
    %v1409 = vrot.slane %v1389, 1
    %v1410 = vrot.slane %v1390, 1
    %v1411 = vrot.slane %v1391, 1
    %v1412 = vrot.slane %v1392, 1
    %v1417 = vsel %vm266, %v1409, 0.0
    %v1418 = vsel %vm266, %v1410, 0.0
    %v1419 = vsel %vm266, %v1411, 0.0
    %v1420 = vsel %vm266, %v1412, 0.0
    %1421 = vrot.lane.b32.xlu0 %v1389, 64
    %v1422 = vpop.permute.xlu0 %1421
    %1423 = vrot.lane.b32.xlu0 %v1390, 64
    %v1424 = vpop.permute.xlu0 %1423
    %1425 = vrot.lane.b32.xlu0 %v1391, 64
    %v1426 = vpop.permute.xlu0 %1425
    %1427 = vrot.lane.b32.xlu0 %v1392, 64
    %v1428 = vpop.permute.xlu0 %1427
    %vm1433 = vcmask 523264
    %v1434 = vsel %vm1433, %v1405, %v1422
    %v1435 = vsel %vm1433, %v1406, %v1424
    %v1436 = vsel %vm1433, %v1407, %v1426
    %v1437 = vsel %vm1433, %v1408, %v1428
    %v1438 = vpack.c.bf16 %v1435, %v1434
    %v1439 = vpack.c.bf16 %v1418, %v1417
    %v1440 = vpack.c.bf16 %v1437, %v1436
    %v1441 = vpack.c.bf16 %v1420, %v1419
    %v1442 = vld [vmem:[%s7] sm:$0xf]
    %v1443 = vld [vmem:[%s7 + $0x4] sm:$0xf]
    %v1444 = vld [vmem:[%s7 + $0x8] sm:$0xf]
    %v1445 = vld [vmem:[%s7 + $0xc] sm:$0xf]
    %v1446 = vld [vmem:[%s7 + $0x10] sm:$0xf]
    %v1447 = vld [vmem:[%s7 + $0x14] sm:$0xf]
    %v1448 = vld [vmem:[%s7 + $0x18] sm:$0xf]
    %v1449 = vld [vmem:[%s7 + $0x1c] sm:$0xf]
    %v1450 = vld [vmem:[%s7 + $0x20] sm:$0xf]
    %v1451 = vld [vmem:[%s7 + $0x24] sm:$0xf]
    %v1452 = vld [vmem:[%s7 + $0x28] sm:$0xf]
    %v1453 = vld [vmem:[%s7 + $0x2c] sm:$0xf]
    %v1454 = vld [vmem:[%s7 + $0x30] sm:$0xf]
    %v1455 = vld [vmem:[%s7 + $0x34] sm:$0xf]
    %v1456 = vld [vmem:[%s7 + $0x38] sm:$0xf]
    %v1457 = vld [vmem:[%s7 + $0x3c] sm:$0xf]
    %v1458 = vld [vmem:[%s7 + $0x40] sm:$0xf]
    %v1459 = vld [vmem:[%s7 + $0x44] sm:$0xf]
    %v1460 = vld [vmem:[%s7 + $0x48] sm:$0xf]
    %v1461 = vld [vmem:[%s7 + $0x4c] sm:$0xf]
    %v1462 = vld [vmem:[%s7 + $0x50] sm:$0xf]
    %v1463 = vld [vmem:[%s7 + $0x54] sm:$0xf]
    %v1464 = vld [vmem:[%s7 + $0x58] sm:$0xf]
    %v1465 = vld [vmem:[%s7 + $0x5c] sm:$0xf]
    %v1466 = vld [vmem:[#allocation8] sm:$0x1]
    %v1468 = vlaneseq
    %v1469 = vshrl.u32 %v1468, 7
    %v1470 = vsub.s32 0, %v1469
    %v1471 = vrot.slane %v1466, %v1470
    %v1497 = vunpack.c.l.b16 %v1442
    %v1498 = vunpack.c.l.b16 %v1443
    %v1499 = vunpack.c.l.b16 %v1444
    %v1500 = vunpack.c.l.b16 %v1445
    %v1501 = vunpack.c.l.b16 %v1446
    %v1502 = vunpack.c.l.b16 %v1447
    %v1503 = vunpack.c.l.b16 %v1448
    %v1504 = vunpack.c.l.b16 %v1449
    %v1505 = vunpack.c.l.b16 %v1450
    %v1506 = vunpack.c.l.b16 %v1451
    %v1507 = vunpack.c.l.b16 %v1452
    %v1508 = vunpack.c.l.b16 %v1453
    %v1509 = vunpack.c.l.b16 %v1454
    %v1510 = vunpack.c.l.b16 %v1455
    %v1511 = vunpack.c.l.b16 %v1456
    %v1512 = vunpack.c.l.b16 %v1457
    %v1513 = vunpack.c.l.b16 %v1458
    %v1514 = vunpack.c.l.b16 %v1459
    %v1515 = vunpack.c.l.b16 %v1460
    %v1516 = vunpack.c.l.b16 %v1461
    %v1517 = vunpack.c.l.b16 %v1462
    %v1518 = vunpack.c.l.b16 %v1463
    %v1519 = vunpack.c.l.b16 %v1464
    %v1520 = vunpack.c.l.b16 %v1465
    %v1521 = vpack.c.b16 %v1498, %v1497
    %v1522 = vpack.c.b16 %v1500, %v1499
    %v1523 = vpack.c.b16 %v1502, %v1501
    %v1524 = vpack.c.b16 %v1504, %v1503
    %v1525 = vpack.c.b16 %v1506, %v1505
    %v1526 = vpack.c.b16 %v1508, %v1507
    %v1527 = vpack.c.b16 %v1510, %v1509
    %v1528 = vpack.c.b16 %v1512, %v1511
    %v1529 = vpack.c.b16 %v1514, %v1513
    %v1530 = vpack.c.b16 %v1516, %v1515
    %v1531 = vpack.c.b16 %v1518, %v1517
    %v1532 = vpack.c.b16 %v1520, %v1519
    %v1546 = vsel %vm1433, %v1439, 0
    %v1549 = vsel %vm1433, %v1441, 0
    %1551 = vmatprep.subr.bf16.mxu0 0
    %1552 = vmatpush1.bf16.msra.mxu0 %v1528
    %1553 = vmatprep.subr.bf16.mxu0 0
    %1554 = vmatpush1.bf16.msra.mxu0 %v1527
    %1555 = vmatprep.subr.bf16.mxu0 0
    %1556 = vmatpush1.bf16.msra.mxu0 %v1526
    %1557 = vmatprep.subr.bf16.mxu0 0
    %1558 = vmatpush1.bf16.msra.mxu0 %v1525
    %1559 = vmatprep.subr.bf16.mxu0 0
    %1560 = vmatpush1.bf16.msra.mxu0 %v1524
    %1561 = vmatprep.subr.bf16.mxu0 0
    %1562 = vmatpush1.bf16.msra.mxu0 %v1523
    %1563 = vmatprep.subr.bf16.mxu0 0
    %1564 = vmatpush1.bf16.msra.mxu0 %v1522
    %1565 = vmatprep.subr.bf16.mxu0 0
    %1566 = vmatpush1.bf16.msra.mxu0 %v1521
    %1567 = vmatprep.subr.bf16.mxu0 0
    %1568 = vmatpush2.bf16.msra.mxu0 0
    %1569 = vmatprep.subr.bf16.mxu0 0
    %1570 = vmatpush2.bf16.msra.mxu0 0
    %1571 = vmatprep.subr.bf16.mxu0 0
    %1572 = vmatpush2.bf16.msra.mxu0 0
    %1573 = vmatprep.subr.bf16.mxu0 0
    %1574 = vmatpush2.bf16.msra.mxu0 0
    %1575 = vmatprep.subr.bf16.mxu0 0
    %1576 = vmatpush2.bf16.msra.mxu0 %v1532
    %1577 = vmatprep.subr.bf16.mxu0 0
    %1578 = vmatpush2.bf16.msra.mxu0 %v1531
    %1579 = vmatprep.subr.bf16.mxu0 0
    %1580 = vmatpush2.bf16.msra.mxu0 %v1530
    %1581 = vmatprep.subr.bf16.mxu0 0
    %1582 = vmatpush2.bf16.msra.mxu0 %v1529
    %1583 = vmatprep.mubr.bf16.mxu0 %v1546
    %1584 = vmatmul.mubr.bf16.gmra.mxu0 %v1438
    %v1585 = vpop.f32.mrf.mxu0
    %v1586 = vadd.f32 %v1471, %v1585
    %v1587 = vpop.f32.mrf.mxu0
    %v1588 = vpop.f32.mrf.mxu0
    %v1589 = vadd.f32 %v1471, %v1588
    %v1590 = vpop.f32.mrf.mxu0
    %1591 = vmatprep.mubr.bf16.mxu0 %v1549
    %1592 = vmatmul.mubr.bf16.gmra.mxu0 %v1440
    %v1593 = vpop.f32.mrf.mxu0
    %v1594 = vadd.f32 %v1471, %v1593
    %v1595 = vpop.f32.mrf.mxu0
    %v1596 = vpop.f32.mrf.mxu0
    %v1597 = vadd.f32 %v1471, %v1596
    %v1598 = vpop.f32.mrf.mxu0
    %1599 = vdwg.mxu0
    %vm1600 = vcmp.ge.f32.partialorder %v1586, 0.0
    %vm1601 = vcmp.ge.f32.partialorder %v1589, 0.0
    %vm1602 = vcmp.ge.f32.partialorder %v1594, 0.0
    %vm1603 = vcmp.ge.f32.partialorder %v1597, 0.0
    %v1604 = vmul.f32 %v1586, 0.01
    %v1605 = vmul.f32 %v1589, 0.01
    %v1606 = vmul.f32 %v1594, 0.01
    %v1607 = vmul.f32 %v1597, 0.01
    %v1608 = vsel %vm1600, %v1586, %v1604
    %v1609 = vsel %vm1601, %v1589, %v1605
    %v1610 = vsel %vm1602, %v1594, %v1606
    %v1611 = vsel %vm1603, %v1597, %v1607
    %v1612 = vpack.c.bf16 %v1609, %v1608
    %v1613 = vpack.c.bf16 %v1611, %v1610
    %v1614 = vld [vmem:[#allocation10] sm:$0xf]
    %v1615 = vld [vmem:[#allocation10 + $0x4] sm:$0xf]
    %v1616 = vld [vmem:[#allocation10 + $0x8] sm:$0xf]
    %v1617 = vld [vmem:[#allocation10 + $0xc] sm:$0xf]
    %v1618 = vld [vmem:[#allocation14] sm:$0x1]
    %v1620 = vlaneseq
    %v1621 = vshrl.u32 %v1620, 7
    %v1622 = vsub.s32 0, %v1621
    %v1623 = vrot.slane %v1618, %v1622
    %v1629 = vunpack.c.l.b16 %v1614
    %v1630 = vunpack.c.l.b16 %v1615
    %v1631 = vunpack.c.l.b16 %v1616
    %v1632 = vunpack.c.l.b16 %v1617
    %v1633 = vpack.c.b16 %v1630, %v1629
    %v1634 = vpack.c.b16 %v1632, %v1631
    %vm1637 = vcmask 261120
    %v1639 = vsel %vm1637, %v1612, 0
    %v1642 = vsel %vm1637, %v1613, 0
    %1644 = vmatprep.subr.bf16.mxu0 0
    %1645 = vmatpush1.bf16.msra.mxu0 0
    %1646 = vmatprep.subr.bf16.mxu0 0
    %1647 = vmatpush1.bf16.msra.mxu0 0
    %1648 = vmatprep.subr.bf16.mxu0 0
    %1649 = vmatpush1.bf16.msra.mxu0 0
    %1650 = vmatprep.subr.bf16.mxu0 0
    %1651 = vmatpush1.bf16.msra.mxu0 0
    %1652 = vmatprep.subr.bf16.mxu0 0
    %1653 = vmatpush1.bf16.msra.mxu0 0
    %1654 = vmatprep.subr.bf16.mxu0 0
    %1655 = vmatpush1.bf16.msra.mxu0 0
    %1656 = vmatprep.subr.bf16.mxu0 0
    %1657 = vmatpush1.bf16.msra.mxu0 %v1634
    %1658 = vmatprep.subr.bf16.mxu0 0
    %1659 = vmatpush1.bf16.msra.mxu0 %v1633
    %1660 = vmatprep.subr.bf16.mxu0 0
    %1661 = vmatpush2.bf16.msra.mxu0 0
    %1662 = vmatprep.subr.bf16.mxu0 0
    %1663 = vmatpush2.bf16.msra.mxu0 0
    %1664 = vmatprep.subr.bf16.mxu0 0
    %1665 = vmatpush2.bf16.msra.mxu0 0
    %1666 = vmatprep.subr.bf16.mxu0 0
    %1667 = vmatpush2.bf16.msra.mxu0 0
    %1668 = vmatprep.subr.bf16.mxu0 0
    %1669 = vmatpush2.bf16.msra.mxu0 0
    %1670 = vmatprep.subr.bf16.mxu0 0
    %1671 = vmatpush2.bf16.msra.mxu0 0
    %1672 = vmatprep.subr.bf16.mxu0 0
    %1673 = vmatpush2.bf16.msra.mxu0 0
    %1674 = vmatprep.subr.bf16.mxu0 0
    %1675 = vmatpush2.bf16.msra.mxu0 0
    %1676 = vmatprep.mubr.bf16.mxu0 0
    %1677 = vmatmul.mubr.bf16.gmra.mxu0 %v1639
    %v1678 = vpop.f32.mrf.mxu0
    %v1679 = vadd.f32 %v1623, %v1678
    %v1680 = vpop.f32.mrf.mxu0
    %v1681 = vpop.f32.mrf.mxu0
    %v1682 = vadd.f32 %v1623, %v1681
    %v1683 = vpop.f32.mrf.mxu0
    %1684 = vmatprep.mubr.bf16.mxu0 0
    %1685 = vmatmul.mubr.bf16.gmra.mxu0 %v1642
    %v1686 = vpop.f32.mrf.mxu0
    %v1687 = vadd.f32 %v1623, %v1686
    %v1688 = vpop.f32.mrf.mxu0
    %v1689 = vpop.f32.mrf.mxu0
    %v1690 = vadd.f32 %v1623, %v1689
    %v1691 = vpop.f32.mrf.mxu0
    %1692 = vdwg.mxu0
    %v1693 = vld [vmem:[#allocation11] sm:$0xf]
    %v1694 = vld [vmem:[#allocation11 + $0x4] sm:$0xf]
    %v1695 = vld [vmem:[#allocation11 + $0x8] sm:$0xf]
    %v1696 = vld [vmem:[#allocation11 + $0xc] sm:$0xf]
    %v1697 = vld [vmem:[#allocation16] sm:$0x1]
    %v1699 = vlaneseq
    %v1700 = vshrl.u32 %v1699, 7
    %v1701 = vsub.s32 0, %v1700
    %v1702 = vrot.slane %v1697, %v1701
    %v1708 = vunpack.c.l.b16 %v1693
    %v1709 = vunpack.c.l.b16 %v1694
    %v1710 = vunpack.c.l.b16 %v1695
    %v1711 = vunpack.c.l.b16 %v1696
    %v1712 = vpack.c.b16 %v1709, %v1708
    %v1713 = vpack.c.b16 %v1711, %v1710
    %1716 = vmatprep.subr.bf16.mxu0 0
    %1717 = vmatpush1.bf16.msra.mxu0 0
    %1718 = vmatprep.subr.bf16.mxu0 0
    %1719 = vmatpush1.bf16.msra.mxu0 0
    %1720 = vmatprep.subr.bf16.mxu0 0
    %1721 = vmatpush1.bf16.msra.mxu0 0
    %1722 = vmatprep.subr.bf16.mxu0 0
    %1723 = vmatpush1.bf16.msra.mxu0 0
    %1724 = vmatprep.subr.bf16.mxu0 0
    %1725 = vmatpush1.bf16.msra.mxu0 0
    %1726 = vmatprep.subr.bf16.mxu0 0
    %1727 = vmatpush1.bf16.msra.mxu0 0
    %1728 = vmatprep.subr.bf16.mxu0 0
    %1729 = vmatpush1.bf16.msra.mxu0 %v1713
    %1730 = vmatprep.subr.bf16.mxu0 0
    %1731 = vmatpush1.bf16.msra.mxu0 %v1712
    %1732 = vmatprep.subr.bf16.mxu0 0
    %1733 = vmatpush2.bf16.msra.mxu0 0
    %1734 = vmatprep.subr.bf16.mxu0 0
    %1735 = vmatpush2.bf16.msra.mxu0 0
    %1736 = vmatprep.subr.bf16.mxu0 0
    %1737 = vmatpush2.bf16.msra.mxu0 0
    %1738 = vmatprep.subr.bf16.mxu0 0
    %1739 = vmatpush2.bf16.msra.mxu0 0
    %1740 = vmatprep.subr.bf16.mxu0 0
    %1741 = vmatpush2.bf16.msra.mxu0 0
    %1742 = vmatprep.subr.bf16.mxu0 0
    %1743 = vmatpush2.bf16.msra.mxu0 0
    %1744 = vmatprep.subr.bf16.mxu0 0
    %1745 = vmatpush2.bf16.msra.mxu0 0
    %1746 = vmatprep.subr.bf16.mxu0 0
    %1747 = vmatpush2.bf16.msra.mxu0 0
    %1748 = vmatprep.mubr.bf16.mxu0 0
    %1749 = vmatmul.mubr.bf16.gmra.mxu0 %v1639
    %v1750 = vpop.f32.mrf.mxu0
    %v1751 = vadd.f32 %v1702, %v1750
    %v1752 = vpop.f32.mrf.mxu0
    %v1753 = vpop.f32.mrf.mxu0
    %v1754 = vadd.f32 %v1702, %v1753
    %v1755 = vpop.f32.mrf.mxu0
    %1756 = vmatprep.mubr.bf16.mxu0 0
    %1757 = vmatmul.mubr.bf16.gmra.mxu0 %v1642
    %v1758 = vpop.f32.mrf.mxu0
    %v1759 = vadd.f32 %v1702, %v1758
    %v1760 = vpop.f32.mrf.mxu0
    %v1761 = vpop.f32.mrf.mxu0
    %v1762 = vadd.f32 %v1702, %v1761
    %v1763 = vpop.f32.mrf.mxu0
    %1764 = vdwg.mxu0
    %v1765 = vld [vmem:[#allocation13] sm:$0xf]
    %v1766 = vld [vmem:[#allocation13 + $0x4] sm:$0xf]
    %v1767 = vld [vmem:[#allocation13 + $0x8] sm:$0xf]
    %v1768 = vld [vmem:[#allocation13 + $0xc] sm:$0xf]
    %v1769 = vld [vmem:[#allocation17] sm:$0x1]
    %v1771 = vlaneseq
    %v1772 = vshrl.u32 %v1771, 7
    %v1773 = vsub.s32 0, %v1772
    %v1774 = vrot.slane %v1769, %v1773
    %v1780 = vunpack.c.l.b16 %v1765
    %v1781 = vunpack.c.l.b16 %v1766
    %v1782 = vunpack.c.l.b16 %v1767
    %v1783 = vunpack.c.l.b16 %v1768
    %v1784 = vpack.c.b16 %v1781, %v1780
    %v1785 = vpack.c.b16 %v1783, %v1782
    %1788 = vmatprep.subr.bf16.mxu0 0
    %1789 = vmatpush1.bf16.msra.mxu0 0
    %1790 = vmatprep.subr.bf16.mxu0 0
    %1791 = vmatpush1.bf16.msra.mxu0 0
    %1792 = vmatprep.subr.bf16.mxu0 0
    %1793 = vmatpush1.bf16.msra.mxu0 0
    %1794 = vmatprep.subr.bf16.mxu0 0
    %1795 = vmatpush1.bf16.msra.mxu0 0
    %1796 = vmatprep.subr.bf16.mxu0 0
    %1797 = vmatpush1.bf16.msra.mxu0 0
    %1798 = vmatprep.subr.bf16.mxu0 0
    %1799 = vmatpush1.bf16.msra.mxu0 0
    %1800 = vmatprep.subr.bf16.mxu0 0
    %1801 = vmatpush1.bf16.msra.mxu0 %v1785
    %1802 = vmatprep.subr.bf16.mxu0 0
    %1803 = vmatpush1.bf16.msra.mxu0 %v1784
    %1804 = vmatprep.subr.bf16.mxu0 0
    %1805 = vmatpush2.bf16.msra.mxu0 0
    %1806 = vmatprep.subr.bf16.mxu0 0
    %1807 = vmatpush2.bf16.msra.mxu0 0
    %1808 = vmatprep.subr.bf16.mxu0 0
    %1809 = vmatpush2.bf16.msra.mxu0 0
    %1810 = vmatprep.subr.bf16.mxu0 0
    %1811 = vmatpush2.bf16.msra.mxu0 0
    %1812 = vmatprep.subr.bf16.mxu0 0
    %1813 = vmatpush2.bf16.msra.mxu0 0
    %1814 = vmatprep.subr.bf16.mxu0 0
    %1815 = vmatpush2.bf16.msra.mxu0 0
    %1816 = vmatprep.subr.bf16.mxu0 0
    %1817 = vmatpush2.bf16.msra.mxu0 0
    %1818 = vmatprep.subr.bf16.mxu0 0
    %1819 = vmatpush2.bf16.msra.mxu0 0
    %1820 = vmatprep.mubr.bf16.mxu0 0
    %1821 = vmatmul.mubr.bf16.gmra.mxu0 %v1639
    %v1822 = vpop.f32.mrf.mxu0
    %v1823 = vadd.f32 %v1774, %v1822
    %v1824 = vpop.f32.mrf.mxu0
    %v1825 = vpop.f32.mrf.mxu0
    %v1826 = vadd.f32 %v1774, %v1825
    %v1827 = vpop.f32.mrf.mxu0
    %1828 = vmatprep.mubr.bf16.mxu0 0
    %1829 = vmatmul.mubr.bf16.gmra.mxu0 %v1642
    %v1830 = vpop.f32.mrf.mxu0
    %v1831 = vadd.f32 %v1774, %v1830
    %v1832 = vpop.f32.mrf.mxu0
    %v1833 = vpop.f32.mrf.mxu0
    %v1834 = vadd.f32 %v1774, %v1833
    %v1835 = vpop.f32.mrf.mxu0
    %1836 = vdwg.mxu0
    %v1837 = vld [vmem:[%s12] sm:$0xf]
    %v1838 = vld [vmem:[%s12 + $0x4] sm:$0xf]
    %v1839 = vld [vmem:[%s12 + $0x8] sm:$0xf]
    %v1840 = vld [vmem:[%s12 + $0xc] sm:$0xf]
    %v1841 = vld [vmem:[%s12 + $0x10] sm:$0xf]
    %v1842 = vld [vmem:[%s12 + $0x14] sm:$0xf]
    %v1843 = vld [vmem:[%s12 + $0x18] sm:$0xf]
    %v1844 = vld [vmem:[%s12 + $0x1c] sm:$0xf]
    %v1845 = vld [vmem:[%s13] sm:$0xf]
    %v1846 = vld [vmem:[%s13 + $0x4] sm:$0xf]
    %v1847 = vld [vmem:[%s13 + $0x8] sm:$0xf]
    %v1848 = vld [vmem:[%s13 + $0xc] sm:$0xf]
    %v1849 = vld [vmem:[%s13 + $0x10] sm:$0xf]
    %v1850 = vld [vmem:[%s13 + $0x14] sm:$0xf]
    %v1851 = vld [vmem:[%s13 + $0x18] sm:$0xf]
    %v1852 = vld [vmem:[%s13 + $0x1c] sm:$0xf]
    %v1853 = vld [vmem:[%s14] sm:$0xf]
    %v1854 = vld [vmem:[%s14 + $0x4] sm:$0xf]
    %v1855 = vld [vmem:[%s14 + $0x8] sm:$0xf]
    %v1856 = vld [vmem:[%s14 + $0xc] sm:$0xf]
    %v1857 = vld [vmem:[%s14 + $0x10] sm:$0xf]
    %v1858 = vld [vmem:[%s14 + $0x14] sm:$0xf]
    %v1859 = vld [vmem:[%s14 + $0x18] sm:$0xf]
    %v1860 = vld [vmem:[%s14 + $0x1c] sm:$0xf]
    %v1861 = vld [vmem:[#allocation19] sm:$0x1]
    %v1870 = vunpack.c.l.b16 %v1837
    %v1871 = vunpack.c.l.b16 %v1838
    %v1872 = vunpack.c.l.b16 %v1839
    %v1873 = vunpack.c.l.b16 %v1840
    %v1874 = vunpack.c.l.b16 %v1841
    %v1875 = vunpack.c.l.b16 %v1842
    %v1876 = vunpack.c.l.b16 %v1843
    %v1877 = vunpack.c.l.b16 %v1844
    %v1878 = vpack.c.b16 %v1871, %v1870
    %v1879 = vpack.c.b16 %v1873, %v1872
    %v1880 = vpack.c.b16 %v1875, %v1874
    %v1881 = vpack.c.b16 %v1877, %v1876
    %v1887 = vsel %vm1433, 0, 0
    %1889 = vmatprep.subr.bf16.mxu0 0
    %1890 = vmatpush1.bf16.msra.mxu0 0
    %1891 = vmatprep.subr.bf16.mxu0 0
    %1892 = vmatpush1.bf16.msra.mxu0 0
    %1893 = vmatprep.subr.bf16.mxu0 0
    %1894 = vmatpush1.bf16.msra.mxu0 0
    %1895 = vmatprep.subr.bf16.mxu0 0
    %1896 = vmatpush1.bf16.msra.mxu0 0
    %1897 = vmatprep.subr.bf16.mxu0 0
    %1898 = vmatpush1.bf16.msra.mxu0 %v1881
    %1899 = vmatprep.subr.bf16.mxu0 0
    %1900 = vmatpush1.bf16.msra.mxu0 %v1880
    %1901 = vmatprep.subr.bf16.mxu0 0
    %1902 = vmatpush1.bf16.msra.mxu0 %v1879
    %1903 = vmatprep.subr.bf16.mxu0 0
    %1904 = vmatpush1.bf16.msra.mxu0 %v1878
    %1905 = vmatprep.subr.bf16.mxu0 0
    %1906 = vmatpush2.bf16.msra.mxu0 0
    %1907 = vmatprep.subr.bf16.mxu0 0
    %1908 = vmatpush2.bf16.msra.mxu0 0
    %1909 = vmatprep.subr.bf16.mxu0 0
    %1910 = vmatpush2.bf16.msra.mxu0 0
    %1911 = vmatprep.subr.bf16.mxu0 0
    %1912 = vmatpush2.bf16.msra.mxu0 0
    %1913 = vmatprep.subr.bf16.mxu0 0
    %1914 = vmatpush2.bf16.msra.mxu0 0
    %1915 = vmatprep.subr.bf16.mxu0 0
    %1916 = vmatpush2.bf16.msra.mxu0 0
    %1917 = vmatprep.subr.bf16.mxu0 0
    %1918 = vmatpush2.bf16.msra.mxu0 0
    %1919 = vmatprep.subr.bf16.mxu0 0
    %1920 = vmatpush2.bf16.msra.mxu0 0
    %1921 = vmatprep.mubr.bf16.mxu0 0
    %1922 = vmatmul.mubr.bf16.gmra.mxu0 %v1887
    %v1923 = vpop.f32.mrf.mxu0
    %v1924 = vadd.f32 0.0, %v1923
    %v1925 = vpop.f32.mrf.mxu0
    %v1926 = vpop.f32.mrf.mxu0
    %v1927 = vpop.f32.mrf.mxu0
    %1928 = vdwg.mxu0
    %v1937 = vunpack.c.l.b16 %v1845
    %v1938 = vunpack.c.l.b16 %v1846
    %v1939 = vunpack.c.l.b16 %v1847
    %v1940 = vunpack.c.l.b16 %v1848
    %v1941 = vunpack.c.l.b16 %v1849
    %v1942 = vunpack.c.l.b16 %v1850
    %v1943 = vunpack.c.l.b16 %v1851
    %v1944 = vunpack.c.l.b16 %v1852
    %v1945 = vpack.c.b16 %v1938, %v1937
    %v1946 = vpack.c.b16 %v1940, %v1939
    %v1947 = vpack.c.b16 %v1942, %v1941
    %v1948 = vpack.c.b16 %v1944, %v1943
    %1953 = vmatprep.subr.bf16.mxu0 0
    %1954 = vmatpush1.bf16.msra.mxu0 0
    %1955 = vmatprep.subr.bf16.mxu0 0
    %1956 = vmatpush1.bf16.msra.mxu0 0
    %1957 = vmatprep.subr.bf16.mxu0 0
    %1958 = vmatpush1.bf16.msra.mxu0 0
    %1959 = vmatprep.subr.bf16.mxu0 0
    %1960 = vmatpush1.bf16.msra.mxu0 0
    %1961 = vmatprep.subr.bf16.mxu0 0
    %1962 = vmatpush1.bf16.msra.mxu0 %v1948
    %1963 = vmatprep.subr.bf16.mxu0 0
    %1964 = vmatpush1.bf16.msra.mxu0 %v1947
    %1965 = vmatprep.subr.bf16.mxu0 0
    %1966 = vmatpush1.bf16.msra.mxu0 %v1946
    %1967 = vmatprep.subr.bf16.mxu0 0
    %1968 = vmatpush1.bf16.msra.mxu0 %v1945
    %1969 = vmatprep.subr.bf16.mxu0 0
    %1970 = vmatpush2.bf16.msra.mxu0 0
    %1971 = vmatprep.subr.bf16.mxu0 0
    %1972 = vmatpush2.bf16.msra.mxu0 0
    %1973 = vmatprep.subr.bf16.mxu0 0
    %1974 = vmatpush2.bf16.msra.mxu0 0
    %1975 = vmatprep.subr.bf16.mxu0 0
    %1976 = vmatpush2.bf16.msra.mxu0 0
    %1977 = vmatprep.subr.bf16.mxu0 0
    %1978 = vmatpush2.bf16.msra.mxu0 0
    %1979 = vmatprep.subr.bf16.mxu0 0
    %1980 = vmatpush2.bf16.msra.mxu0 0
    %1981 = vmatprep.subr.bf16.mxu0 0
    %1982 = vmatpush2.bf16.msra.mxu0 0
    %1983 = vmatprep.subr.bf16.mxu0 0
    %1984 = vmatpush2.bf16.msra.mxu0 0
    %1985 = vmatprep.mubr.bf16.mxu0 0
    %1986 = vmatmul.mubr.bf16.gmra.mxu0 %v1887
    %v1987 = vpop.f32.mrf.mxu0
    %v1988 = vadd.f32 0.0, %v1987
    %v1989 = vpop.f32.mrf.mxu0
    %v1990 = vpop.f32.mrf.mxu0
    %v1991 = vpop.f32.mrf.mxu0
    %1992 = vdwg.mxu0
    %v1994 = vlaneseq
    %v1995 = vshrl.u32 %v1994, 7
    %v1996 = vsub.s32 0, %v1995
    %v1997 = vrot.slane %v1861, %v1996
    %v2007 = vunpack.c.l.b16 %v1853
    %v2008 = vunpack.c.l.b16 %v1854
    %v2009 = vunpack.c.l.b16 %v1855
    %v2010 = vunpack.c.l.b16 %v1856
    %v2011 = vunpack.c.l.b16 %v1857
    %v2012 = vunpack.c.l.b16 %v1858
    %v2013 = vunpack.c.l.b16 %v1859
    %v2014 = vunpack.c.l.b16 %v1860
    %v2015 = vpack.c.b16 %v2008, %v2007
    %v2016 = vpack.c.b16 %v2010, %v2009
    %v2017 = vpack.c.b16 %v2012, %v2011
    %v2018 = vpack.c.b16 %v2014, %v2013
    %2023 = vmatprep.subr.bf16.mxu0 0
    %2024 = vmatpush1.bf16.msra.mxu0 0
    %2025 = vmatprep.subr.bf16.mxu0 0
    %2026 = vmatpush1.bf16.msra.mxu0 0
    %2027 = vmatprep.subr.bf16.mxu0 0
    %2028 = vmatpush1.bf16.msra.mxu0 0
    %2029 = vmatprep.subr.bf16.mxu0 0
    %2030 = vmatpush1.bf16.msra.mxu0 0
    %2031 = vmatprep.subr.bf16.mxu0 0
    %2032 = vmatpush1.bf16.msra.mxu0 %v2018
    %2033 = vmatprep.subr.bf16.mxu0 0
    %2034 = vmatpush1.bf16.msra.mxu0 %v2017
    %2035 = vmatprep.subr.bf16.mxu0 0
    %2036 = vmatpush1.bf16.msra.mxu0 %v2016
    %2037 = vmatprep.subr.bf16.mxu0 0
    %2038 = vmatpush1.bf16.msra.mxu0 %v2015
    %2039 = vmatprep.subr.bf16.mxu0 0
    %2040 = vmatpush2.bf16.msra.mxu0 0
    %2041 = vmatprep.subr.bf16.mxu0 0
    %2042 = vmatpush2.bf16.msra.mxu0 0
    %2043 = vmatprep.subr.bf16.mxu0 0
    %2044 = vmatpush2.bf16.msra.mxu0 0
    %2045 = vmatprep.subr.bf16.mxu0 0
    %2046 = vmatpush2.bf16.msra.mxu0 0
    %2047 = vmatprep.subr.bf16.mxu0 0
    %2048 = vmatpush2.bf16.msra.mxu0 0
    %2049 = vmatprep.subr.bf16.mxu0 0
    %2050 = vmatpush2.bf16.msra.mxu0 0
    %2051 = vmatprep.subr.bf16.mxu0 0
    %2052 = vmatpush2.bf16.msra.mxu0 0
    %2053 = vmatprep.subr.bf16.mxu0 0
    %2054 = vmatpush2.bf16.msra.mxu0 0
    %2055 = vmatprep.mubr.bf16.mxu0 0
    %2056 = vmatmul.mubr.bf16.gmra.mxu0 %v1887
    %v2057 = vpop.f32.mrf.mxu0
    %v2058 = vadd.f32 %v1997, %v2057
    %v2059 = vpop.f32.mrf.mxu0
    %v2060 = vpop.f32.mrf.mxu0
    %v2061 = vpop.f32.mrf.mxu0
    %2062 = vdwg.mxu0
    %v2064 = vrot.slane %v1924, 1
    %v2065 = vrot.slane %v1924, 2
    %v2066 = vrot.slane %v1924, 3
    %v2071 = vadd.f32 %v1679, %v1924
    %v2072 = vadd.f32 %v1682, %v2064
    %v2073 = vadd.f32 %v1687, %v2065
    %v2074 = vadd.f32 %v1690, %v2066
    %v2075 = vxor.u32 %v2071, 2147483648
    %v2076 = vxor.u32 %v2072, 2147483648
    %v2077 = vxor.u32 %v2073, 2147483648
    %v2078 = vxor.u32 %v2074, 2147483648
    %v2079 = vmul.f32 %v2075, 1.442695
    %v2080 = vpow.pop %v2079
    %v2081 = vmul.f32 %v2076, 1.442695
    %v2082 = vpow.pop %v2081
    %v2083 = vmul.f32 %v2077, 1.442695
    %v2084 = vpow.pop %v2083
    %v2085 = vmul.f32 %v2078, 1.442695
    %v2086 = vpow.pop %v2085
    %v2087 = vadd.f32 %v2080, 1.0
    %v2088 = vadd.f32 %v2082, 1.0
    %v2089 = vadd.f32 %v2084, 1.0
    %v2090 = vadd.f32 %v2086, 1.0
    %v2091 = vrcp.pop %v2087
    %v2092 = vmul.f32 1.0, %v2091
    %v2093 = vrcp.pop %v2088
    %v2094 = vmul.f32 1.0, %v2093
    %v2095 = vrcp.pop %v2089
    %v2096 = vmul.f32 1.0, %v2095
    %v2097 = vrcp.pop %v2090
    %v2098 = vmul.f32 1.0, %v2097
    %v2100 = vrot.slane %v1988, 1
    %v2101 = vrot.slane %v1988, 2
    %v2102 = vrot.slane %v1988, 3
    %v2107 = vadd.f32 %v1751, %v1988
    %v2108 = vadd.f32 %v1754, %v2100
    %v2109 = vadd.f32 %v1759, %v2101
    %v2110 = vadd.f32 %v1762, %v2102
    %v2111 = vxor.u32 %v2107, 2147483648
    %v2112 = vxor.u32 %v2108, 2147483648
    %v2113 = vxor.u32 %v2109, 2147483648
    %v2114 = vxor.u32 %v2110, 2147483648
    %v2115 = vmul.f32 %v2111, 1.442695
    %v2116 = vpow.pop %v2115
    %v2117 = vmul.f32 %v2112, 1.442695
    %v2118 = vpow.pop %v2117
    %v2119 = vmul.f32 %v2113, 1.442695
    %v2120 = vpow.pop %v2119
    %v2121 = vmul.f32 %v2114, 1.442695
    %v2122 = vpow.pop %v2121
    %v2123 = vadd.f32 %v2116, 1.0
    %v2124 = vadd.f32 %v2118, 1.0
    %v2125 = vadd.f32 %v2120, 1.0
    %v2126 = vadd.f32 %v2122, 1.0
    %v2127 = vrcp.pop %v2123
    %v2128 = vmul.f32 1.0, %v2127
    %v2129 = vrcp.pop %v2124
    %v2130 = vmul.f32 1.0, %v2129
    %v2131 = vrcp.pop %v2125
    %v2132 = vmul.f32 1.0, %v2131
    %v2133 = vrcp.pop %v2126
    %v2134 = vmul.f32 1.0, %v2133
    %v2136 = vrot.slane %v2058, 1
    %v2137 = vrot.slane %v2058, 2
    %v2138 = vrot.slane %v2058, 3
    %v2143 = vmul.f32 %v2092, %v2058
    %v2144 = vmul.f32 %v2094, %v2136
    %v2145 = vmul.f32 %v2096, %v2137
    %v2146 = vmul.f32 %v2098, %v2138
    %v2147 = vadd.f32 %v1823, %v2143
    %v2148 = vadd.f32 %v1826, %v2144
    %v2149 = vadd.f32 %v1831, %v2145
    %v2150 = vadd.f32 %v1834, %v2146
    %v2151 = vtanh.pop %v2147
    %v2152 = vtanh.pop %v2148
    %v2153 = vtanh.pop %v2149
    %v2154 = vtanh.pop %v2150
    %v2155 = vsub.f32 1.0, %v2128
    %v2156 = vsub.f32 1.0, %v2130
    %v2157 = vsub.f32 1.0, %v2132
    %v2158 = vsub.f32 1.0, %v2134
    %v2159 = vmul.f32 %v2155, %v2151
    %v2160 = vmul.f32 %v2156, %v2152
    %v2161 = vmul.f32 %v2157, %v2153
    %v2162 = vmul.f32 %v2158, %v2154
    %v2163 = vmul.f32 %v2128, 0.0
    %v2164 = vmul.f32 %v2130, 0.0
    %v2165 = vmul.f32 %v2132, 0.0
    %v2166 = vmul.f32 %v2134, 0.0
    %v2167 = vadd.f32 %v2159, %v2163
    %v2168 = vadd.f32 %v2160, %v2164
    %v2169 = vadd.f32 %v2161, %v2165
    %v2170 = vadd.f32 %v2162, %v2166
    %v2171 = vpack.c.bf16 %v2167, %v2167
    %v2172 = vpack.c.bf16 %v2168, %v2168
    %v2173 = vpack.c.bf16 %v2169, %v2169
    %v2174 = vpack.c.bf16 %v2170, %v2170
    %v2179 = vunpack.c.l.b16 %v2171
    %v2180 = vunpack.c.l.b16 %v2172
    %v2181 = vunpack.c.l.b16 %v2173
    %v2182 = vunpack.c.l.b16 %v2174
    %v2183 = vrot.slane %v2180, 7
    %vm2184 = vcmask 1041409
    %v2185 = vsel %vm2184, %v2183, %v2179
    %v2186 = vrot.slane %v2181, 6
    %vm2187 = vcmask 1042434
    %v2188 = vsel %vm2187, %v2186, %v2185
    %v2189 = vrot.slane %v2182, 5
    %vm2190 = vcmask 1043459
    %v2191 = vsel %vm2190, %v2189, %v2188
    %v2192 = vpack.c.b16 %v2191, %v2191
    %v2194 = vsel %vm1433, %v2192, 0
    %2196 = vmatprep.subr.bf16.mxu0 0
    %2197 = vmatpush1.bf16.msra.mxu0 0
    %2198 = vmatprep.subr.bf16.mxu0 0
    %2199 = vmatpush1.bf16.msra.mxu0 0
    %2200 = vmatprep.subr.bf16.mxu0 0
    %2201 = vmatpush1.bf16.msra.mxu0 0
    %2202 = vmatprep.subr.bf16.mxu0 0
    %2203 = vmatpush1.bf16.msra.mxu0 0
    %2204 = vmatprep.subr.bf16.mxu0 0
    %2205 = vmatpush1.bf16.msra.mxu0 %v1881
    %2206 = vmatprep.subr.bf16.mxu0 0
    %2207 = vmatpush1.bf16.msra.mxu0 %v1880
    %2208 = vmatprep.subr.bf16.mxu0 0
    %2209 = vmatpush1.bf16.msra.mxu0 %v1879
    %2210 = vmatprep.subr.bf16.mxu0 0
    %2211 = vmatpush1.bf16.msra.mxu0 %v1878
    %2212 = vmatprep.subr.bf16.mxu0 0
    %2213 = vmatpush2.bf16.msra.mxu0 0
    %2214 = vmatprep.subr.bf16.mxu0 0
    %2215 = vmatpush2.bf16.msra.mxu0 0
    %2216 = vmatprep.subr.bf16.mxu0 0
    %2217 = vmatpush2.bf16.msra.mxu0 0
    %2218 = vmatprep.subr.bf16.mxu0 0
    %2219 = vmatpush2.bf16.msra.mxu0 0
    %2220 = vmatprep.subr.bf16.mxu0 0
    %2221 = vmatpush2.bf16.msra.mxu0 0
    %2222 = vmatprep.subr.bf16.mxu0 0
    %2223 = vmatpush2.bf16.msra.mxu0 0
    %2224 = vmatprep.subr.bf16.mxu0 0
    %2225 = vmatpush2.bf16.msra.mxu0 0
    %2226 = vmatprep.subr.bf16.mxu0 0
    %2227 = vmatpush2.bf16.msra.mxu0 0
    %2228 = vmatprep.mubr.bf16.mxu0 0
    %2229 = vmatmul.mubr.bf16.gmra.mxu0 %v2194
    %v2230 = vpop.f32.mrf.mxu0
    %v2231 = vadd.f32 0.0, %v2230
    %v2232 = vpop.f32.mrf.mxu0
    %v2233 = vpop.f32.mrf.mxu0
    %v2234 = vpop.f32.mrf.mxu0
    %2235 = vdwg.mxu0
    %2236 = vmatprep.subr.bf16.mxu0 0
    %2237 = vmatpush1.bf16.msra.mxu0 0
    %2238 = vmatprep.subr.bf16.mxu0 0
    %2239 = vmatpush1.bf16.msra.mxu0 0
    %2240 = vmatprep.subr.bf16.mxu0 0
    %2241 = vmatpush1.bf16.msra.mxu0 0
    %2242 = vmatprep.subr.bf16.mxu0 0
    %2243 = vmatpush1.bf16.msra.mxu0 0
    %2244 = vmatprep.subr.bf16.mxu0 0
    %2245 = vmatpush1.bf16.msra.mxu0 %v1948
    %2246 = vmatprep.subr.bf16.mxu0 0
    %2247 = vmatpush1.bf16.msra.mxu0 %v1947
    %2248 = vmatprep.subr.bf16.mxu0 0
    %2249 = vmatpush1.bf16.msra.mxu0 %v1946
    %2250 = vmatprep.subr.bf16.mxu0 0
    %2251 = vmatpush1.bf16.msra.mxu0 %v1945
    %2252 = vmatprep.subr.bf16.mxu0 0
    %2253 = vmatpush2.bf16.msra.mxu0 0
    %2254 = vmatprep.subr.bf16.mxu0 0
    %2255 = vmatpush2.bf16.msra.mxu0 0
    %2256 = vmatprep.subr.bf16.mxu0 0
    %2257 = vmatpush2.bf16.msra.mxu0 0
    %2258 = vmatprep.subr.bf16.mxu0 0
    %2259 = vmatpush2.bf16.msra.mxu0 0
    %2260 = vmatprep.subr.bf16.mxu0 0
    %2261 = vmatpush2.bf16.msra.mxu0 0
    %2262 = vmatprep.subr.bf16.mxu0 0
    %2263 = vmatpush2.bf16.msra.mxu0 0
    %2264 = vmatprep.subr.bf16.mxu0 0
    %2265 = vmatpush2.bf16.msra.mxu0 0
    %2266 = vmatprep.subr.bf16.mxu0 0
    %2267 = vmatpush2.bf16.msra.mxu0 0
    %2268 = vmatprep.mubr.bf16.mxu0 0
    %2269 = vmatmul.mubr.bf16.gmra.mxu0 %v2194
    %v2270 = vpop.f32.mrf.mxu0
    %v2271 = vadd.f32 0.0, %v2270
    %v2272 = vpop.f32.mrf.mxu0
    %v2273 = vpop.f32.mrf.mxu0
    %v2274 = vpop.f32.mrf.mxu0
    %2275 = vdwg.mxu0
    %2276 = vmatprep.subr.bf16.mxu0 0
    %2277 = vmatpush1.bf16.msra.mxu0 0
    %2278 = vmatprep.subr.bf16.mxu0 0
    %2279 = vmatpush1.bf16.msra.mxu0 0
    %2280 = vmatprep.subr.bf16.mxu0 0
    %2281 = vmatpush1.bf16.msra.mxu0 0
    %2282 = vmatprep.subr.bf16.mxu0 0
    %2283 = vmatpush1.bf16.msra.mxu0 0
    %2284 = vmatprep.subr.bf16.mxu0 0
    %2285 = vmatpush1.bf16.msra.mxu0 %v2018
    %2286 = vmatprep.subr.bf16.mxu0 0
    %2287 = vmatpush1.bf16.msra.mxu0 %v2017
    %2288 = vmatprep.subr.bf16.mxu0 0
    %2289 = vmatpush1.bf16.msra.mxu0 %v2016
    %2290 = vmatprep.subr.bf16.mxu0 0
    %2291 = vmatpush1.bf16.msra.mxu0 %v2015
    %2292 = vmatprep.subr.bf16.mxu0 0
    %2293 = vmatpush2.bf16.msra.mxu0 0
    %2294 = vmatprep.subr.bf16.mxu0 0
    %2295 = vmatpush2.bf16.msra.mxu0 0
    %2296 = vmatprep.subr.bf16.mxu0 0
    %2297 = vmatpush2.bf16.msra.mxu0 0
    %2298 = vmatprep.subr.bf16.mxu0 0
    %2299 = vmatpush2.bf16.msra.mxu0 0
    %2300 = vmatprep.subr.bf16.mxu0 0
    %2301 = vmatpush2.bf16.msra.mxu0 0
    %2302 = vmatprep.subr.bf16.mxu0 0
    %2303 = vmatpush2.bf16.msra.mxu0 0
    %2304 = vmatprep.subr.bf16.mxu0 0
    %2305 = vmatpush2.bf16.msra.mxu0 0
    %2306 = vmatprep.subr.bf16.mxu0 0
    %2307 = vmatpush2.bf16.msra.mxu0 0
    %2308 = vmatprep.mubr.bf16.mxu0 0
    %2309 = vmatmul.mubr.bf16.gmra.mxu0 %v2194
    %v2310 = vpop.f32.mrf.mxu0
    %v2311 = vadd.f32 %v1997, %v2310
    %v2312 = vpop.f32.mrf.mxu0
    %v2313 = vpop.f32.mrf.mxu0
    %v2314 = vpop.f32.mrf.mxu0
    %2315 = vdwg.mxu0
    %v2317 = vrot.slane %v2231, 7
    %v2318 = vrot.slane %v2231, 1
    %v2319 = vrot.slane %v2231, 2
    %v2324 = vadd.f32 %v1679, %v2317
    %v2325 = vadd.f32 %v1682, %v2231
    %v2326 = vadd.f32 %v1687, %v2318
    %v2327 = vadd.f32 %v1690, %v2319
    %v2328 = vxor.u32 %v2324, 2147483648
    %v2329 = vxor.u32 %v2325, 2147483648
    %v2330 = vxor.u32 %v2326, 2147483648
    %v2331 = vxor.u32 %v2327, 2147483648
    %v2332 = vmul.f32 %v2328, 1.442695
    %v2333 = vpow.pop %v2332
    %v2334 = vmul.f32 %v2329, 1.442695
    %v2335 = vpow.pop %v2334
    %v2336 = vmul.f32 %v2330, 1.442695
    %v2337 = vpow.pop %v2336
    %v2338 = vmul.f32 %v2331, 1.442695
    %v2339 = vpow.pop %v2338
    %v2340 = vadd.f32 %v2333, 1.0
    %v2341 = vadd.f32 %v2335, 1.0
    %v2342 = vadd.f32 %v2337, 1.0
    %v2343 = vadd.f32 %v2339, 1.0
    %v2344 = vrcp.pop %v2340
    %v2345 = vmul.f32 1.0, %v2344
    %v2346 = vrcp.pop %v2341
    %v2347 = vmul.f32 1.0, %v2346
    %v2348 = vrcp.pop %v2342
    %v2349 = vmul.f32 1.0, %v2348
    %v2350 = vrcp.pop %v2343
    %v2351 = vmul.f32 1.0, %v2350
    %v2353 = vrot.slane %v2271, 7
    %v2354 = vrot.slane %v2271, 1
    %v2355 = vrot.slane %v2271, 2
    %v2360 = vadd.f32 %v1751, %v2353
    %v2361 = vadd.f32 %v1754, %v2271
    %v2362 = vadd.f32 %v1759, %v2354
    %v2363 = vadd.f32 %v1762, %v2355
    %v2364 = vxor.u32 %v2360, 2147483648
    %v2365 = vxor.u32 %v2361, 2147483648
    %v2366 = vxor.u32 %v2362, 2147483648
    %v2367 = vxor.u32 %v2363, 2147483648
    %v2368 = vmul.f32 %v2364, 1.442695
    %v2369 = vpow.pop %v2368
    %v2370 = vmul.f32 %v2365, 1.442695
    %v2371 = vpow.pop %v2370
    %v2372 = vmul.f32 %v2366, 1.442695
    %v2373 = vpow.pop %v2372
    %v2374 = vmul.f32 %v2367, 1.442695
    %v2375 = vpow.pop %v2374
    %v2376 = vadd.f32 %v2369, 1.0
    %v2377 = vadd.f32 %v2371, 1.0
    %v2378 = vadd.f32 %v2373, 1.0
    %v2379 = vadd.f32 %v2375, 1.0
    %v2380 = vrcp.pop %v2376
    %v2381 = vmul.f32 1.0, %v2380
    %v2382 = vrcp.pop %v2377
    %v2383 = vmul.f32 1.0, %v2382
    %v2384 = vrcp.pop %v2378
    %v2385 = vmul.f32 1.0, %v2384
    %v2386 = vrcp.pop %v2379
    %v2387 = vmul.f32 1.0, %v2386
    %v2389 = vrot.slane %v2311, 7
    %v2390 = vrot.slane %v2311, 1
    %v2391 = vrot.slane %v2311, 2
    %v2396 = vmul.f32 %v2345, %v2389
    %v2397 = vmul.f32 %v2347, %v2311
    %v2398 = vmul.f32 %v2349, %v2390
    %v2399 = vmul.f32 %v2351, %v2391
    %v2400 = vadd.f32 %v1823, %v2396
    %v2401 = vadd.f32 %v1826, %v2397
    %v2402 = vadd.f32 %v1831, %v2398
    %v2403 = vadd.f32 %v1834, %v2399
    %v2404 = vtanh.pop %v2400
    %v2405 = vtanh.pop %v2401
    %v2406 = vtanh.pop %v2402
    %v2407 = vtanh.pop %v2403
    %v2408 = vsub.f32 1.0, %v2381
    %v2409 = vsub.f32 1.0, %v2383
    %v2410 = vsub.f32 1.0, %v2385
    %v2411 = vsub.f32 1.0, %v2387
    %v2412 = vmul.f32 %v2408, %v2404
    %v2413 = vmul.f32 %v2409, %v2405
    %v2414 = vmul.f32 %v2410, %v2406
    %v2415 = vmul.f32 %v2411, %v2407
    %v2420 = vrot.slane %v2167, 7
    %v2421 = vrot.slane %v2168, 7
    %v2422 = vrot.slane %v2169, 7
    %v2423 = vrot.slane %v2170, 7
    %v2428 = vmul.f32 %v2381, %v2420
    %v2429 = vmul.f32 %v2383, %v2421
    %v2430 = vmul.f32 %v2385, %v2422
    %v2431 = vmul.f32 %v2387, %v2423
    %v2432 = vadd.f32 %v2412, %v2428
    %v2433 = vadd.f32 %v2413, %v2429
    %v2434 = vadd.f32 %v2414, %v2430
    %v2435 = vadd.f32 %v2415, %v2431
    %v2436 = vpack.c.bf16 %v2432, %v2432
    %v2437 = vpack.c.bf16 %v2433, %v2433
    %v2438 = vpack.c.bf16 %v2434, %v2434
    %v2439 = vpack.c.bf16 %v2435, %v2435
    %v2444 = vunpack.c.l.b16 %v2436
    %v2445 = vunpack.c.l.b16 %v2437
    %v2446 = vunpack.c.l.b16 %v2438
    %v2447 = vunpack.c.l.b16 %v2439
    %v2448 = vrot.slane %v2444, 1
    %v2449 = vsel %vm2184, %v2445, %v2448
    %v2450 = vrot.slane %v2446, 7
    %v2451 = vsel %vm2187, %v2450, %v2449
    %v2452 = vrot.slane %v2447, 6
    %v2453 = vsel %vm2190, %v2452, %v2451
    %v2454 = vpack.c.b16 %v2453, %v2453
    %v2456 = vsel %vm1433, %v2454, 0
    %2458 = vmatprep.subr.bf16.mxu0 0
    %2459 = vmatpush1.bf16.msra.mxu0 0
    %2460 = vmatprep.subr.bf16.mxu0 0
    %2461 = vmatpush1.bf16.msra.mxu0 0
    %2462 = vmatprep.subr.bf16.mxu0 0
    %2463 = vmatpush1.bf16.msra.mxu0 0
    %2464 = vmatprep.subr.bf16.mxu0 0
    %2465 = vmatpush1.bf16.msra.mxu0 0
    %2466 = vmatprep.subr.bf16.mxu0 0
    %2467 = vmatpush1.bf16.msra.mxu0 %v1881
    %2468 = vmatprep.subr.bf16.mxu0 0
    %2469 = vmatpush1.bf16.msra.mxu0 %v1880
    %2470 = vmatprep.subr.bf16.mxu0 0
    %2471 = vmatpush1.bf16.msra.mxu0 %v1879
    %2472 = vmatprep.subr.bf16.mxu0 0
    %2473 = vmatpush1.bf16.msra.mxu0 %v1878
    %2474 = vmatprep.subr.bf16.mxu0 0
    %2475 = vmatpush2.bf16.msra.mxu0 0
    %2476 = vmatprep.subr.bf16.mxu0 0
    %2477 = vmatpush2.bf16.msra.mxu0 0
    %2478 = vmatprep.subr.bf16.mxu0 0
    %2479 = vmatpush2.bf16.msra.mxu0 0
    %2480 = vmatprep.subr.bf16.mxu0 0
    %2481 = vmatpush2.bf16.msra.mxu0 0
    %2482 = vmatprep.subr.bf16.mxu0 0
    %2483 = vmatpush2.bf16.msra.mxu0 0
    %2484 = vmatprep.subr.bf16.mxu0 0
    %2485 = vmatpush2.bf16.msra.mxu0 0
    %2486 = vmatprep.subr.bf16.mxu0 0
    %2487 = vmatpush2.bf16.msra.mxu0 0
    %2488 = vmatprep.subr.bf16.mxu0 0
    %2489 = vmatpush2.bf16.msra.mxu0 0
    %2490 = vmatprep.mubr.bf16.mxu0 0
    %2491 = vmatmul.mubr.bf16.gmra.mxu0 %v2456
    %v2492 = vpop.f32.mrf.mxu0
    %v2493 = vadd.f32 0.0, %v2492
    %v2494 = vpop.f32.mrf.mxu0
    %v2495 = vpop.f32.mrf.mxu0
    %v2496 = vpop.f32.mrf.mxu0
    %2497 = vdwg.mxu0
    %2498 = vmatprep.subr.bf16.mxu0 0
    %2499 = vmatpush1.bf16.msra.mxu0 0
    %2500 = vmatprep.subr.bf16.mxu0 0
    %2501 = vmatpush1.bf16.msra.mxu0 0
    %2502 = vmatprep.subr.bf16.mxu0 0
    %2503 = vmatpush1.bf16.msra.mxu0 0
    %2504 = vmatprep.subr.bf16.mxu0 0
    %2505 = vmatpush1.bf16.msra.mxu0 0
    %2506 = vmatprep.subr.bf16.mxu0 0
    %2507 = vmatpush1.bf16.msra.mxu0 %v1948
    %2508 = vmatprep.subr.bf16.mxu0 0
    %2509 = vmatpush1.bf16.msra.mxu0 %v1947
    %2510 = vmatprep.subr.bf16.mxu0 0
    %2511 = vmatpush1.bf16.msra.mxu0 %v1946
    %2512 = vmatprep.subr.bf16.mxu0 0
    %2513 = vmatpush1.bf16.msra.mxu0 %v1945
    %2514 = vmatprep.subr.bf16.mxu0 0
    %2515 = vmatpush2.bf16.msra.mxu0 0
    %2516 = vmatprep.subr.bf16.mxu0 0
    %2517 = vmatpush2.bf16.msra.mxu0 0
    %2518 = vmatprep.subr.bf16.mxu0 0
    %2519 = vmatpush2.bf16.msra.mxu0 0
    %2520 = vmatprep.subr.bf16.mxu0 0
    %2521 = vmatpush2.bf16.msra.mxu0 0
    %2522 = vmatprep.subr.bf16.mxu0 0
    %2523 = vmatpush2.bf16.msra.mxu0 0
    %2524 = vmatprep.subr.bf16.mxu0 0
    %2525 = vmatpush2.bf16.msra.mxu0 0
    %2526 = vmatprep.subr.bf16.mxu0 0
    %2527 = vmatpush2.bf16.msra.mxu0 0
    %2528 = vmatprep.subr.bf16.mxu0 0
    %2529 = vmatpush2.bf16.msra.mxu0 0
    %2530 = vmatprep.mubr.bf16.mxu0 0
    %2531 = vmatmul.mubr.bf16.gmra.mxu0 %v2456
    %v2532 = vpop.f32.mrf.mxu0
    %v2533 = vadd.f32 0.0, %v2532
    %v2534 = vpop.f32.mrf.mxu0
    %v2535 = vpop.f32.mrf.mxu0
    %v2536 = vpop.f32.mrf.mxu0
    %2537 = vdwg.mxu0
    %2538 = vmatprep.subr.bf16.mxu0 0
    %2539 = vmatpush1.bf16.msra.mxu0 0
    %2540 = vmatprep.subr.bf16.mxu0 0
    %2541 = vmatpush1.bf16.msra.mxu0 0
    %2542 = vmatprep.subr.bf16.mxu0 0
    %2543 = vmatpush1.bf16.msra.mxu0 0
    %2544 = vmatprep.subr.bf16.mxu0 0
    %2545 = vmatpush1.bf16.msra.mxu0 0
    %2546 = vmatprep.subr.bf16.mxu0 0
    %2547 = vmatpush1.bf16.msra.mxu0 %v2018
    %2548 = vmatprep.subr.bf16.mxu0 0
    %2549 = vmatpush1.bf16.msra.mxu0 %v2017
    %2550 = vmatprep.subr.bf16.mxu0 0
    %2551 = vmatpush1.bf16.msra.mxu0 %v2016
    %2552 = vmatprep.subr.bf16.mxu0 0
    %2553 = vmatpush1.bf16.msra.mxu0 %v2015
    %2554 = vmatprep.subr.bf16.mxu0 0
    %2555 = vmatpush2.bf16.msra.mxu0 0
    %2556 = vmatprep.subr.bf16.mxu0 0
    %2557 = vmatpush2.bf16.msra.mxu0 0
    %2558 = vmatprep.subr.bf16.mxu0 0
    %2559 = vmatpush2.bf16.msra.mxu0 0
    %2560 = vmatprep.subr.bf16.mxu0 0
    %2561 = vmatpush2.bf16.msra.mxu0 0
    %2562 = vmatprep.subr.bf16.mxu0 0
    %2563 = vmatpush2.bf16.msra.mxu0 0
    %2564 = vmatprep.subr.bf16.mxu0 0
    %2565 = vmatpush2.bf16.msra.mxu0 0
    %2566 = vmatprep.subr.bf16.mxu0 0
    %2567 = vmatpush2.bf16.msra.mxu0 0
    %2568 = vmatprep.subr.bf16.mxu0 0
    %2569 = vmatpush2.bf16.msra.mxu0 0
    %2570 = vmatprep.mubr.bf16.mxu0 0
    %2571 = vmatmul.mubr.bf16.gmra.mxu0 %v2456
    %v2572 = vpop.f32.mrf.mxu0
    %v2573 = vadd.f32 %v1997, %v2572
    %v2574 = vpop.f32.mrf.mxu0
    %v2575 = vpop.f32.mrf.mxu0
    %v2576 = vpop.f32.mrf.mxu0
    %2577 = vdwg.mxu0
    %v2579 = vrot.slane %v2493, 6
    %v2580 = vrot.slane %v2493, 7
    %v2581 = vrot.slane %v2493, 1
    %v2586 = vadd.f32 %v1679, %v2579
    %v2587 = vadd.f32 %v1682, %v2580
    %v2588 = vadd.f32 %v1687, %v2493
    %v2589 = vadd.f32 %v1690, %v2581
    %v2590 = vxor.u32 %v2586, 2147483648
    %v2591 = vxor.u32 %v2587, 2147483648
    %v2592 = vxor.u32 %v2588, 2147483648
    %v2593 = vxor.u32 %v2589, 2147483648
    %v2594 = vmul.f32 %v2590, 1.442695
    %v2595 = vpow.pop %v2594
    %v2596 = vmul.f32 %v2591, 1.442695
    %v2597 = vpow.pop %v2596
    %v2598 = vmul.f32 %v2592, 1.442695
    %v2599 = vpow.pop %v2598
    %v2600 = vmul.f32 %v2593, 1.442695
    %v2601 = vpow.pop %v2600
    %v2602 = vadd.f32 %v2595, 1.0
    %v2603 = vadd.f32 %v2597, 1.0
    %v2604 = vadd.f32 %v2599, 1.0
    %v2605 = vadd.f32 %v2601, 1.0
    %v2606 = vrcp.pop %v2602
    %v2607 = vmul.f32 1.0, %v2606
    %v2608 = vrcp.pop %v2603
    %v2609 = vmul.f32 1.0, %v2608
    %v2610 = vrcp.pop %v2604
    %v2611 = vmul.f32 1.0, %v2610
    %v2612 = vrcp.pop %v2605
    %v2613 = vmul.f32 1.0, %v2612
    %v2615 = vrot.slane %v2533, 6
    %v2616 = vrot.slane %v2533, 7
    %v2617 = vrot.slane %v2533, 1
    %v2622 = vadd.f32 %v1751, %v2615
    %v2623 = vadd.f32 %v1754, %v2616
    %v2624 = vadd.f32 %v1759, %v2533
    %v2625 = vadd.f32 %v1762, %v2617
    %v2626 = vxor.u32 %v2622, 2147483648
    %v2627 = vxor.u32 %v2623, 2147483648
    %v2628 = vxor.u32 %v2624, 2147483648
    %v2629 = vxor.u32 %v2625, 2147483648
    %v2630 = vmul.f32 %v2626, 1.442695
    %v2631 = vpow.pop %v2630
    %v2632 = vmul.f32 %v2627, 1.442695
    %v2633 = vpow.pop %v2632
    %v2634 = vmul.f32 %v2628, 1.442695
    %v2635 = vpow.pop %v2634
    %v2636 = vmul.f32 %v2629, 1.442695
    %v2637 = vpow.pop %v2636
    %v2638 = vadd.f32 %v2631, 1.0
    %v2639 = vadd.f32 %v2633, 1.0
    %v2640 = vadd.f32 %v2635, 1.0
    %v2641 = vadd.f32 %v2637, 1.0
    %v2642 = vrcp.pop %v2638
    %v2643 = vmul.f32 1.0, %v2642
    %v2644 = vrcp.pop %v2639
    %v2645 = vmul.f32 1.0, %v2644
    %v2646 = vrcp.pop %v2640
    %v2647 = vmul.f32 1.0, %v2646
    %v2648 = vrcp.pop %v2641
    %v2649 = vmul.f32 1.0, %v2648
    %v2651 = vrot.slane %v2573, 6
    %v2652 = vrot.slane %v2573, 7
    %v2653 = vrot.slane %v2573, 1
    %v2658 = vmul.f32 %v2607, %v2651
    %v2659 = vmul.f32 %v2609, %v2652
    %v2660 = vmul.f32 %v2611, %v2573
    %v2661 = vmul.f32 %v2613, %v2653
    %v2662 = vadd.f32 %v1823, %v2658
    %v2663 = vadd.f32 %v1826, %v2659
    %v2664 = vadd.f32 %v1831, %v2660
    %v2665 = vadd.f32 %v1834, %v2661
    %v2666 = vtanh.pop %v2662
    %v2667 = vtanh.pop %v2663
    %v2668 = vtanh.pop %v2664
    %v2669 = vtanh.pop %v2665
    %v2670 = vsub.f32 1.0, %v2643
    %v2671 = vsub.f32 1.0, %v2645
    %v2672 = vsub.f32 1.0, %v2647
    %v2673 = vsub.f32 1.0, %v2649
    %v2674 = vmul.f32 %v2670, %v2666
    %v2675 = vmul.f32 %v2671, %v2667
    %v2676 = vmul.f32 %v2672, %v2668
    %v2677 = vmul.f32 %v2673, %v2669
    %v2682 = vrot.slane %v2432, 7
    %v2683 = vrot.slane %v2433, 7
    %v2684 = vrot.slane %v2434, 7
    %v2685 = vrot.slane %v2435, 7
    %v2690 = vmul.f32 %v2643, %v2682
    %v2691 = vmul.f32 %v2645, %v2683
    %v2692 = vmul.f32 %v2647, %v2684
    %v2693 = vmul.f32 %v2649, %v2685
    %v2694 = vadd.f32 %v2674, %v2690
    %v2695 = vadd.f32 %v2675, %v2691
    %v2696 = vadd.f32 %v2676, %v2692
    %v2697 = vadd.f32 %v2677, %v2693
    %v2698 = vpack.c.bf16 %v2694, %v2694
    %v2699 = vpack.c.bf16 %v2695, %v2695
    %v2700 = vpack.c.bf16 %v2696, %v2696
    %v2701 = vpack.c.bf16 %v2697, %v2697
    %v2706 = vunpack.c.l.b16 %v2698
    %v2707 = vunpack.c.l.b16 %v2699
    %v2708 = vunpack.c.l.b16 %v2700
    %v2709 = vunpack.c.l.b16 %v2701
    %v2710 = vrot.slane %v2706, 2
    %v2711 = vrot.slane %v2707, 1
    %v2712 = vsel %vm2184, %v2711, %v2710
    %v2713 = vsel %vm2187, %v2708, %v2712
    %v2714 = vrot.slane %v2709, 7
    %v2715 = vsel %vm2190, %v2714, %v2713
    %v2716 = vpack.c.b16 %v2715, %v2715
    %v2718 = vsel %vm1433, %v2716, 0
    %2720 = vmatprep.subr.bf16.mxu0 0
    %2721 = vmatpush1.bf16.msra.mxu0 0
    %2722 = vmatprep.subr.bf16.mxu0 0
    %2723 = vmatpush1.bf16.msra.mxu0 0
    %2724 = vmatprep.subr.bf16.mxu0 0
    %2725 = vmatpush1.bf16.msra.mxu0 0
    %2726 = vmatprep.subr.bf16.mxu0 0
    %2727 = vmatpush1.bf16.msra.mxu0 0
    %2728 = vmatprep.subr.bf16.mxu0 0
    %2729 = vmatpush1.bf16.msra.mxu0 %v1881
    %2730 = vmatprep.subr.bf16.mxu0 0
    %2731 = vmatpush1.bf16.msra.mxu0 %v1880
    %2732 = vmatprep.subr.bf16.mxu0 0
    %2733 = vmatpush1.bf16.msra.mxu0 %v1879
    %2734 = vmatprep.subr.bf16.mxu0 0
    %2735 = vmatpush1.bf16.msra.mxu0 %v1878
    %2736 = vmatprep.subr.bf16.mxu0 0
    %2737 = vmatpush2.bf16.msra.mxu0 0
    %2738 = vmatprep.subr.bf16.mxu0 0
    %2739 = vmatpush2.bf16.msra.mxu0 0
    %2740 = vmatprep.subr.bf16.mxu0 0
    %2741 = vmatpush2.bf16.msra.mxu0 0
    %2742 = vmatprep.subr.bf16.mxu0 0
    %2743 = vmatpush2.bf16.msra.mxu0 0
    %2744 = vmatprep.subr.bf16.mxu0 0
    %2745 = vmatpush2.bf16.msra.mxu0 0
    %2746 = vmatprep.subr.bf16.mxu0 0
    %2747 = vmatpush2.bf16.msra.mxu0 0
    %2748 = vmatprep.subr.bf16.mxu0 0
    %2749 = vmatpush2.bf16.msra.mxu0 0
    %2750 = vmatprep.subr.bf16.mxu0 0
    %2751 = vmatpush2.bf16.msra.mxu0 0
    %2752 = vmatprep.mubr.bf16.mxu0 0
    %2753 = vmatmul.mubr.bf16.gmra.mxu0 %v2718
    %v2754 = vpop.f32.mrf.mxu0
    %v2755 = vadd.f32 0.0, %v2754
    %v2756 = vpop.f32.mrf.mxu0
    %v2757 = vpop.f32.mrf.mxu0
    %v2758 = vpop.f32.mrf.mxu0
    %2759 = vdwg.mxu0
    %2760 = vmatprep.subr.bf16.mxu0 0
    %2761 = vmatpush1.bf16.msra.mxu0 0
    %2762 = vmatprep.subr.bf16.mxu0 0
    %2763 = vmatpush1.bf16.msra.mxu0 0
    %2764 = vmatprep.subr.bf16.mxu0 0
    %2765 = vmatpush1.bf16.msra.mxu0 0
    %2766 = vmatprep.subr.bf16.mxu0 0
    %2767 = vmatpush1.bf16.msra.mxu0 0
    %2768 = vmatprep.subr.bf16.mxu0 0
    %2769 = vmatpush1.bf16.msra.mxu0 %v1948
    %2770 = vmatprep.subr.bf16.mxu0 0
    %2771 = vmatpush1.bf16.msra.mxu0 %v1947
    %2772 = vmatprep.subr.bf16.mxu0 0
    %2773 = vmatpush1.bf16.msra.mxu0 %v1946
    %2774 = vmatprep.subr.bf16.mxu0 0
    %2775 = vmatpush1.bf16.msra.mxu0 %v1945
    %2776 = vmatprep.subr.bf16.mxu0 0
    %2777 = vmatpush2.bf16.msra.mxu0 0
    %2778 = vmatprep.subr.bf16.mxu0 0
    %2779 = vmatpush2.bf16.msra.mxu0 0
    %2780 = vmatprep.subr.bf16.mxu0 0
    %2781 = vmatpush2.bf16.msra.mxu0 0
    %2782 = vmatprep.subr.bf16.mxu0 0
    %2783 = vmatpush2.bf16.msra.mxu0 0
    %2784 = vmatprep.subr.bf16.mxu0 0
    %2785 = vmatpush2.bf16.msra.mxu0 0
    %2786 = vmatprep.subr.bf16.mxu0 0
    %2787 = vmatpush2.bf16.msra.mxu0 0
    %2788 = vmatprep.subr.bf16.mxu0 0
    %2789 = vmatpush2.bf16.msra.mxu0 0
    %2790 = vmatprep.subr.bf16.mxu0 0
    %2791 = vmatpush2.bf16.msra.mxu0 0
    %2792 = vmatprep.mubr.bf16.mxu0 0
    %2793 = vmatmul.mubr.bf16.gmra.mxu0 %v2718
    %v2794 = vpop.f32.mrf.mxu0
    %v2795 = vadd.f32 0.0, %v2794
    %v2796 = vpop.f32.mrf.mxu0
    %v2797 = vpop.f32.mrf.mxu0
    %v2798 = vpop.f32.mrf.mxu0
    %2799 = vdwg.mxu0
    %2800 = vmatprep.subr.bf16.mxu0 0
    %2801 = vmatpush1.bf16.msra.mxu0 0
    %2802 = vmatprep.subr.bf16.mxu0 0
    %2803 = vmatpush1.bf16.msra.mxu0 0
    %2804 = vmatprep.subr.bf16.mxu0 0
    %2805 = vmatpush1.bf16.msra.mxu0 0
    %2806 = vmatprep.subr.bf16.mxu0 0
    %2807 = vmatpush1.bf16.msra.mxu0 0
    %2808 = vmatprep.subr.bf16.mxu0 0
    %2809 = vmatpush1.bf16.msra.mxu0 %v2018
    %2810 = vmatprep.subr.bf16.mxu0 0
    %2811 = vmatpush1.bf16.msra.mxu0 %v2017
    %2812 = vmatprep.subr.bf16.mxu0 0
    %2813 = vmatpush1.bf16.msra.mxu0 %v2016
    %2814 = vmatprep.subr.bf16.mxu0 0
    %2815 = vmatpush1.bf16.msra.mxu0 %v2015
    %2816 = vmatprep.subr.bf16.mxu0 0
    %2817 = vmatpush2.bf16.msra.mxu0 0
    %2818 = vmatprep.subr.bf16.mxu0 0
    %2819 = vmatpush2.bf16.msra.mxu0 0
    %2820 = vmatprep.subr.bf16.mxu0 0
    %2821 = vmatpush2.bf16.msra.mxu0 0
    %2822 = vmatprep.subr.bf16.mxu0 0
    %2823 = vmatpush2.bf16.msra.mxu0 0
    %2824 = vmatprep.subr.bf16.mxu0 0
    %2825 = vmatpush2.bf16.msra.mxu0 0
    %2826 = vmatprep.subr.bf16.mxu0 0
    %2827 = vmatpush2.bf16.msra.mxu0 0
    %2828 = vmatprep.subr.bf16.mxu0 0
    %2829 = vmatpush2.bf16.msra.mxu0 0
    %2830 = vmatprep.subr.bf16.mxu0 0
    %2831 = vmatpush2.bf16.msra.mxu0 0
    %2832 = vmatprep.mubr.bf16.mxu0 0
    %2833 = vmatmul.mubr.bf16.gmra.mxu0 %v2718
    %v2834 = vpop.f32.mrf.mxu0
    %v2835 = vadd.f32 %v1997, %v2834
    %v2836 = vpop.f32.mrf.mxu0
    %v2837 = vpop.f32.mrf.mxu0
    %v2838 = vpop.f32.mrf.mxu0
    %2839 = vdwg.mxu0
    %v2841 = vrot.slane %v2755, 5
    %v2842 = vrot.slane %v2755, 6
    %v2843 = vrot.slane %v2755, 7
    %v2848 = vadd.f32 %v1679, %v2841
    %v2849 = vadd.f32 %v1682, %v2842
    %v2850 = vadd.f32 %v1687, %v2843
    %v2851 = vadd.f32 %v1690, %v2755
    %v2852 = vxor.u32 %v2848, 2147483648
    %v2853 = vxor.u32 %v2849, 2147483648
    %v2854 = vxor.u32 %v2850, 2147483648
    %v2855 = vxor.u32 %v2851, 2147483648
    %v2856 = vmul.f32 %v2852, 1.442695
    %v2857 = vpow.pop %v2856
    %v2858 = vmul.f32 %v2853, 1.442695
    %v2859 = vpow.pop %v2858
    %v2860 = vmul.f32 %v2854, 1.442695
    %v2861 = vpow.pop %v2860
    %v2862 = vmul.f32 %v2855, 1.442695
    %v2863 = vpow.pop %v2862
    %v2864 = vadd.f32 %v2857, 1.0
    %v2865 = vadd.f32 %v2859, 1.0
    %v2866 = vadd.f32 %v2861, 1.0
    %v2867 = vadd.f32 %v2863, 1.0
    %v2868 = vrcp.pop %v2864
    %v2869 = vmul.f32 1.0, %v2868
    %v2870 = vrcp.pop %v2865
    %v2871 = vmul.f32 1.0, %v2870
    %v2872 = vrcp.pop %v2866
    %v2873 = vmul.f32 1.0, %v2872
    %v2874 = vrcp.pop %v2867
    %v2875 = vmul.f32 1.0, %v2874
    %v2877 = vrot.slane %v2795, 5
    %v2878 = vrot.slane %v2795, 6
    %v2879 = vrot.slane %v2795, 7
    %v2884 = vadd.f32 %v1751, %v2877
    %v2885 = vadd.f32 %v1754, %v2878
    %v2886 = vadd.f32 %v1759, %v2879
    %v2887 = vadd.f32 %v1762, %v2795
    %v2888 = vxor.u32 %v2884, 2147483648
    %v2889 = vxor.u32 %v2885, 2147483648
    %v2890 = vxor.u32 %v2886, 2147483648
    %v2891 = vxor.u32 %v2887, 2147483648
    %v2892 = vmul.f32 %v2888, 1.442695
    %v2893 = vpow.pop %v2892
    %v2894 = vmul.f32 %v2889, 1.442695
    %v2895 = vpow.pop %v2894
    %v2896 = vmul.f32 %v2890, 1.442695
    %v2897 = vpow.pop %v2896
    %v2898 = vmul.f32 %v2891, 1.442695
    %v2899 = vpow.pop %v2898
    %v2900 = vadd.f32 %v2893, 1.0
    %v2901 = vadd.f32 %v2895, 1.0
    %v2902 = vadd.f32 %v2897, 1.0
    %v2903 = vadd.f32 %v2899, 1.0
    %v2904 = vrcp.pop %v2900
    %v2905 = vmul.f32 1.0, %v2904
    %v2906 = vrcp.pop %v2901
    %v2907 = vmul.f32 1.0, %v2906
    %v2908 = vrcp.pop %v2902
    %v2909 = vmul.f32 1.0, %v2908
    %v2910 = vrcp.pop %v2903
    %v2911 = vmul.f32 1.0, %v2910
    %v2913 = vrot.slane %v2835, 5
    %v2914 = vrot.slane %v2835, 6
    %v2915 = vrot.slane %v2835, 7
    %v2920 = vmul.f32 %v2869, %v2913
    %v2921 = vmul.f32 %v2871, %v2914
    %v2922 = vmul.f32 %v2873, %v2915
    %v2923 = vmul.f32 %v2875, %v2835
    %v2924 = vadd.f32 %v1823, %v2920
    %v2925 = vadd.f32 %v1826, %v2921
    %v2926 = vadd.f32 %v1831, %v2922
    %v2927 = vadd.f32 %v1834, %v2923
    %v2928 = vtanh.pop %v2924
    %v2929 = vtanh.pop %v2925
    %v2930 = vtanh.pop %v2926
    %v2931 = vtanh.pop %v2927
    %v2932 = vsub.f32 1.0, %v2905
    %v2933 = vsub.f32 1.0, %v2907
    %v2934 = vsub.f32 1.0, %v2909
    %v2935 = vsub.f32 1.0, %v2911
    %v2936 = vmul.f32 %v2932, %v2928
    %v2937 = vmul.f32 %v2933, %v2929
    %v2938 = vmul.f32 %v2934, %v2930
    %v2939 = vmul.f32 %v2935, %v2931
    %v2944 = vrot.slane %v2694, 7
    %v2945 = vrot.slane %v2695, 7
    %v2946 = vrot.slane %v2696, 7
    %v2947 = vrot.slane %v2697, 7
    %v2952 = vmul.f32 %v2905, %v2944
    %v2953 = vmul.f32 %v2907, %v2945
    %v2954 = vmul.f32 %v2909, %v2946
    %v2955 = vmul.f32 %v2911, %v2947
    %v2956 = vadd.f32 %v2936, %v2952
    %v2957 = vadd.f32 %v2937, %v2953
    %v2958 = vadd.f32 %v2938, %v2954
    %v2959 = vadd.f32 %v2939, %v2955
    %v2960 = vpack.c.bf16 %v2956, %v2956
    %v2961 = vpack.c.bf16 %v2957, %v2957
    %v2962 = vpack.c.bf16 %v2958, %v2958
    %v2963 = vpack.c.bf16 %v2959, %v2959
    %v2968 = vunpack.c.l.b16 %v2960
    %v2969 = vunpack.c.l.b16 %v2961
    %v2970 = vunpack.c.l.b16 %v2962
    %v2971 = vunpack.c.l.b16 %v2963
    %v2972 = vrot.slane %v2968, 3
    %v2973 = vrot.slane %v2969, 2
    %v2974 = vsel %vm2184, %v2973, %v2972
    %v2975 = vrot.slane %v2970, 1
    %v2976 = vsel %vm2187, %v2975, %v2974
    %v2977 = vsel %vm2190, %v2971, %v2976
    %v2978 = vpack.c.b16 %v2977, %v2977
    %v2980 = vsel %vm1433, %v2978, 0
    %2982 = vmatprep.subr.bf16.mxu0 0
    %2983 = vmatpush1.bf16.msra.mxu0 0
    %2984 = vmatprep.subr.bf16.mxu0 0
    %2985 = vmatpush1.bf16.msra.mxu0 0
    %2986 = vmatprep.subr.bf16.mxu0 0
    %2987 = vmatpush1.bf16.msra.mxu0 0
    %2988 = vmatprep.subr.bf16.mxu0 0
    %2989 = vmatpush1.bf16.msra.mxu0 0
    %2990 = vmatprep.subr.bf16.mxu0 0
    %2991 = vmatpush1.bf16.msra.mxu0 %v1881
    %2992 = vmatprep.subr.bf16.mxu0 0
    %2993 = vmatpush1.bf16.msra.mxu0 %v1880
    %2994 = vmatprep.subr.bf16.mxu0 0
    %2995 = vmatpush1.bf16.msra.mxu0 %v1879
    %2996 = vmatprep.subr.bf16.mxu0 0
    %2997 = vmatpush1.bf16.msra.mxu0 %v1878
    %2998 = vmatprep.subr.bf16.mxu0 0
    %2999 = vmatpush2.bf16.msra.mxu0 0
    %3000 = vmatprep.subr.bf16.mxu0 0
    %3001 = vmatpush2.bf16.msra.mxu0 0
    %3002 = vmatprep.subr.bf16.mxu0 0
    %3003 = vmatpush2.bf16.msra.mxu0 0
    %3004 = vmatprep.subr.bf16.mxu0 0
    %3005 = vmatpush2.bf16.msra.mxu0 0
    %3006 = vmatprep.subr.bf16.mxu0 0
    %3007 = vmatpush2.bf16.msra.mxu0 0
    %3008 = vmatprep.subr.bf16.mxu0 0
    %3009 = vmatpush2.bf16.msra.mxu0 0
    %3010 = vmatprep.subr.bf16.mxu0 0
    %3011 = vmatpush2.bf16.msra.mxu0 0
    %3012 = vmatprep.subr.bf16.mxu0 0
    %3013 = vmatpush2.bf16.msra.mxu0 0
    %3014 = vmatprep.mubr.bf16.mxu0 0
    %3015 = vmatmul.mubr.bf16.gmra.mxu0 %v2980
    %v3016 = vpop.f32.mrf.mxu0
    %v3017 = vadd.f32 0.0, %v3016
    %v3018 = vpop.f32.mrf.mxu0
    %v3019 = vpop.f32.mrf.mxu0
    %v3020 = vpop.f32.mrf.mxu0
    %3021 = vdwg.mxu0
    %3022 = vmatprep.subr.bf16.mxu0 0
    %3023 = vmatpush1.bf16.msra.mxu0 0
    %3024 = vmatprep.subr.bf16.mxu0 0
    %3025 = vmatpush1.bf16.msra.mxu0 0
    %3026 = vmatprep.subr.bf16.mxu0 0
    %3027 = vmatpush1.bf16.msra.mxu0 0
    %3028 = vmatprep.subr.bf16.mxu0 0
    %3029 = vmatpush1.bf16.msra.mxu0 0
    %3030 = vmatprep.subr.bf16.mxu0 0
    %3031 = vmatpush1.bf16.msra.mxu0 %v1948
    %3032 = vmatprep.subr.bf16.mxu0 0
    %3033 = vmatpush1.bf16.msra.mxu0 %v1947
    %3034 = vmatprep.subr.bf16.mxu0 0
    %3035 = vmatpush1.bf16.msra.mxu0 %v1946
    %3036 = vmatprep.subr.bf16.mxu0 0
    %3037 = vmatpush1.bf16.msra.mxu0 %v1945
    %3038 = vmatprep.subr.bf16.mxu0 0
    %3039 = vmatpush2.bf16.msra.mxu0 0
    %3040 = vmatprep.subr.bf16.mxu0 0
    %3041 = vmatpush2.bf16.msra.mxu0 0
    %3042 = vmatprep.subr.bf16.mxu0 0
    %3043 = vmatpush2.bf16.msra.mxu0 0
    %3044 = vmatprep.subr.bf16.mxu0 0
    %3045 = vmatpush2.bf16.msra.mxu0 0
    %3046 = vmatprep.subr.bf16.mxu0 0
    %3047 = vmatpush2.bf16.msra.mxu0 0
    %3048 = vmatprep.subr.bf16.mxu0 0
    %3049 = vmatpush2.bf16.msra.mxu0 0
    %3050 = vmatprep.subr.bf16.mxu0 0
    %3051 = vmatpush2.bf16.msra.mxu0 0
    %3052 = vmatprep.subr.bf16.mxu0 0
    %3053 = vmatpush2.bf16.msra.mxu0 0
    %3054 = vmatprep.mubr.bf16.mxu0 0
    %3055 = vmatmul.mubr.bf16.gmra.mxu0 %v2980
    %v3056 = vpop.f32.mrf.mxu0
    %v3057 = vadd.f32 0.0, %v3056
    %v3058 = vpop.f32.mrf.mxu0
    %v3059 = vpop.f32.mrf.mxu0
    %v3060 = vpop.f32.mrf.mxu0
    %3061 = vdwg.mxu0
    %3062 = vmatprep.subr.bf16.mxu0 0
    %3063 = vmatpush1.bf16.msra.mxu0 0
    %3064 = vmatprep.subr.bf16.mxu0 0
    %3065 = vmatpush1.bf16.msra.mxu0 0
    %3066 = vmatprep.subr.bf16.mxu0 0
    %3067 = vmatpush1.bf16.msra.mxu0 0
    %3068 = vmatprep.subr.bf16.mxu0 0
    %3069 = vmatpush1.bf16.msra.mxu0 0
    %3070 = vmatprep.subr.bf16.mxu0 0
    %3071 = vmatpush1.bf16.msra.mxu0 %v2018
    %3072 = vmatprep.subr.bf16.mxu0 0
    %3073 = vmatpush1.bf16.msra.mxu0 %v2017
    %3074 = vmatprep.subr.bf16.mxu0 0
    %3075 = vmatpush1.bf16.msra.mxu0 %v2016
    %3076 = vmatprep.subr.bf16.mxu0 0
    %3077 = vmatpush1.bf16.msra.mxu0 %v2015
    %3078 = vmatprep.subr.bf16.mxu0 0
    %3079 = vmatpush2.bf16.msra.mxu0 0
    %3080 = vmatprep.subr.bf16.mxu0 0
    %3081 = vmatpush2.bf16.msra.mxu0 0
    %3082 = vmatprep.subr.bf16.mxu0 0
    %3083 = vmatpush2.bf16.msra.mxu0 0
    %3084 = vmatprep.subr.bf16.mxu0 0
    %3085 = vmatpush2.bf16.msra.mxu0 0
    %3086 = vmatprep.subr.bf16.mxu0 0
    %3087 = vmatpush2.bf16.msra.mxu0 0
    %3088 = vmatprep.subr.bf16.mxu0 0
    %3089 = vmatpush2.bf16.msra.mxu0 0
    %3090 = vmatprep.subr.bf16.mxu0 0
    %3091 = vmatpush2.bf16.msra.mxu0 0
    %3092 = vmatprep.subr.bf16.mxu0 0
    %3093 = vmatpush2.bf16.msra.mxu0 0
    %3094 = vmatprep.mubr.bf16.mxu0 0
    %3095 = vmatmul.mubr.bf16.gmra.mxu0 %v2980
    %v3096 = vpop.f32.mrf.mxu0
    %v3097 = vadd.f32 %v1997, %v3096
    %v3098 = vpop.f32.mrf.mxu0
    %v3099 = vpop.f32.mrf.mxu0
    %v3100 = vpop.f32.mrf.mxu0
    %3101 = vdwg.mxu0
    %v3103 = vrot.slane %v3017, 4
    %v3104 = vrot.slane %v3017, 5
    %v3105 = vrot.slane %v3017, 6
    %v3106 = vrot.slane %v3017, 7
    %v3111 = vadd.f32 %v1679, %v3103
    %v3112 = vadd.f32 %v1682, %v3104
    %v3113 = vadd.f32 %v1687, %v3105
    %v3114 = vadd.f32 %v1690, %v3106
    %v3115 = vxor.u32 %v3111, 2147483648
    %v3116 = vxor.u32 %v3112, 2147483648
    %v3117 = vxor.u32 %v3113, 2147483648
    %v3118 = vxor.u32 %v3114, 2147483648
    %v3119 = vmul.f32 %v3115, 1.442695
    %v3120 = vpow.pop %v3119
    %v3121 = vmul.f32 %v3116, 1.442695
    %v3122 = vpow.pop %v3121
    %v3123 = vmul.f32 %v3117, 1.442695
    %v3124 = vpow.pop %v3123
    %v3125 = vmul.f32 %v3118, 1.442695
    %v3126 = vpow.pop %v3125
    %v3127 = vadd.f32 %v3120, 1.0
    %v3128 = vadd.f32 %v3122, 1.0
    %v3129 = vadd.f32 %v3124, 1.0
    %v3130 = vadd.f32 %v3126, 1.0
    %v3131 = vrcp.pop %v3127
    %v3132 = vmul.f32 1.0, %v3131
    %v3133 = vrcp.pop %v3128
    %v3134 = vmul.f32 1.0, %v3133
    %v3135 = vrcp.pop %v3129
    %v3136 = vmul.f32 1.0, %v3135
    %v3137 = vrcp.pop %v3130
    %v3138 = vmul.f32 1.0, %v3137
    %v3140 = vrot.slane %v3057, 4
    %v3141 = vrot.slane %v3057, 5
    %v3142 = vrot.slane %v3057, 6
    %v3143 = vrot.slane %v3057, 7
    %v3148 = vadd.f32 %v1751, %v3140
    %v3149 = vadd.f32 %v1754, %v3141
    %v3150 = vadd.f32 %v1759, %v3142
    %v3151 = vadd.f32 %v1762, %v3143
    %v3152 = vxor.u32 %v3148, 2147483648
    %v3153 = vxor.u32 %v3149, 2147483648
    %v3154 = vxor.u32 %v3150, 2147483648
    %v3155 = vxor.u32 %v3151, 2147483648
    %v3156 = vmul.f32 %v3152, 1.442695
    %v3157 = vpow.pop %v3156
    %v3158 = vmul.f32 %v3153, 1.442695
    %v3159 = vpow.pop %v3158
    %v3160 = vmul.f32 %v3154, 1.442695
    %v3161 = vpow.pop %v3160
    %v3162 = vmul.f32 %v3155, 1.442695
    %v3163 = vpow.pop %v3162
    %v3164 = vadd.f32 %v3157, 1.0
    %v3165 = vadd.f32 %v3159, 1.0
    %v3166 = vadd.f32 %v3161, 1.0
    %v3167 = vadd.f32 %v3163, 1.0
    %v3168 = vrcp.pop %v3164
    %v3169 = vmul.f32 1.0, %v3168
    %v3170 = vrcp.pop %v3165
    %v3171 = vmul.f32 1.0, %v3170
    %v3172 = vrcp.pop %v3166
    %v3173 = vmul.f32 1.0, %v3172
    %v3174 = vrcp.pop %v3167
    %v3175 = vmul.f32 1.0, %v3174
    %v3177 = vrot.slane %v3097, 4
    %v3178 = vrot.slane %v3097, 5
    %v3179 = vrot.slane %v3097, 6
    %v3180 = vrot.slane %v3097, 7
    %v3185 = vmul.f32 %v3132, %v3177
    %v3186 = vmul.f32 %v3134, %v3178
    %v3187 = vmul.f32 %v3136, %v3179
    %v3188 = vmul.f32 %v3138, %v3180
    %v3189 = vadd.f32 %v1823, %v3185
    %v3190 = vadd.f32 %v1826, %v3186
    %v3191 = vadd.f32 %v1831, %v3187
    %v3192 = vadd.f32 %v1834, %v3188
    %v3193 = vtanh.pop %v3189
    %v3194 = vtanh.pop %v3190
    %v3195 = vtanh.pop %v3191
    %v3196 = vtanh.pop %v3192
    %v3197 = vsub.f32 1.0, %v3169
    %v3198 = vsub.f32 1.0, %v3171
    %v3199 = vsub.f32 1.0, %v3173
    %v3200 = vsub.f32 1.0, %v3175
    %v3201 = vmul.f32 %v3197, %v3193
    %v3202 = vmul.f32 %v3198, %v3194
    %v3203 = vmul.f32 %v3199, %v3195
    %v3204 = vmul.f32 %v3200, %v3196
    %v3209 = vrot.slane %v2956, 7
    %v3210 = vrot.slane %v2957, 7
    %v3211 = vrot.slane %v2958, 7
    %v3212 = vrot.slane %v2959, 7
    %v3217 = vmul.f32 %v3169, %v3209
    %v3218 = vmul.f32 %v3171, %v3210
    %v3219 = vmul.f32 %v3173, %v3211
    %v3220 = vmul.f32 %v3175, %v3212
    %v3221 = vadd.f32 %v3201, %v3217
    %v3222 = vadd.f32 %v3202, %v3218
    %v3223 = vadd.f32 %v3203, %v3219
    %v3224 = vadd.f32 %v3204, %v3220
    %v3225 = vpack.c.bf16 %v3221, %v3221
    %v3226 = vpack.c.bf16 %v3222, %v3222
    %v3227 = vpack.c.bf16 %v3223, %v3223
    %v3228 = vpack.c.bf16 %v3224, %v3224
    %v3233 = vunpack.c.l.b16 %v3225
    %v3234 = vunpack.c.l.b16 %v3226
    %v3235 = vunpack.c.l.b16 %v3227
    %v3236 = vunpack.c.l.b16 %v3228
    %v3237 = vrot.slane %v3233, 4
    %v3238 = vrot.slane %v3234, 3
    %v3239 = vsel %vm2184, %v3238, %v3237
    %v3240 = vrot.slane %v3235, 2
    %v3241 = vsel %vm2187, %v3240, %v3239
    %v3242 = vrot.slane %v3236, 1
    %v3243 = vsel %vm2190, %v3242, %v3241
    %v3244 = vpack.c.b16 %v3243, %v3243
    %v3246 = vsel %vm1433, %v3244, 0
    %3248 = vmatprep.subr.bf16.mxu0 0
    %3249 = vmatpush1.bf16.msra.mxu0 0
    %3250 = vmatprep.subr.bf16.mxu0 0
    %3251 = vmatpush1.bf16.msra.mxu0 0
    %3252 = vmatprep.subr.bf16.mxu0 0
    %3253 = vmatpush1.bf16.msra.mxu0 0
    %3254 = vmatprep.subr.bf16.mxu0 0
    %3255 = vmatpush1.bf16.msra.mxu0 0
    %3256 = vmatprep.subr.bf16.mxu0 0
    %3257 = vmatpush1.bf16.msra.mxu0 %v1881
    %3258 = vmatprep.subr.bf16.mxu0 0
    %3259 = vmatpush1.bf16.msra.mxu0 %v1880
    %3260 = vmatprep.subr.bf16.mxu0 0
    %3261 = vmatpush1.bf16.msra.mxu0 %v1879
    %3262 = vmatprep.subr.bf16.mxu0 0
    %3263 = vmatpush1.bf16.msra.mxu0 %v1878
    %3264 = vmatprep.subr.bf16.mxu0 0
    %3265 = vmatpush2.bf16.msra.mxu0 0
    %3266 = vmatprep.subr.bf16.mxu0 0
    %3267 = vmatpush2.bf16.msra.mxu0 0
    %3268 = vmatprep.subr.bf16.mxu0 0
    %3269 = vmatpush2.bf16.msra.mxu0 0
    %3270 = vmatprep.subr.bf16.mxu0 0
    %3271 = vmatpush2.bf16.msra.mxu0 0
    %3272 = vmatprep.subr.bf16.mxu0 0
    %3273 = vmatpush2.bf16.msra.mxu0 0
    %3274 = vmatprep.subr.bf16.mxu0 0
    %3275 = vmatpush2.bf16.msra.mxu0 0
    %3276 = vmatprep.subr.bf16.mxu0 0
    %3277 = vmatpush2.bf16.msra.mxu0 0
    %3278 = vmatprep.subr.bf16.mxu0 0
    %3279 = vmatpush2.bf16.msra.mxu0 0
    %3280 = vmatprep.mubr.bf16.mxu0 0
    %3281 = vmatmul.mubr.bf16.gmra.mxu0 %v3246
    %v3282 = vpop.f32.mrf.mxu0
    %v3283 = vadd.f32 0.0, %v3282
    %v3284 = vpop.f32.mrf.mxu0
    %v3285 = vpop.f32.mrf.mxu0
    %v3286 = vpop.f32.mrf.mxu0
    %3287 = vdwg.mxu0
    %3288 = vmatprep.subr.bf16.mxu0 0
    %3289 = vmatpush1.bf16.msra.mxu0 0
    %3290 = vmatprep.subr.bf16.mxu0 0
    %3291 = vmatpush1.bf16.msra.mxu0 0
    %3292 = vmatprep.subr.bf16.mxu0 0
    %3293 = vmatpush1.bf16.msra.mxu0 0
    %3294 = vmatprep.subr.bf16.mxu0 0
    %3295 = vmatpush1.bf16.msra.mxu0 0
    %3296 = vmatprep.subr.bf16.mxu0 0
    %3297 = vmatpush1.bf16.msra.mxu0 %v1948
    %3298 = vmatprep.subr.bf16.mxu0 0
    %3299 = vmatpush1.bf16.msra.mxu0 %v1947
    %3300 = vmatprep.subr.bf16.mxu0 0
    %3301 = vmatpush1.bf16.msra.mxu0 %v1946
    %3302 = vmatprep.subr.bf16.mxu0 0
    %3303 = vmatpush1.bf16.msra.mxu0 %v1945
    %3304 = vmatprep.subr.bf16.mxu0 0
    %3305 = vmatpush2.bf16.msra.mxu0 0
    %3306 = vmatprep.subr.bf16.mxu0 0
    %3307 = vmatpush2.bf16.msra.mxu0 0
    %3308 = vmatprep.subr.bf16.mxu0 0
    %3309 = vmatpush2.bf16.msra.mxu0 0
    %3310 = vmatprep.subr.bf16.mxu0 0
    %3311 = vmatpush2.bf16.msra.mxu0 0
    %3312 = vmatprep.subr.bf16.mxu0 0
    %3313 = vmatpush2.bf16.msra.mxu0 0
    %3314 = vmatprep.subr.bf16.mxu0 0
    %3315 = vmatpush2.bf16.msra.mxu0 0
    %3316 = vmatprep.subr.bf16.mxu0 0
    %3317 = vmatpush2.bf16.msra.mxu0 0
    %3318 = vmatprep.subr.bf16.mxu0 0
    %3319 = vmatpush2.bf16.msra.mxu0 0
    %3320 = vmatprep.mubr.bf16.mxu0 0
    %3321 = vmatmul.mubr.bf16.gmra.mxu0 %v3246
    %v3322 = vpop.f32.mrf.mxu0
    %v3323 = vadd.f32 0.0, %v3322
    %v3324 = vpop.f32.mrf.mxu0
    %v3325 = vpop.f32.mrf.mxu0
    %v3326 = vpop.f32.mrf.mxu0
    %3327 = vdwg.mxu0
    %3328 = vmatprep.subr.bf16.mxu0 0
    %3329 = vmatpush1.bf16.msra.mxu0 0
    %3330 = vmatprep.subr.bf16.mxu0 0
    %3331 = vmatpush1.bf16.msra.mxu0 0
    %3332 = vmatprep.subr.bf16.mxu0 0
    %3333 = vmatpush1.bf16.msra.mxu0 0
    %3334 = vmatprep.subr.bf16.mxu0 0
    %3335 = vmatpush1.bf16.msra.mxu0 0
    %3336 = vmatprep.subr.bf16.mxu0 0
    %3337 = vmatpush1.bf16.msra.mxu0 %v2018
    %3338 = vmatprep.subr.bf16.mxu0 0
    %3339 = vmatpush1.bf16.msra.mxu0 %v2017
    %3340 = vmatprep.subr.bf16.mxu0 0
    %3341 = vmatpush1.bf16.msra.mxu0 %v2016
    %3342 = vmatprep.subr.bf16.mxu0 0
    %3343 = vmatpush1.bf16.msra.mxu0 %v2015
    %3344 = vmatprep.subr.bf16.mxu0 0
    %3345 = vmatpush2.bf16.msra.mxu0 0
    %3346 = vmatprep.subr.bf16.mxu0 0
    %3347 = vmatpush2.bf16.msra.mxu0 0
    %3348 = vmatprep.subr.bf16.mxu0 0
    %3349 = vmatpush2.bf16.msra.mxu0 0
    %3350 = vmatprep.subr.bf16.mxu0 0
    %3351 = vmatpush2.bf16.msra.mxu0 0
    %3352 = vmatprep.subr.bf16.mxu0 0
    %3353 = vmatpush2.bf16.msra.mxu0 0
    %3354 = vmatprep.subr.bf16.mxu0 0
    %3355 = vmatpush2.bf16.msra.mxu0 0
    %3356 = vmatprep.subr.bf16.mxu0 0
    %3357 = vmatpush2.bf16.msra.mxu0 0
    %3358 = vmatprep.subr.bf16.mxu0 0
    %3359 = vmatpush2.bf16.msra.mxu0 0
    %3360 = vmatprep.mubr.bf16.mxu0 0
    %3361 = vmatmul.mubr.bf16.gmra.mxu0 %v3246
    %v3362 = vpop.f32.mrf.mxu0
    %v3363 = vadd.f32 %v1997, %v3362
    %v3364 = vpop.f32.mrf.mxu0
    %v3365 = vpop.f32.mrf.mxu0
    %v3366 = vpop.f32.mrf.mxu0
    %3367 = vdwg.mxu0
    %v3369 = vrot.slane %v3283, 3
    %v3370 = vrot.slane %v3283, 4
    %v3371 = vrot.slane %v3283, 5
    %v3372 = vrot.slane %v3283, 6
    %v3377 = vadd.f32 %v1679, %v3369
    %v3378 = vadd.f32 %v1682, %v3370
    %v3379 = vadd.f32 %v1687, %v3371
    %v3380 = vadd.f32 %v1690, %v3372
    %v3381 = vxor.u32 %v3377, 2147483648
    %v3382 = vxor.u32 %v3378, 2147483648
    %v3383 = vxor.u32 %v3379, 2147483648
    %v3384 = vxor.u32 %v3380, 2147483648
    %v3385 = vmul.f32 %v3381, 1.442695
    %v3386 = vpow.pop %v3385
    %v3387 = vmul.f32 %v3382, 1.442695
    %v3388 = vpow.pop %v3387
    %v3389 = vmul.f32 %v3383, 1.442695
    %v3390 = vpow.pop %v3389
    %v3391 = vmul.f32 %v3384, 1.442695
    %v3392 = vpow.pop %v3391
    %v3393 = vadd.f32 %v3386, 1.0
    %v3394 = vadd.f32 %v3388, 1.0
    %v3395 = vadd.f32 %v3390, 1.0
    %v3396 = vadd.f32 %v3392, 1.0
    %v3397 = vrcp.pop %v3393
    %v3398 = vmul.f32 1.0, %v3397
    %v3399 = vrcp.pop %v3394
    %v3400 = vmul.f32 1.0, %v3399
    %v3401 = vrcp.pop %v3395
    %v3402 = vmul.f32 1.0, %v3401
    %v3403 = vrcp.pop %v3396
    %v3404 = vmul.f32 1.0, %v3403
    %v3406 = vrot.slane %v3323, 3
    %v3407 = vrot.slane %v3323, 4
    %v3408 = vrot.slane %v3323, 5
    %v3409 = vrot.slane %v3323, 6
    %v3414 = vadd.f32 %v1751, %v3406
    %v3415 = vadd.f32 %v1754, %v3407
    %v3416 = vadd.f32 %v1759, %v3408
    %v3417 = vadd.f32 %v1762, %v3409
    %v3418 = vxor.u32 %v3414, 2147483648
    %v3419 = vxor.u32 %v3415, 2147483648
    %v3420 = vxor.u32 %v3416, 2147483648
    %v3421 = vxor.u32 %v3417, 2147483648
    %v3422 = vmul.f32 %v3418, 1.442695
    %v3423 = vpow.pop %v3422
    %v3424 = vmul.f32 %v3419, 1.442695
    %v3425 = vpow.pop %v3424
    %v3426 = vmul.f32 %v3420, 1.442695
    %v3427 = vpow.pop %v3426
    %v3428 = vmul.f32 %v3421, 1.442695
    %v3429 = vpow.pop %v3428
    %v3430 = vadd.f32 %v3423, 1.0
    %v3431 = vadd.f32 %v3425, 1.0
    %v3432 = vadd.f32 %v3427, 1.0
    %v3433 = vadd.f32 %v3429, 1.0
    %v3434 = vrcp.pop %v3430
    %v3435 = vmul.f32 1.0, %v3434
    %v3436 = vrcp.pop %v3431
    %v3437 = vmul.f32 1.0, %v3436
    %v3438 = vrcp.pop %v3432
    %v3439 = vmul.f32 1.0, %v3438
    %v3440 = vrcp.pop %v3433
    %v3441 = vmul.f32 1.0, %v3440
    %v3443 = vrot.slane %v3363, 3
    %v3444 = vrot.slane %v3363, 4
    %v3445 = vrot.slane %v3363, 5
    %v3446 = vrot.slane %v3363, 6
    %v3451 = vmul.f32 %v3398, %v3443
    %v3452 = vmul.f32 %v3400, %v3444
    %v3453 = vmul.f32 %v3402, %v3445
    %v3454 = vmul.f32 %v3404, %v3446
    %v3455 = vadd.f32 %v1823, %v3451
    %v3456 = vadd.f32 %v1826, %v3452
    %v3457 = vadd.f32 %v1831, %v3453
    %v3458 = vadd.f32 %v1834, %v3454
    %v3459 = vtanh.pop %v3455
    %v3460 = vtanh.pop %v3456
    %v3461 = vtanh.pop %v3457
    %v3462 = vtanh.pop %v3458
    %v3463 = vsub.f32 1.0, %v3435
    %v3464 = vsub.f32 1.0, %v3437
    %v3465 = vsub.f32 1.0, %v3439
    %v3466 = vsub.f32 1.0, %v3441
    %v3467 = vmul.f32 %v3463, %v3459
    %v3468 = vmul.f32 %v3464, %v3460
    %v3469 = vmul.f32 %v3465, %v3461
    %v3470 = vmul.f32 %v3466, %v3462
    %v3475 = vrot.slane %v3221, 7
    %v3476 = vrot.slane %v3222, 7
    %v3477 = vrot.slane %v3223, 7
    %v3478 = vrot.slane %v3224, 7
    %v3483 = vmul.f32 %v3435, %v3475
    %v3484 = vmul.f32 %v3437, %v3476
    %v3485 = vmul.f32 %v3439, %v3477
    %v3486 = vmul.f32 %v3441, %v3478
    %v3487 = vadd.f32 %v3467, %v3483
    %v3488 = vadd.f32 %v3468, %v3484
    %v3489 = vadd.f32 %v3469, %v3485
    %v3490 = vadd.f32 %v3470, %v3486
    %v3491 = vpack.c.bf16 %v3487, %v3487
    %v3492 = vpack.c.bf16 %v3488, %v3488
    %v3493 = vpack.c.bf16 %v3489, %v3489
    %v3494 = vpack.c.bf16 %v3490, %v3490
    %v3499 = vunpack.c.l.b16 %v3491
    %v3500 = vunpack.c.l.b16 %v3492
    %v3501 = vunpack.c.l.b16 %v3493
    %v3502 = vunpack.c.l.b16 %v3494
    %v3503 = vrot.slane %v3499, 5
    %v3504 = vrot.slane %v3500, 4
    %v3505 = vsel %vm2184, %v3504, %v3503
    %v3506 = vrot.slane %v3501, 3
    %v3507 = vsel %vm2187, %v3506, %v3505
    %v3508 = vrot.slane %v3502, 2
    %v3509 = vsel %vm2190, %v3508, %v3507
    %v3510 = vpack.c.b16 %v3509, %v3509
    %v3512 = vsel %vm1433, %v3510, 0
    %3514 = vmatprep.subr.bf16.mxu0 0
    %3515 = vmatpush1.bf16.msra.mxu0 0
    %3516 = vmatprep.subr.bf16.mxu0 0
    %3517 = vmatpush1.bf16.msra.mxu0 0
    %3518 = vmatprep.subr.bf16.mxu0 0
    %3519 = vmatpush1.bf16.msra.mxu0 0
    %3520 = vmatprep.subr.bf16.mxu0 0
    %3521 = vmatpush1.bf16.msra.mxu0 0
    %3522 = vmatprep.subr.bf16.mxu0 0
    %3523 = vmatpush1.bf16.msra.mxu0 %v1881
    %3524 = vmatprep.subr.bf16.mxu0 0
    %3525 = vmatpush1.bf16.msra.mxu0 %v1880
    %3526 = vmatprep.subr.bf16.mxu0 0
    %3527 = vmatpush1.bf16.msra.mxu0 %v1879
    %3528 = vmatprep.subr.bf16.mxu0 0
    %3529 = vmatpush1.bf16.msra.mxu0 %v1878
    %3530 = vmatprep.subr.bf16.mxu0 0
    %3531 = vmatpush2.bf16.msra.mxu0 0
    %3532 = vmatprep.subr.bf16.mxu0 0
    %3533 = vmatpush2.bf16.msra.mxu0 0
    %3534 = vmatprep.subr.bf16.mxu0 0
    %3535 = vmatpush2.bf16.msra.mxu0 0
    %3536 = vmatprep.subr.bf16.mxu0 0
    %3537 = vmatpush2.bf16.msra.mxu0 0
    %3538 = vmatprep.subr.bf16.mxu0 0
    %3539 = vmatpush2.bf16.msra.mxu0 0
    %3540 = vmatprep.subr.bf16.mxu0 0
    %3541 = vmatpush2.bf16.msra.mxu0 0
    %3542 = vmatprep.subr.bf16.mxu0 0
    %3543 = vmatpush2.bf16.msra.mxu0 0
    %3544 = vmatprep.subr.bf16.mxu0 0
    %3545 = vmatpush2.bf16.msra.mxu0 0
    %3546 = vmatprep.mubr.bf16.mxu0 0
    %3547 = vmatmul.mubr.bf16.gmra.mxu0 %v3512
    %v3548 = vpop.f32.mrf.mxu0
    %v3549 = vadd.f32 0.0, %v3548
    %v3550 = vpop.f32.mrf.mxu0
    %v3551 = vpop.f32.mrf.mxu0
    %v3552 = vpop.f32.mrf.mxu0
    %3553 = vdwg.mxu0
    %3554 = vmatprep.subr.bf16.mxu0 0
    %3555 = vmatpush1.bf16.msra.mxu0 0
    %3556 = vmatprep.subr.bf16.mxu0 0
    %3557 = vmatpush1.bf16.msra.mxu0 0
    %3558 = vmatprep.subr.bf16.mxu0 0
    %3559 = vmatpush1.bf16.msra.mxu0 0
    %3560 = vmatprep.subr.bf16.mxu0 0
    %3561 = vmatpush1.bf16.msra.mxu0 0
    %3562 = vmatprep.subr.bf16.mxu0 0
    %3563 = vmatpush1.bf16.msra.mxu0 %v1948
    %3564 = vmatprep.subr.bf16.mxu0 0
    %3565 = vmatpush1.bf16.msra.mxu0 %v1947
    %3566 = vmatprep.subr.bf16.mxu0 0
    %3567 = vmatpush1.bf16.msra.mxu0 %v1946
    %3568 = vmatprep.subr.bf16.mxu0 0
    %3569 = vmatpush1.bf16.msra.mxu0 %v1945
    %3570 = vmatprep.subr.bf16.mxu0 0
    %3571 = vmatpush2.bf16.msra.mxu0 0
    %3572 = vmatprep.subr.bf16.mxu0 0
    %3573 = vmatpush2.bf16.msra.mxu0 0
    %3574 = vmatprep.subr.bf16.mxu0 0
    %3575 = vmatpush2.bf16.msra.mxu0 0
    %3576 = vmatprep.subr.bf16.mxu0 0
    %3577 = vmatpush2.bf16.msra.mxu0 0
    %3578 = vmatprep.subr.bf16.mxu0 0
    %3579 = vmatpush2.bf16.msra.mxu0 0
    %3580 = vmatprep.subr.bf16.mxu0 0
    %3581 = vmatpush2.bf16.msra.mxu0 0
    %3582 = vmatprep.subr.bf16.mxu0 0
    %3583 = vmatpush2.bf16.msra.mxu0 0
    %3584 = vmatprep.subr.bf16.mxu0 0
    %3585 = vmatpush2.bf16.msra.mxu0 0
    %3586 = vmatprep.mubr.bf16.mxu0 0
    %3587 = vmatmul.mubr.bf16.gmra.mxu0 %v3512
    %v3588 = vpop.f32.mrf.mxu0
    %v3589 = vadd.f32 0.0, %v3588
    %v3590 = vpop.f32.mrf.mxu0
    %v3591 = vpop.f32.mrf.mxu0
    %v3592 = vpop.f32.mrf.mxu0
    %3593 = vdwg.mxu0
    %3594 = vmatprep.subr.bf16.mxu0 0
    %3595 = vmatpush1.bf16.msra.mxu0 0
    %3596 = vmatprep.subr.bf16.mxu0 0
    %3597 = vmatpush1.bf16.msra.mxu0 0
    %3598 = vmatprep.subr.bf16.mxu0 0
    %3599 = vmatpush1.bf16.msra.mxu0 0
    %3600 = vmatprep.subr.bf16.mxu0 0
    %3601 = vmatpush1.bf16.msra.mxu0 0
    %3602 = vmatprep.subr.bf16.mxu0 0
    %3603 = vmatpush1.bf16.msra.mxu0 %v2018
    %3604 = vmatprep.subr.bf16.mxu0 0
    %3605 = vmatpush1.bf16.msra.mxu0 %v2017
    %3606 = vmatprep.subr.bf16.mxu0 0
    %3607 = vmatpush1.bf16.msra.mxu0 %v2016
    %3608 = vmatprep.subr.bf16.mxu0 0
    %3609 = vmatpush1.bf16.msra.mxu0 %v2015
    %3610 = vmatprep.subr.bf16.mxu0 0
    %3611 = vmatpush2.bf16.msra.mxu0 0
    %3612 = vmatprep.subr.bf16.mxu0 0
    %3613 = vmatpush2.bf16.msra.mxu0 0
    %3614 = vmatprep.subr.bf16.mxu0 0
    %3615 = vmatpush2.bf16.msra.mxu0 0
    %3616 = vmatprep.subr.bf16.mxu0 0
    %3617 = vmatpush2.bf16.msra.mxu0 0
    %3618 = vmatprep.subr.bf16.mxu0 0
    %3619 = vmatpush2.bf16.msra.mxu0 0
    %3620 = vmatprep.subr.bf16.mxu0 0
    %3621 = vmatpush2.bf16.msra.mxu0 0
    %3622 = vmatprep.subr.bf16.mxu0 0
    %3623 = vmatpush2.bf16.msra.mxu0 0
    %3624 = vmatprep.subr.bf16.mxu0 0
    %3625 = vmatpush2.bf16.msra.mxu0 0
    %3626 = vmatprep.mubr.bf16.mxu0 0
    %3627 = vmatmul.mubr.bf16.gmra.mxu0 %v3512
    %v3628 = vpop.f32.mrf.mxu0
    %v3629 = vadd.f32 %v1997, %v3628
    %v3630 = vpop.f32.mrf.mxu0
    %v3631 = vpop.f32.mrf.mxu0
    %v3632 = vpop.f32.mrf.mxu0
    %3633 = vdwg.mxu0
    %v3635 = vrot.slane %v3549, 2
    %v3636 = vrot.slane %v3549, 3
    %v3637 = vrot.slane %v3549, 4
    %v3638 = vrot.slane %v3549, 5
    %v3643 = vadd.f32 %v1679, %v3635
    %v3644 = vadd.f32 %v1682, %v3636
    %v3645 = vadd.f32 %v1687, %v3637
    %v3646 = vadd.f32 %v1690, %v3638
    %v3647 = vxor.u32 %v3643, 2147483648
    %v3648 = vxor.u32 %v3644, 2147483648
    %v3649 = vxor.u32 %v3645, 2147483648
    %v3650 = vxor.u32 %v3646, 2147483648
    %v3651 = vmul.f32 %v3647, 1.442695
    %v3652 = vpow.pop %v3651
    %v3653 = vmul.f32 %v3648, 1.442695
    %v3654 = vpow.pop %v3653
    %v3655 = vmul.f32 %v3649, 1.442695
    %v3656 = vpow.pop %v3655
    %v3657 = vmul.f32 %v3650, 1.442695
    %v3658 = vpow.pop %v3657
    %v3659 = vadd.f32 %v3652, 1.0
    %v3660 = vadd.f32 %v3654, 1.0
    %v3661 = vadd.f32 %v3656, 1.0
    %v3662 = vadd.f32 %v3658, 1.0
    %v3663 = vrcp.pop %v3659
    %v3664 = vmul.f32 1.0, %v3663
    %v3665 = vrcp.pop %v3660
    %v3666 = vmul.f32 1.0, %v3665
    %v3667 = vrcp.pop %v3661
    %v3668 = vmul.f32 1.0, %v3667
    %v3669 = vrcp.pop %v3662
    %v3670 = vmul.f32 1.0, %v3669
    %v3672 = vrot.slane %v3589, 2
    %v3673 = vrot.slane %v3589, 3
    %v3674 = vrot.slane %v3589, 4
    %v3675 = vrot.slane %v3589, 5
    %v3680 = vadd.f32 %v1751, %v3672
    %v3681 = vadd.f32 %v1754, %v3673
    %v3682 = vadd.f32 %v1759, %v3674
    %v3683 = vadd.f32 %v1762, %v3675
    %v3684 = vxor.u32 %v3680, 2147483648
    %v3685 = vxor.u32 %v3681, 2147483648
    %v3686 = vxor.u32 %v3682, 2147483648
    %v3687 = vxor.u32 %v3683, 2147483648
    %v3688 = vmul.f32 %v3684, 1.442695
    %v3689 = vpow.pop %v3688
    %v3690 = vmul.f32 %v3685, 1.442695
    %v3691 = vpow.pop %v3690
    %v3692 = vmul.f32 %v3686, 1.442695
    %v3693 = vpow.pop %v3692
    %v3694 = vmul.f32 %v3687, 1.442695
    %v3695 = vpow.pop %v3694
    %v3696 = vadd.f32 %v3689, 1.0
    %v3697 = vadd.f32 %v3691, 1.0
    %v3698 = vadd.f32 %v3693, 1.0
    %v3699 = vadd.f32 %v3695, 1.0
    %v3700 = vrcp.pop %v3696
    %v3701 = vmul.f32 1.0, %v3700
    %v3702 = vrcp.pop %v3697
    %v3703 = vmul.f32 1.0, %v3702
    %v3704 = vrcp.pop %v3698
    %v3705 = vmul.f32 1.0, %v3704
    %v3706 = vrcp.pop %v3699
    %v3707 = vmul.f32 1.0, %v3706
    %v3709 = vrot.slane %v3629, 2
    %v3710 = vrot.slane %v3629, 3
    %v3711 = vrot.slane %v3629, 4
    %v3712 = vrot.slane %v3629, 5
    %v3717 = vmul.f32 %v3664, %v3709
    %v3718 = vmul.f32 %v3666, %v3710
    %v3719 = vmul.f32 %v3668, %v3711
    %v3720 = vmul.f32 %v3670, %v3712
    %v3721 = vadd.f32 %v1823, %v3717
    %v3722 = vadd.f32 %v1826, %v3718
    %v3723 = vadd.f32 %v1831, %v3719
    %v3724 = vadd.f32 %v1834, %v3720
    %v3725 = vtanh.pop %v3721
    %v3726 = vtanh.pop %v3722
    %v3727 = vtanh.pop %v3723
    %v3728 = vtanh.pop %v3724
    %v3729 = vsub.f32 1.0, %v3701
    %v3730 = vsub.f32 1.0, %v3703
    %v3731 = vsub.f32 1.0, %v3705
    %v3732 = vsub.f32 1.0, %v3707
    %v3733 = vmul.f32 %v3729, %v3725
    %v3734 = vmul.f32 %v3730, %v3726
    %v3735 = vmul.f32 %v3731, %v3727
    %v3736 = vmul.f32 %v3732, %v3728
    %v3741 = vrot.slane %v3487, 7
    %v3742 = vrot.slane %v3488, 7
    %v3743 = vrot.slane %v3489, 7
    %v3744 = vrot.slane %v3490, 7
    %v3749 = vmul.f32 %v3701, %v3741
    %v3750 = vmul.f32 %v3703, %v3742
    %v3751 = vmul.f32 %v3705, %v3743
    %v3752 = vmul.f32 %v3707, %v3744
    %v3753 = vadd.f32 %v3733, %v3749
    %v3754 = vadd.f32 %v3734, %v3750
    %v3755 = vadd.f32 %v3735, %v3751
    %v3756 = vadd.f32 %v3736, %v3752
    %v3757 = vpack.c.bf16 %v3753, %v3753
    %v3758 = vpack.c.bf16 %v3754, %v3754
    %v3759 = vpack.c.bf16 %v3755, %v3755
    %v3760 = vpack.c.bf16 %v3756, %v3756
    %v3765 = vunpack.c.l.b16 %v3757
    %v3766 = vunpack.c.l.b16 %v3758
    %v3767 = vunpack.c.l.b16 %v3759
    %v3768 = vunpack.c.l.b16 %v3760
    %v3769 = vrot.slane %v3765, 6
    %v3770 = vrot.slane %v3766, 5
    %v3771 = vsel %vm2184, %v3770, %v3769
    %v3772 = vrot.slane %v3767, 4
    %v3773 = vsel %vm2187, %v3772, %v3771
    %v3774 = vrot.slane %v3768, 3
    %v3775 = vsel %vm2190, %v3774, %v3773
    %v3776 = vpack.c.b16 %v3775, %v3775
    %v3778 = vsel %vm1433, %v3776, 0
    %3780 = vmatprep.subr.bf16.mxu0 0
    %3781 = vmatpush1.bf16.msra.mxu0 0
    %3782 = vmatprep.subr.bf16.mxu0 0
    %3783 = vmatpush1.bf16.msra.mxu0 0
    %3784 = vmatprep.subr.bf16.mxu0 0
    %3785 = vmatpush1.bf16.msra.mxu0 0
    %3786 = vmatprep.subr.bf16.mxu0 0
    %3787 = vmatpush1.bf16.msra.mxu0 0
    %3788 = vmatprep.subr.bf16.mxu0 0
    %3789 = vmatpush1.bf16.msra.mxu0 %v1881
    %3790 = vmatprep.subr.bf16.mxu0 0
    %3791 = vmatpush1.bf16.msra.mxu0 %v1880
    %3792 = vmatprep.subr.bf16.mxu0 0
    %3793 = vmatpush1.bf16.msra.mxu0 %v1879
    %3794 = vmatprep.subr.bf16.mxu0 0
    %3795 = vmatpush1.bf16.msra.mxu0 %v1878
    %3796 = vmatprep.subr.bf16.mxu0 0
    %3797 = vmatpush2.bf16.msra.mxu0 0
    %3798 = vmatprep.subr.bf16.mxu0 0
    %3799 = vmatpush2.bf16.msra.mxu0 0
    %3800 = vmatprep.subr.bf16.mxu0 0
    %3801 = vmatpush2.bf16.msra.mxu0 0
    %3802 = vmatprep.subr.bf16.mxu0 0
    %3803 = vmatpush2.bf16.msra.mxu0 0
    %3804 = vmatprep.subr.bf16.mxu0 0
    %3805 = vmatpush2.bf16.msra.mxu0 0
    %3806 = vmatprep.subr.bf16.mxu0 0
    %3807 = vmatpush2.bf16.msra.mxu0 0
    %3808 = vmatprep.subr.bf16.mxu0 0
    %3809 = vmatpush2.bf16.msra.mxu0 0
    %3810 = vmatprep.subr.bf16.mxu0 0
    %3811 = vmatpush2.bf16.msra.mxu0 0
    %3812 = vmatprep.mubr.bf16.mxu0 0
    %3813 = vmatmul.mubr.bf16.gmra.mxu0 %v3778
    %v3814 = vpop.f32.mrf.mxu0
    %v3815 = vadd.f32 0.0, %v3814
    %v3816 = vpop.f32.mrf.mxu0
    %v3817 = vpop.f32.mrf.mxu0
    %v3818 = vpop.f32.mrf.mxu0
    %3819 = vdwg.mxu0
    %3820 = vmatprep.subr.bf16.mxu0 0
    %3821 = vmatpush1.bf16.msra.mxu0 0
    %3822 = vmatprep.subr.bf16.mxu0 0
    %3823 = vmatpush1.bf16.msra.mxu0 0
    %3824 = vmatprep.subr.bf16.mxu0 0
    %3825 = vmatpush1.bf16.msra.mxu0 0
    %3826 = vmatprep.subr.bf16.mxu0 0
    %3827 = vmatpush1.bf16.msra.mxu0 0
    %3828 = vmatprep.subr.bf16.mxu0 0
    %3829 = vmatpush1.bf16.msra.mxu0 %v1948
    %3830 = vmatprep.subr.bf16.mxu0 0
    %3831 = vmatpush1.bf16.msra.mxu0 %v1947
    %3832 = vmatprep.subr.bf16.mxu0 0
    %3833 = vmatpush1.bf16.msra.mxu0 %v1946
    %3834 = vmatprep.subr.bf16.mxu0 0
    %3835 = vmatpush1.bf16.msra.mxu0 %v1945
    %3836 = vmatprep.subr.bf16.mxu0 0
    %3837 = vmatpush2.bf16.msra.mxu0 0
    %3838 = vmatprep.subr.bf16.mxu0 0
    %3839 = vmatpush2.bf16.msra.mxu0 0
    %3840 = vmatprep.subr.bf16.mxu0 0
    %3841 = vmatpush2.bf16.msra.mxu0 0
    %3842 = vmatprep.subr.bf16.mxu0 0
    %3843 = vmatpush2.bf16.msra.mxu0 0
    %3844 = vmatprep.subr.bf16.mxu0 0
    %3845 = vmatpush2.bf16.msra.mxu0 0
    %3846 = vmatprep.subr.bf16.mxu0 0
    %3847 = vmatpush2.bf16.msra.mxu0 0
    %3848 = vmatprep.subr.bf16.mxu0 0
    %3849 = vmatpush2.bf16.msra.mxu0 0
    %3850 = vmatprep.subr.bf16.mxu0 0
    %3851 = vmatpush2.bf16.msra.mxu0 0
    %3852 = vmatprep.mubr.bf16.mxu0 0
    %3853 = vmatmul.mubr.bf16.gmra.mxu0 %v3778
    %v3854 = vpop.f32.mrf.mxu0
    %v3855 = vadd.f32 0.0, %v3854
    %v3856 = vpop.f32.mrf.mxu0
    %v3857 = vpop.f32.mrf.mxu0
    %v3858 = vpop.f32.mrf.mxu0
    %3859 = vdwg.mxu0
    %3860 = vmatprep.subr.bf16.mxu0 0
    %3861 = vmatpush1.bf16.msra.mxu0 0
    %3862 = vmatprep.subr.bf16.mxu0 0
    %3863 = vmatpush1.bf16.msra.mxu0 0
    %3864 = vmatprep.subr.bf16.mxu0 0
    %3865 = vmatpush1.bf16.msra.mxu0 0
    %3866 = vmatprep.subr.bf16.mxu0 0
    %3867 = vmatpush1.bf16.msra.mxu0 0
    %3868 = vmatprep.subr.bf16.mxu0 0
    %3869 = vmatpush1.bf16.msra.mxu0 %v2018
    %3870 = vmatprep.subr.bf16.mxu0 0
    %3871 = vmatpush1.bf16.msra.mxu0 %v2017
    %3872 = vmatprep.subr.bf16.mxu0 0
    %3873 = vmatpush1.bf16.msra.mxu0 %v2016
    %3874 = vmatprep.subr.bf16.mxu0 0
    %3875 = vmatpush1.bf16.msra.mxu0 %v2015
    %3876 = vmatprep.subr.bf16.mxu0 0
    %3877 = vmatpush2.bf16.msra.mxu0 0
    %3878 = vmatprep.subr.bf16.mxu0 0
    %3879 = vmatpush2.bf16.msra.mxu0 0
    %3880 = vmatprep.subr.bf16.mxu0 0
    %3881 = vmatpush2.bf16.msra.mxu0 0
    %3882 = vmatprep.subr.bf16.mxu0 0
    %3883 = vmatpush2.bf16.msra.mxu0 0
    %3884 = vmatprep.subr.bf16.mxu0 0
    %3885 = vmatpush2.bf16.msra.mxu0 0
    %3886 = vmatprep.subr.bf16.mxu0 0
    %3887 = vmatpush2.bf16.msra.mxu0 0
    %3888 = vmatprep.subr.bf16.mxu0 0
    %3889 = vmatpush2.bf16.msra.mxu0 0
    %3890 = vmatprep.subr.bf16.mxu0 0
    %3891 = vmatpush2.bf16.msra.mxu0 0
    %3892 = vmatprep.mubr.bf16.mxu0 0
    %3893 = vmatmul.mubr.bf16.gmra.mxu0 %v3778
    %v3894 = vpop.f32.mrf.mxu0
    %v3895 = vadd.f32 %v1997, %v3894
    %v3896 = vpop.f32.mrf.mxu0
    %v3897 = vpop.f32.mrf.mxu0
    %v3898 = vpop.f32.mrf.mxu0
    %3899 = vdwg.mxu0
    %v3901 = vrot.slane %v3815, 1
    %v3902 = vrot.slane %v3815, 2
    %v3903 = vrot.slane %v3815, 3
    %v3904 = vrot.slane %v3815, 4
    %v3909 = vadd.f32 %v1679, %v3901
    %v3910 = vadd.f32 %v1682, %v3902
    %v3911 = vadd.f32 %v1687, %v3903
    %v3912 = vadd.f32 %v1690, %v3904
    %v3913 = vxor.u32 %v3909, 2147483648
    %v3914 = vxor.u32 %v3910, 2147483648
    %v3915 = vxor.u32 %v3911, 2147483648
    %v3916 = vxor.u32 %v3912, 2147483648
    %v3917 = vmul.f32 %v3913, 1.442695
    %v3918 = vpow.pop %v3917
    %v3919 = vmul.f32 %v3914, 1.442695
    %v3920 = vpow.pop %v3919
    %v3921 = vmul.f32 %v3915, 1.442695
    %v3922 = vpow.pop %v3921
    %v3923 = vmul.f32 %v3916, 1.442695
    %v3924 = vpow.pop %v3923
    %v3925 = vadd.f32 %v3918, 1.0
    %v3926 = vadd.f32 %v3920, 1.0
    %v3927 = vadd.f32 %v3922, 1.0
    %v3928 = vadd.f32 %v3924, 1.0
    %v3929 = vrcp.pop %v3925
    %v3930 = vmul.f32 1.0, %v3929
    %v3931 = vrcp.pop %v3926
    %v3932 = vmul.f32 1.0, %v3931
    %v3933 = vrcp.pop %v3927
    %v3934 = vmul.f32 1.0, %v3933
    %v3935 = vrcp.pop %v3928
    %v3936 = vmul.f32 1.0, %v3935
    %v3938 = vrot.slane %v3855, 1
    %v3939 = vrot.slane %v3855, 2
    %v3940 = vrot.slane %v3855, 3
    %v3941 = vrot.slane %v3855, 4
    %v3946 = vadd.f32 %v1751, %v3938
    %v3947 = vadd.f32 %v1754, %v3939
    %v3948 = vadd.f32 %v1759, %v3940
    %v3949 = vadd.f32 %v1762, %v3941
    %v3950 = vxor.u32 %v3946, 2147483648
    %v3951 = vxor.u32 %v3947, 2147483648
    %v3952 = vxor.u32 %v3948, 2147483648
    %v3953 = vxor.u32 %v3949, 2147483648
    %v3954 = vmul.f32 %v3950, 1.442695
    %v3955 = vpow.pop %v3954
    %v3956 = vmul.f32 %v3951, 1.442695
    %v3957 = vpow.pop %v3956
    %v3958 = vmul.f32 %v3952, 1.442695
    %v3959 = vpow.pop %v3958
    %v3960 = vmul.f32 %v3953, 1.442695
    %v3961 = vpow.pop %v3960
    %v3962 = vadd.f32 %v3955, 1.0
    %v3963 = vadd.f32 %v3957, 1.0
    %v3964 = vadd.f32 %v3959, 1.0
    %v3965 = vadd.f32 %v3961, 1.0
    %v3966 = vrcp.pop %v3962
    %v3967 = vmul.f32 1.0, %v3966
    %v3968 = vrcp.pop %v3963
    %v3969 = vmul.f32 1.0, %v3968
    %v3970 = vrcp.pop %v3964
    %v3971 = vmul.f32 1.0, %v3970
    %v3972 = vrcp.pop %v3965
    %v3973 = vmul.f32 1.0, %v3972
    %v3975 = vrot.slane %v3895, 1
    %v3976 = vrot.slane %v3895, 2
    %v3977 = vrot.slane %v3895, 3
    %v3978 = vrot.slane %v3895, 4
    %v3983 = vmul.f32 %v3930, %v3975
    %v3984 = vmul.f32 %v3932, %v3976
    %v3985 = vmul.f32 %v3934, %v3977
    %v3986 = vmul.f32 %v3936, %v3978
    %v3987 = vadd.f32 %v1823, %v3983
    %v3988 = vadd.f32 %v1826, %v3984
    %v3989 = vadd.f32 %v1831, %v3985
    %v3990 = vadd.f32 %v1834, %v3986
    %v3991 = vtanh.pop %v3987
    %v3992 = vtanh.pop %v3988
    %v3993 = vtanh.pop %v3989
    %v3994 = vtanh.pop %v3990
    %v3995 = vsub.f32 1.0, %v3967
    %v3996 = vsub.f32 1.0, %v3969
    %v3997 = vsub.f32 1.0, %v3971
    %v3998 = vsub.f32 1.0, %v3973
    %v3999 = vmul.f32 %v3995, %v3991
    %v4000 = vmul.f32 %v3996, %v3992
    %v4001 = vmul.f32 %v3997, %v3993
    %v4002 = vmul.f32 %v3998, %v3994
    %v4007 = vrot.slane %v3753, 7
    %v4008 = vrot.slane %v3754, 7
    %v4009 = vrot.slane %v3755, 7
    %v4010 = vrot.slane %v3756, 7
    %v4015 = vmul.f32 %v3967, %v4007
    %v4016 = vmul.f32 %v3969, %v4008
    %v4017 = vmul.f32 %v3971, %v4009
    %v4018 = vmul.f32 %v3973, %v4010
    %v4019 = vadd.f32 %v3999, %v4015
    %v4020 = vadd.f32 %v4000, %v4016
    %v4021 = vadd.f32 %v4001, %v4017
    %v4022 = vadd.f32 %v4002, %v4018
    %v4023 = vpack.c.bf16 %v4019, %v4019
    %v4024 = vpack.c.bf16 %v4020, %v4020
    %v4025 = vpack.c.bf16 %v4021, %v4021
    %v4026 = vpack.c.bf16 %v4022, %v4022
    %v4027 = vld [vmem:[%s19] sm:$0xf]
    %v4028 = vld [vmem:[%s19 + $0x4] sm:$0xf]
    %v4029 = vld [vmem:[%s19 + $0x8] sm:$0xf]
    %v4030 = vld [vmem:[%s19 + $0xc] sm:$0xf]
    %v4031 = vld [vmem:[%s19 + $0x10] sm:$0xf]
    %v4032 = vld [vmem:[%s19 + $0x14] sm:$0xf]
    %v4033 = vld [vmem:[%s19 + $0x18] sm:$0xf]
    %v4034 = vld [vmem:[%s19 + $0x1c] sm:$0xf]
    %v4039 = vunpack.c.l.b16 %v4023
    %v4040 = vunpack.c.l.b16 %v4024
    %v4041 = vunpack.c.l.b16 %v4025
    %v4042 = vunpack.c.l.b16 %v4026
    %v4043 = vrot.slane %v4039, 7
    %v4044 = vrot.slane %v4040, 6
    %v4045 = vsel %vm2184, %v4044, %v4043
    %v4046 = vrot.slane %v4041, 5
    %v4047 = vsel %vm2187, %v4046, %v4045
    %v4048 = vrot.slane %v4042, 4
    %v4049 = vsel %vm2190, %v4048, %v4047
    %v4050 = vpack.c.b16 %v4049, %v4049
    %v4059 = vunpack.c.l.b16 %v4027
    %v4060 = vunpack.c.l.b16 %v4028
    %v4061 = vunpack.c.l.b16 %v4029
    %v4062 = vunpack.c.l.b16 %v4030
    %v4063 = vunpack.c.l.b16 %v4031
    %v4064 = vunpack.c.l.b16 %v4032
    %v4065 = vunpack.c.l.b16 %v4033
    %v4066 = vunpack.c.l.b16 %v4034
    %v4067 = vpack.c.b16 %v4060, %v4059
    %v4068 = vpack.c.b16 %v4062, %v4061
    %v4069 = vpack.c.b16 %v4064, %v4063
    %v4070 = vpack.c.b16 %v4066, %v4065
    %v4076 = vsel %vm1433, %v4050, 0
    %4078 = vmatprep.subr.bf16.mxu0 0
    %4079 = vmatpush1.bf16.msra.mxu0 0
    %4080 = vmatprep.subr.bf16.mxu0 0
    %4081 = vmatpush1.bf16.msra.mxu0 0
    %4082 = vmatprep.subr.bf16.mxu0 0
    %4083 = vmatpush1.bf16.msra.mxu0 0
    %4084 = vmatprep.subr.bf16.mxu0 0
    %4085 = vmatpush1.bf16.msra.mxu0 0
    %4086 = vmatprep.subr.bf16.mxu0 0
    %4087 = vmatpush1.bf16.msra.mxu0 %v4070
    %4088 = vmatprep.subr.bf16.mxu0 0
    %4089 = vmatpush1.bf16.msra.mxu0 %v4069
    %4090 = vmatprep.subr.bf16.mxu0 0
    %4091 = vmatpush1.bf16.msra.mxu0 %v4068
    %4092 = vmatprep.subr.bf16.mxu0 0
    %4093 = vmatpush1.bf16.msra.mxu0 %v4067
    %4094 = vmatprep.subr.bf16.mxu0 0
    %4095 = vmatpush2.bf16.msra.mxu0 0
    %4096 = vmatprep.subr.bf16.mxu0 0
    %4097 = vmatpush2.bf16.msra.mxu0 0
    %4098 = vmatprep.subr.bf16.mxu0 0
    %4099 = vmatpush2.bf16.msra.mxu0 0
    %4100 = vmatprep.subr.bf16.mxu0 0
    %4101 = vmatpush2.bf16.msra.mxu0 0
    %4102 = vmatprep.subr.bf16.mxu0 0
    %4103 = vmatpush2.bf16.msra.mxu0 0
    %4104 = vmatprep.subr.bf16.mxu0 0
    %4105 = vmatpush2.bf16.msra.mxu0 0
    %4106 = vmatprep.subr.bf16.mxu0 0
    %4107 = vmatpush2.bf16.msra.mxu0 0
    %4108 = vmatprep.subr.bf16.mxu0 0
    %4109 = vmatpush2.bf16.msra.mxu0 0
    %4110 = vmatprep.mubr.bf16.mxu0 0
    %4111 = vmatmul.mubr.bf16.gmra.mxu0 %v4076
    %v4112 = vpop.f32.mrf.mxu0
    %v4113 = vadd.f32 0.0, %v4112
    %v4114 = vpop.f32.mrf.mxu0
    %v4115 = vpop.f32.mrf.mxu0
    %v4116 = vpop.f32.mrf.mxu0
    %4117 = vdwg.mxu0
    %v4118 = vld [vmem:[%s26] sm:$0xff]
    %v4119 = vld [vmem:[%s26 + $0x8] sm:$0xff]
    %vm4120 = vcmask 31744
    %v4122 = vsel %vm4120, %v4118, 0
    %v4125 = vsel %vm4120, %v4119, 0
    %v4128 = vsel %vm348, %v4113, 0
    %4130 = vmatprep.subr.mxu0 0.0
    %4131 = vmatpush1.msra.mxu0 0.0
    %4132 = vmatprep.subr.mxu0 0.0
    %4133 = vmatpush1.msra.mxu0 0.0
    %4134 = vmatprep.subr.mxu0 0.0
    %4135 = vmatpush1.msra.mxu0 0.0
    %4136 = vmatprep.subr.mxu0 0.0
    %4137 = vmatpush1.msra.mxu0 0.0
    %4138 = vmatprep.subr.mxu0 0.0
    %4139 = vmatpush1.msra.mxu0 0.0
    %4140 = vmatprep.subr.mxu0 0.0
    %4141 = vmatpush1.msra.mxu0 0.0
    %4142 = vmatprep.subr.mxu0 0.0
    %4143 = vmatpush1.msra.mxu0 0.0
    %4144 = vmatprep.subr.mxu0 0.0
    %4145 = vmatpush1.msra.mxu0 0.0
    %4146 = vmatprep.subr.mxu0 0.0
    %4147 = vmatpush1.msra.mxu0 0.0
    %4148 = vmatprep.subr.mxu0 0.0
    %4149 = vmatpush1.msra.mxu0 0.0
    %4150 = vmatprep.subr.mxu0 0.0
    %4151 = vmatpush1.msra.mxu0 0.0
    %4152 = vmatprep.subr.mxu0 0.0
    %4153 = vmatpush1.msra.mxu0 0.0
    %4154 = vmatprep.subr.mxu0 0.0
    %4155 = vmatpush1.msra.mxu0 0.0
    %4156 = vmatprep.subr.mxu0 0.0
    %4157 = vmatpush1.msra.mxu0 0.0
    %4158 = vmatprep.subr.mxu0 0.0
    %4159 = vmatpush1.msra.mxu0 0.0
    %4160 = vmatprep.subr.mxu0 0.0
    %4161 = vmatpush1.msra.mxu0 %v4128
    %4162 = vmatprep.subr.mxu0 0.0
    %4163 = vmatpush2.msra.mxu0 0.0
    %4164 = vmatprep.subr.mxu0 0.0
    %4165 = vmatpush2.msra.mxu0 0.0
    %4166 = vmatprep.subr.mxu0 0.0
    %4167 = vmatpush2.msra.mxu0 0.0
    %4168 = vmatprep.subr.mxu0 0.0
    %4169 = vmatpush2.msra.mxu0 0.0
    %4170 = vmatprep.subr.mxu0 0.0
    %4171 = vmatpush2.msra.mxu0 0.0
    %4172 = vmatprep.subr.mxu0 0.0
    %4173 = vmatpush2.msra.mxu0 0.0
    %4174 = vmatprep.subr.mxu0 0.0
    %4175 = vmatpush2.msra.mxu0 0.0
    %4176 = vmatprep.subr.mxu0 0.0
    %4177 = vmatpush2.msra.mxu0 0.0
    %4178 = vmatprep.subr.mxu0 0.0
    %4179 = vmatpush2.msra.mxu0 0.0
    %4180 = vmatprep.subr.mxu0 0.0
    %4181 = vmatpush2.msra.mxu0 0.0
    %4182 = vmatprep.subr.mxu0 0.0
    %4183 = vmatpush2.msra.mxu0 0.0
    %4184 = vmatprep.subr.mxu0 0.0
    %4185 = vmatpush2.msra.mxu0 0.0
    %4186 = vmatprep.subr.mxu0 0.0
    %4187 = vmatpush2.msra.mxu0 0.0
    %4188 = vmatprep.subr.mxu0 0.0
    %4189 = vmatpush2.msra.mxu0 0.0
    %4190 = vmatprep.subr.mxu0 0.0
    %4191 = vmatpush2.msra.mxu0 0.0
    %4192 = vmatprep.subr.mxu0 0.0
    %4193 = vmatpush2.msra.mxu0 0.0
    %4194 = vmatprep.mubr.f32.mxu0 0.0
    %4195 = vmatmul.mubr.f32.gmra.mxu0 %v4122
    %v4196 = vpop.f32.mrf.mxu0
    %v4197 = vadd.f32 0.0, %v4196
    %v4198 = vpop.f32.mrf.mxu0
    %4199 = vmatprep.mubr.f32.mxu0 0.0
    %4200 = vmatmul.mubr.f32.gmra.mxu0 %v4125
    %v4201 = vpop.f32.mrf.mxu0
    %v4202 = vadd.f32 0.0, %v4201
    %v4203 = vpop.f32.mrf.mxu0
    %4204 = vdwg.mxu0
    %v4205 = vand.u32 2147483647, %v4197
    %v4206 = vand.u32 2147483647, %v4202
    %v4207 = vld [vmem:[%s25] sm:$0xff]
    %v4208 = vld [vmem:[%s25 + $0x8] sm:$0xff]
    %v4209 = vld [vmem:[%s25 + $0x10] sm:$0xff]
    %v4210 = vld [vmem:[%s25 + $0x18] sm:$0xff]
    %v4211 = vld [vmem:[%s25 + $0x20] sm:$0xff]
    %v4212 = vld [vmem:[%s25 + $0x28] sm:$0xff]
    %vm4213 = vcmask 392192
    %v4215 = vsel %vm4213, %v4205, 0
    %v4218 = vsel %vm4213, %v4206, 0
    %4220 = vmatprep.subr.mxu0 0.0
    %4221 = vmatpush1.msra.mxu0 0.0
    %4222 = vmatprep.subr.mxu0 0.0
    %4223 = vmatpush1.msra.mxu0 0.0
    %4224 = vmatprep.subr.mxu0 0.0
    %4225 = vmatpush1.msra.mxu0 0.0
    %4226 = vmatprep.subr.mxu0 0.0
    %4227 = vmatpush1.msra.mxu0 0.0
    %4228 = vmatprep.subr.mxu0 0.0
    %4229 = vmatpush1.msra.mxu0 0.0
    %4230 = vmatprep.subr.mxu0 0.0
    %4231 = vmatpush1.msra.mxu0 0.0
    %4232 = vmatprep.subr.mxu0 0.0
    %4233 = vmatpush1.msra.mxu0 0.0
    %4234 = vmatprep.subr.mxu0 0.0
    %4235 = vmatpush1.msra.mxu0 0.0
    %4236 = vmatprep.subr.mxu0 0.0
    %4237 = vmatpush1.msra.mxu0 0.0
    %4238 = vmatprep.subr.mxu0 0.0
    %4239 = vmatpush1.msra.mxu0 0.0
    %4240 = vmatprep.subr.mxu0 0.0
    %4241 = vmatpush1.msra.mxu0 %v4212
    %4242 = vmatprep.subr.mxu0 0.0
    %4243 = vmatpush1.msra.mxu0 %v4211
    %4244 = vmatprep.subr.mxu0 0.0
    %4245 = vmatpush1.msra.mxu0 %v4210
    %4246 = vmatprep.subr.mxu0 0.0
    %4247 = vmatpush1.msra.mxu0 %v4209
    %4248 = vmatprep.subr.mxu0 0.0
    %4249 = vmatpush1.msra.mxu0 %v4208
    %4250 = vmatprep.subr.mxu0 0.0
    %4251 = vmatpush1.msra.mxu0 %v4207
    %4252 = vmatprep.subr.mxu0 0.0
    %4253 = vmatpush2.msra.mxu0 0.0
    %4254 = vmatprep.subr.mxu0 0.0
    %4255 = vmatpush2.msra.mxu0 0.0
    %4256 = vmatprep.subr.mxu0 0.0
    %4257 = vmatpush2.msra.mxu0 0.0
    %4258 = vmatprep.subr.mxu0 0.0
    %4259 = vmatpush2.msra.mxu0 0.0
    %4260 = vmatprep.subr.mxu0 0.0
    %4261 = vmatpush2.msra.mxu0 0.0
    %4262 = vmatprep.subr.mxu0 0.0
    %4263 = vmatpush2.msra.mxu0 0.0
    %4264 = vmatprep.subr.mxu0 0.0
    %4265 = vmatpush2.msra.mxu0 0.0
    %4266 = vmatprep.subr.mxu0 0.0
    %4267 = vmatpush2.msra.mxu0 0.0
    %4268 = vmatprep.subr.mxu0 0.0
    %4269 = vmatpush2.msra.mxu0 0.0
    %4270 = vmatprep.subr.mxu0 0.0
    %4271 = vmatpush2.msra.mxu0 0.0
    %4272 = vmatprep.subr.mxu0 0.0
    %4273 = vmatpush2.msra.mxu0 0.0
    %4274 = vmatprep.subr.mxu0 0.0
    %4275 = vmatpush2.msra.mxu0 0.0
    %4276 = vmatprep.subr.mxu0 0.0
    %4277 = vmatpush2.msra.mxu0 0.0
    %4278 = vmatprep.subr.mxu0 0.0
    %4279 = vmatpush2.msra.mxu0 0.0
    %4280 = vmatprep.subr.mxu0 0.0
    %4281 = vmatpush2.msra.mxu0 0.0
    %4282 = vmatprep.subr.mxu0 0.0
    %4283 = vmatpush2.msra.mxu0 0.0
    %4284 = vmatprep.mubr.f32.mxu0 0.0
    %4285 = vmatmul.mubr.f32.gmra.mxu0 %v4215
    %v4286 = vpop.f32.mrf.mxu0
    %v4287 = vadd.f32 0.0, %v4286
    %v4288 = vpop.f32.mrf.mxu0
    %4289 = vmatprep.mubr.f32.mxu0 0.0
    %4290 = vmatmul.mubr.f32.gmra.mxu0 %v4218
    %v4291 = vpop.f32.mrf.mxu0
    %v4292 = vadd.f32 0.0, %v4291
    %v4293 = vpop.f32.mrf.mxu0
    %4294 = vdwg.mxu0
    %v4295 = vld [vmem:[%s27] sm:$0xf]
    %v4296 = vsub.f32 0.0, %v4287
    %v4297 = vsub.f32 0.0, %v4292
    %v4298 = vmul.f32 %v4296, 1.442695
    %v4299 = vpow.pop %v4298
    %v4300 = vmul.f32 %v4297, 1.442695
    %v4301 = vpow.pop %v4300
    %v4303 = vsel %vm304, %v4295, 0
    %4305 = vmatprep.subr.mxu0 0.0
    %4306 = vmatpush1.msra.mxu0 0.0
    %4307 = vmatprep.subr.mxu0 0.0
    %4308 = vmatpush1.msra.mxu0 0.0
    %4309 = vmatprep.subr.mxu0 0.0
    %4310 = vmatpush1.msra.mxu0 0.0
    %4311 = vmatprep.subr.mxu0 0.0
    %4312 = vmatpush1.msra.mxu0 0.0
    %4313 = vmatprep.subr.mxu0 0.0
    %4314 = vmatpush1.msra.mxu0 0.0
    %4315 = vmatprep.subr.mxu0 0.0
    %4316 = vmatpush1.msra.mxu0 0.0
    %4317 = vmatprep.subr.mxu0 0.0
    %4318 = vmatpush1.msra.mxu0 0.0
    %4319 = vmatprep.subr.mxu0 0.0
    %4320 = vmatpush1.msra.mxu0 0.0
    %4321 = vmatprep.subr.mxu0 0.0
    %4322 = vmatpush1.msra.mxu0 0.0
    %4323 = vmatprep.subr.mxu0 0.0
    %4324 = vmatpush1.msra.mxu0 0.0
    %4325 = vmatprep.subr.mxu0 0.0
    %4326 = vmatpush1.msra.mxu0 0.0
    %4327 = vmatprep.subr.mxu0 0.0
    %4328 = vmatpush1.msra.mxu0 0.0
    %4329 = vmatprep.subr.mxu0 0.0
    %4330 = vmatpush1.msra.mxu0 0.0
    %4331 = vmatprep.subr.mxu0 0.0
    %4332 = vmatpush1.msra.mxu0 0.0
    %4333 = vmatprep.subr.mxu0 0.0
    %4334 = vmatpush1.msra.mxu0 %v4301
    %4335 = vmatprep.subr.mxu0 0.0
    %4336 = vmatpush1.msra.mxu0 %v4299
    %4337 = vmatprep.subr.mxu0 0.0
    %4338 = vmatpush2.msra.mxu0 0.0
    %4339 = vmatprep.subr.mxu0 0.0
    %4340 = vmatpush2.msra.mxu0 0.0
    %4341 = vmatprep.subr.mxu0 0.0
    %4342 = vmatpush2.msra.mxu0 0.0
    %4343 = vmatprep.subr.mxu0 0.0
    %4344 = vmatpush2.msra.mxu0 0.0
    %4345 = vmatprep.subr.mxu0 0.0
    %4346 = vmatpush2.msra.mxu0 0.0
    %4347 = vmatprep.subr.mxu0 0.0
    %4348 = vmatpush2.msra.mxu0 0.0
    %4349 = vmatprep.subr.mxu0 0.0
    %4350 = vmatpush2.msra.mxu0 0.0
    %4351 = vmatprep.subr.mxu0 0.0
    %4352 = vmatpush2.msra.mxu0 0.0
    %4353 = vmatprep.subr.mxu0 0.0
    %4354 = vmatpush2.msra.mxu0 0.0
    %4355 = vmatprep.subr.mxu0 0.0
    %4356 = vmatpush2.msra.mxu0 0.0
    %4357 = vmatprep.subr.mxu0 0.0
    %4358 = vmatpush2.msra.mxu0 0.0
    %4359 = vmatprep.subr.mxu0 0.0
    %4360 = vmatpush2.msra.mxu0 0.0
    %4361 = vmatprep.subr.mxu0 0.0
    %4362 = vmatpush2.msra.mxu0 0.0
    %4363 = vmatprep.subr.mxu0 0.0
    %4364 = vmatpush2.msra.mxu0 0.0
    %4365 = vmatprep.subr.mxu0 0.0
    %4366 = vmatpush2.msra.mxu0 0.0
    %4367 = vmatprep.subr.mxu0 0.0
    %4368 = vmatpush2.msra.mxu0 0.0
    %4369 = vmatprep.mubr.f32.mxu0 0.0
    %4370 = vmatmul.mubr.f32.gmra.mxu0 %v4303
    %v4371 = vpop.f32.mrf.mxu0
    %v4372 = vadd.f32 0.0, %v4371
    %v4373 = vpop.f32.mrf.mxu0
    %4374 = vdwg.mxu0
    %v4375 = vsub.f32 %v4372, 1.0
    %v4376 = vld [vmem:[%s20] sm:$0xf]
    %v4377 = vld [vmem:[%s20 + $0x4] sm:$0xf]
    %v4378 = vld [vmem:[%s20 + $0x8] sm:$0xf]
    %v4379 = vld [vmem:[%s20 + $0xc] sm:$0xf]
    %v4380 = vld [vmem:[%s20 + $0x10] sm:$0xf]
    %v4381 = vld [vmem:[%s20 + $0x14] sm:$0xf]
    %v4382 = vld [vmem:[%s20 + $0x18] sm:$0xf]
    %v4383 = vld [vmem:[%s20 + $0x1c] sm:$0xf]
    %v4384 = vld [vmem:[%s22] sm:$0x1]
    %v4386 = vlaneseq
    %v4387 = vshrl.u32 %v4386, 7
    %v4388 = vsub.s32 0, %v4387
    %v4389 = vrot.slane %v4384, %v4388
    %v4399 = vunpack.c.l.b16 %v4376
    %v4400 = vunpack.c.l.b16 %v4377
    %v4401 = vunpack.c.l.b16 %v4378
    %v4402 = vunpack.c.l.b16 %v4379
    %v4403 = vunpack.c.l.b16 %v4380
    %v4404 = vunpack.c.l.b16 %v4381
    %v4405 = vunpack.c.l.b16 %v4382
    %v4406 = vunpack.c.l.b16 %v4383
    %v4407 = vpack.c.b16 %v4400, %v4399
    %v4408 = vpack.c.b16 %v4402, %v4401
    %v4409 = vpack.c.b16 %v4404, %v4403
    %v4410 = vpack.c.b16 %v4406, %v4405
    %4415 = vmatprep.subr.bf16.mxu0 0
    %4416 = vmatpush1.bf16.msra.mxu0 0
    %4417 = vmatprep.subr.bf16.mxu0 0
    %4418 = vmatpush1.bf16.msra.mxu0 0
    %4419 = vmatprep.subr.bf16.mxu0 0
    %4420 = vmatpush1.bf16.msra.mxu0 0
    %4421 = vmatprep.subr.bf16.mxu0 0
    %4422 = vmatpush1.bf16.msra.mxu0 0
    %4423 = vmatprep.subr.bf16.mxu0 0
    %4424 = vmatpush1.bf16.msra.mxu0 %v4410
    %4425 = vmatprep.subr.bf16.mxu0 0
    %4426 = vmatpush1.bf16.msra.mxu0 %v4409
    %4427 = vmatprep.subr.bf16.mxu0 0
    %4428 = vmatpush1.bf16.msra.mxu0 %v4408
    %4429 = vmatprep.subr.bf16.mxu0 0
    %4430 = vmatpush1.bf16.msra.mxu0 %v4407
    %4431 = vmatprep.subr.bf16.mxu0 0
    %4432 = vmatpush2.bf16.msra.mxu0 0
    %4433 = vmatprep.subr.bf16.mxu0 0
    %4434 = vmatpush2.bf16.msra.mxu0 0
    %4435 = vmatprep.subr.bf16.mxu0 0
    %4436 = vmatpush2.bf16.msra.mxu0 0
    %4437 = vmatprep.subr.bf16.mxu0 0
    %4438 = vmatpush2.bf16.msra.mxu0 0
    %4439 = vmatprep.subr.bf16.mxu0 0
    %4440 = vmatpush2.bf16.msra.mxu0 0
    %4441 = vmatprep.subr.bf16.mxu0 0
    %4442 = vmatpush2.bf16.msra.mxu0 0
    %4443 = vmatprep.subr.bf16.mxu0 0
    %4444 = vmatpush2.bf16.msra.mxu0 0
    %4445 = vmatprep.subr.bf16.mxu0 0
    %4446 = vmatpush2.bf16.msra.mxu0 0
    %4447 = vmatprep.mubr.bf16.mxu0 0
    %4448 = vmatmul.mubr.bf16.gmra.mxu0 %v4076
    %v4449 = vpop.f32.mrf.mxu0
    %v4450 = vadd.f32 %v4389, %v4449
    %v4451 = vpop.f32.mrf.mxu0
    %v4452 = vpop.f32.mrf.mxu0
    %v4453 = vpop.f32.mrf.mxu0
    %4454 = vdwg.mxu0
    %v4455 = vld [vmem:[#allocation20] sm:$0x7]
    %4457 = vset.pattern.permute.xlu0 0
    %4458 = vperm.xlu0 %4457, %v4375
    %v4459 = vpop.permute.xlu0 %4458
    %v4461 = vlaneseq
    %v4462 = vshrl.u32 %v4461, 7
    %v4463 = vsub.s32 0, %v4462
    %v4464 = vrot.slane %v4455, %v4463
    %v4465 = vmul.f32 %v4459, %v4464
    %v4466 = vadd.f32 %v4450, %v4465
    %4467 = vset.pattern.permute.xlu0 1
    %4468 = vperm.xlu0 %4467, %v4375
    %v4469 = vpop.permute.xlu0 %4468
    %v4471 = vlaneseq
    %v4472 = vshrl.u32 %v4471, 7
    %v4473 = vsub.s32 1, %v4472
    %v4474 = vrot.slane %v4455, %v4473
    %v4475 = vmul.f32 %v4469, %v4474
    %v4476 = vadd.f32 %v4466, %v4475
    %4477 = vset.pattern.permute.xlu0 2
    %4478 = vperm.xlu0 %4477, %v4375
    %v4479 = vpop.permute.xlu0 %4478
    %v4481 = vlaneseq
    %v4482 = vshrl.u32 %v4481, 7
    %v4483 = vsub.s32 2, %v4482
    %v4484 = vrot.slane %v4455, %v4483
    %v4485 = vmul.f32 %v4479, %v4484
    %v4486 = vadd.f32 %v4476, %v4485
    %vm4487 = vcmp.ge.f32.partialorder %v4486, 0.0
    %v4488 = vmul.f32 %v4486, 0.01
    %v4489 = vsel %vm4487, %v4486, %v4488
    %v4490 = vld [vmem:[%s23] sm:$0x1]
    %v4492 = vlaneseq
    %v4493 = vshrl.u32 %v4492, 7
    %v4494 = vsub.s32 0, %v4493
    %v4495 = vrot.slane %v4490, %v4494
    %v4497 = vmul.f32 %v4489, %v4495
    %vm4498 = vcmask 257024
    %v4499 = vsel %vm4498, %v4497, 0.0
    %4500 = vadd.xlane.f32.xlu0 %v4499
    %v4501 = vpop.xlane.xlu0 %4500
    %v4502 = vld [vmem:[#allocation2] sm:$0x1]
    %v4504 = vlaneseq
    %v4505 = vshrl.u32 %v4504, 7
    %v4506 = vsub.s32 0, %v4505
    %v4507 = vrot.slane %v4502, %v4506
    %v4509 = vadd.f32 %v4501, %v4507
    %v4510 = vxor.u32 %v4509, 2147483648
    %v4511 = vmul.f32 %v4510, 1.442695
    %v4512 = vpow.pop %v4511
    %v4513 = vadd.f32 %v4512, 1.0
    %v4514 = vrcp.pop %v4513
    %v4515 = vmul.f32 1.0, %v4514
    %vm4516 = vcmask 3072
    %4517 = vst.msk [vmem:[%s28] sm:$0xf] %vm4516, %v4515
    // Predicated region
    $region162: #{rnn_discriminator_forward.1} parent=1 // pred_check
      _
    $region163: #{rnn_discriminator_forward.1} parent=1 // pred_check_branch
      %4519 = sbr.rel (0) target = $region165
    $region164: #{rnn_discriminator_forward.1} parent=1 // pred_region
      _
    $region165: #{rnn_discriminator_forward.1} parent=1 // pred_fallthru
      _
    // Predicated region
    $region166: #{rnn_discriminator_forward.1} parent=1 // pred_check
      _
    $region167: #{rnn_discriminator_forward.1} parent=1 // pred_check_branch
      %4521 = sbr.rel (0) target = $region169
    $region168: #{rnn_discriminator_forward.1} parent=1 // pred_region
      _
    $region169: #{rnn_discriminator_forward.1} parent=1 // pred_fallthru
      _
    %4522 = vsyncpa [#allocation4], 1
    %4523 = vsyncpa [#allocation6], 1
    %4524 = vsyncpa [#allocation9], 1
    %4525 = vsyncpa [#allocation12], 1
    %4526 = vsyncpa [#allocation15], 1
    %4527 = vsyncpa [#allocation18], 1
    %4528 = vsyncpa [#allocation21], 1

</llo_original>
